<compile_context>
chip_gen: v6e
topology: v6e:2x2x1
jax: 0.10.0
libtpu: 0.0.40
codegen_flags: <defaults>
</compile_context>

<pallas_src>
import functools

import jax
import jax.numpy as jnp
from jax.experimental import pallas as pl
from jax.experimental.pallas import tpu as pltpu


def _layernorm(x, w, b, eps=1e-5):
    mu = jnp.mean(x, axis=-1, keepdims=True)
    var = jnp.mean((x - mu) ** 2, axis=-1, keepdims=True)
    return (x - mu) * jax.lax.rsqrt(var + eps) * w + b


def _vit_kernel(heads, head_dim, group, seq, seq_pad,
                patch_ref, convw_ref, cls_ref, pos_ref,
                lnpre_w_ref, lnpre_b_ref, lnpo_w_ref, lnpo_b_ref, proj_ref,
                ln1w_ref, ln1b_ref, wqkv_ref, bqkv_ref, wo_ref, bo_ref,
                ln2w_ref, ln2b_ref, wfc1_ref, bfc1_ref, wfc2_ref, bfc2_ref,
                out_ref, x_scr):
    l = pl.program_id(1)
    W = convw_ref.shape[1]
    G, S, Sp = group, seq, seq_pad
    P = patch_ref.shape[1] // G
    bf16 = jnp.bfloat16

    # ---- first layer step: patch embedding + [CLS] + positional emb + ln_pre ----
    @pl.when(l == 0)
    def _():
        # one (G*P, Din) x (Din, W) matmul for all images of the group
        x_p = jnp.dot(patch_ref[0], convw_ref[...],
                      preferred_element_type=jnp.float32)                 # (G*P, W) f32
        if Sp != S:
            x_scr[...] = jnp.zeros_like(x_scr)        # zero the padded rows once
        for g in range(G):
            x_scr[g, 0:1, :] = cls_ref[...] + pos_ref[0:1, :]
            x_scr[g, 1:S, :] = x_p[g * P:(g + 1) * P, :] + pos_ref[1:S, :]
        x_scr[...] = _layernorm(x_scr[...], lnpre_w_ref[...], lnpre_b_ref[...])

    x = x_scr[...].reshape(G * Sp, W)                                      # f32

    # ---- multi-head self-attention (pre-LN, residual) ----
    h = _layernorm(x, ln1w_ref[0], ln1b_ref[0])
    qkv = jnp.dot(h.astype(bf16), wqkv_ref[0],
                  preferred_element_type=jnp.float32) + bqkv_ref[0]        # (G*Sp, 3W)

    if Sp != S:
        kmask = jax.lax.broadcasted_iota(jnp.int32, (1, 1, Sp), 2) < S     # mask pad keys

    outs = []
    for g in range(G):
        rows = slice(g * Sp, (g + 1) * Sp)                                 # 8-aligned
        # layout-free head split (no per-head 64-lane slices / stacks)
        q = jnp.swapaxes(qkv[rows, 0:W].reshape(Sp, heads, head_dim), 0, 1)
        k = jnp.swapaxes(qkv[rows, W:2 * W].reshape(Sp, heads, head_dim), 0, 1)
        v = jnp.swapaxes(qkv[rows, 2 * W:3 * W].reshape(Sp, heads, head_dim), 0, 1)
        s = jnp.einsum('hqd,hkd->hqk', q.astype(bf16), k.astype(bf16),
                       preferred_element_type=jnp.float32)                 # (H, Sp, Sp)
        if Sp != S:
            s = jnp.where(kmask, s, -1e30)
        s = s - jnp.max(s, axis=-1, keepdims=True)
        pm = jnp.exp(s)
        pm = pm * pl.reciprocal(jnp.sum(pm, axis=-1, keepdims=True), approx=True)
        o = jnp.einsum('hqk,hkd->hqd', pm.astype(bf16), v.astype(bf16),
                       preferred_element_type=jnp.float32)                 # (H, Sp, hd)
        outs.append(jnp.swapaxes(o, 0, 1).reshape(Sp, W))                  # head concat

    attn_in = jnp.concatenate(outs, axis=0) if G > 1 else outs[0]          # (G*Sp, W)
    attn = jnp.dot(attn_in.astype(bf16), wo_ref[0],
                   preferred_element_type=jnp.float32) + bo_ref[0]
    x = x + attn

    # ---- MLP with QuickGELU (x * sigmoid(1.702 x)), residual ----
    h = _layernorm(x, ln2w_ref[0], ln2b_ref[0])
    h = jnp.dot(h.astype(bf16), wfc1_ref[0],
                preferred_element_type=jnp.float32) + bfc1_ref[0]
    h = h * jax.nn.sigmoid(1.702 * h)
    h = jnp.dot(h.astype(bf16), wfc2_ref[0],
                preferred_element_type=jnp.float32) + bfc2_ref[0]
    x = x + h
    x_scr[...] = x.reshape(G, Sp, W)

    # ---- last layer step: ln_post on CLS tokens + projection ----
    @pl.when(l == pl.num_programs(1) - 1)
    def _():
        x3 = x.reshape(G, Sp, W)
        cls_rows = x3[:, 0:1, :].reshape(G, W)
        cls_rows = _layernorm(cls_rows, lnpo_w_ref[...], lnpo_b_ref[...])
        out_ref[0] = jnp.dot(cls_rows.astype(bf16), proj_ref[...],
                             preferred_element_type=jnp.float32)           # (G, out_dim)


_INVARIANT_NAMES = ['conv_w', 'cls', 'pos', 'lnpre_w', 'lnpre_b',
                    'lnpost_w', 'lnpost_b', 'proj']
_LAYER_NAMES = ['ln1_w', 'ln1_b', 'w_qkv', 'b_qkv', 'w_o', 'b_o',
                'ln2_w', 'ln2_b', 'w_fc1', 'b_fc1', 'w_fc2', 'b_fc2']


def _pick_vmem_limit():
    # ~75% of physical VMEM: ~96 MiB on v5e/v6e, ~48 MiB on v7x (64 MiB per TC).
    try:
        cap = int(pltpu.get_tpu_info().vmem_capacity_bytes)
        return min(100 * 1024 * 1024, (cap * 3) // 4)
    except Exception:
        return 48 * 1024 * 1024


def vit_forward_pallas(patches, params, *, layers, heads, head_dim, out_dim, group=4):
    BT, P, Din = patches.shape
    W = params['conv_w'].shape[1]
    S = P + 1
    Sp = ((S + 7) // 8) * 8                       # sublane-aligned sequence length
    # largest group size <= requested that divides BT (keeps the parallel axis exact)
    G = max(d for d in range(1, min(group, BT) + 1) if BT % d == 0)

    # patch blocks: bf16, pre-merged to (BT//G, G*P, Din) so the kernel does one matmul
    patches_g = patches.reshape(BT // G, G * P, Din).astype(jnp.bfloat16)

    # ---- parameter prep: fold q-scale into w_qkv/b_qkv, cast matmul weights to bf16 ----
    scale = 1.0 / (head_dim ** 0.5)
    qscale = jnp.concatenate([jnp.full((W,), scale, jnp.float32),
                              jnp.ones((2 * W,), jnp.float32)])
    bf = lambda a: a.astype(jnp.bfloat16)
    weights = {
        'conv_w': bf(params['conv_w']),
        'cls': params['cls'], 'pos': params['pos'],
        'lnpre_w': params['lnpre_w'], 'lnpre_b': params['lnpre_b'],
        'lnpost_w': params['lnpost_w'], 'lnpost_b': params['lnpost_b'],
        'proj': bf(params['proj']),
        'ln1_w': params['ln1_w'], 'ln1_b': params['ln1_b'],
        'w_qkv': bf(params['w_qkv'] * qscale), 'b_qkv': params['b_qkv'] * qscale,
        'w_o': bf(params['w_o']), 'b_o': params['b_o'],
        'ln2_w': params['ln2_w'], 'ln2_b': params['ln2_b'],
        'w_fc1': bf(params['w_fc1']), 'b_fc1': params['b_fc1'],
        'w_fc2': bf(params['w_fc2']), 'b_fc2': params['b_fc2'],
    }

    def fullspec(a):                       # resident weights (block index never changes)
        nd = a.ndim
        return pl.BlockSpec(a.shape, lambda i, l, _nd=nd: (0,) * _nd)

    def layerspec(a):                      # per-layer streamed weights
        nd = a.ndim
        return pl.BlockSpec((1,) + a.shape[1:],
                            lambda i, l, _nd=nd: (l,) + (0,) * (_nd - 1))

    kernel = functools.partial(_vit_kernel, heads, head_dim, G, S, Sp)

    out3 = pl.pallas_call(
        kernel,
        out_shape=jax.ShapeDtypeStruct((BT // G, G, out_dim), jnp.float32),
        grid_spec=pltpu.PrefetchScalarGridSpec(
            num_scalar_prefetch=0,
            grid=(BT // G, layers),
            in_specs=[pl.BlockSpec((1, G * P, Din), lambda i, l: (i, 0, 0))]
                     + [fullspec(weights[n]) for n in _INVARIANT_NAMES]
                     + [layerspec(weights[n]) for n in _LAYER_NAMES],
            out_specs=pl.BlockSpec((1, G, out_dim), lambda i, l: (i, 0, 0)),
            scratch_shapes=[pltpu.VMEM((G, Sp, W), jnp.float32)],  # carried activation
        ),
        compiler_params=pltpu.CompilerParams(
            dimension_semantics=("parallel", "arbitrary"),
            vmem_limit_bytes=_pick_vmem_limit()),
    )(patches_g,
      *[weights[n] for n in _INVARIANT_NAMES],
      *[weights[n] for n in _LAYER_NAMES])
    return out3.reshape(BT, out_dim)


def im2col(image, patch):
    BT, C, H, W = image.shape
    gh, gw = H // patch, W // patch
    x = image.reshape(BT, C, gh, patch, gw, patch)
    x = x.transpose(0, 2, 4, 1, 3, 5)                    # (BT, gh, gw, C, ps, ps)
    return x.reshape(BT, gh * gw, C * patch * patch)


def vit_image_encoder_forward(image, image_mask, params, cfg):
    """image: [B, T, C, H, W] f32; image_mask: [B, T, H, W] bool (True = padding)."""
    B, T, C, H, W = image.shape
    patch = cfg['patch']
    img = image.reshape(B * T, C, H, W)
    patches = im2col(img, patch)
    feat = vit_forward_pallas(patches, params,
                              layers=cfg['layers'], heads=cfg['heads'],
                              head_dim=cfg['head_dim'], out_dim=cfg['out_dim'],
                              group=cfg.get('group', 4))
    feat = feat.reshape(B, T, cfg['out_dim'])[..., None, None]   # [B, T, out_dim, 1, 1]
    # F.interpolate(mask.float(), size=(1,1), mode='nearest') == top-left element
    mask = image_mask[:, :, 0:1, 0:1].astype(jnp.bool_)          # [B, T, 1, 1]
    return dict(grid_feature=feat, grid_mask=mask, grid_feature_with_pos=None)


def init_params(key, *, in_ch, patch, grid, width, layers, out_dim):
    S = grid * grid + 1
    Din = in_ch * patch * patch
    ks = jax.random.split(key, 12)
    std = 0.02
    n = lambda k, shape: std * jax.random.normal(k, shape, jnp.float32)
    return {
        'conv_w': n(ks[0], (Din, width)),
        'cls': n(ks[1], (1, width)),
        'pos': n(ks[2], (S, width)),
        'lnpre_w': jnp.ones((1, width), jnp.float32),
        'lnpre_b': jnp.zeros((1, width), jnp.float32),
        'ln1_w': jnp.ones((layers, 1, width), jnp.float32),
        'ln1_b': jnp.zeros((layers, 1, width), jnp.float32),
        'w_qkv': n(ks[3], (layers, width, 3 * width)),
        'b_qkv': n(ks[4], (layers, 1, 3 * width)),
        'w_o': n(ks[5], (layers, width, width)),
        'b_o': n(ks[6], (layers, 1, width)),
        'ln2_w': jnp.ones((layers, 1, width), jnp.float32),
        'ln2_b': jnp.zeros((layers, 1, width), jnp.float32),
        'w_fc1': n(ks[7], (layers, width, 4 * width)),
        'b_fc1': n(ks[8], (layers, 1, 4 * width)),
        'w_fc2': n(ks[9], (layers, 4 * width, width)),
        'b_fc2': n(ks[10], (layers, 1, width)),
        'lnpost_w': jnp.ones((1, width), jnp.float32),
        'lnpost_b': jnp.zeros((1, width), jnp.float32),
        'proj': n(ks[11], (width, out_dim)),
    }


def ref_forward(patches, params, *, layers, heads, head_dim, out_dim):
    """Pure-JAX f32 reference for correctness checking (original module math)."""
    W = params['conv_w'].shape[1]

    def one(p):
        x_p = p @ params['conv_w']
        x = jnp.concatenate([params['cls'], x_p], axis=0) + params['pos']
        x = _layernorm(x, params['lnpre_w'], params['lnpre_b'])
        S = x.shape[0]
        scale = 1.0 / head_dim ** 0.5
        for l in range(layers):
            h = _layernorm(x, params['ln1_w'][l], params['ln1_b'][l])
            qkv = h @ params['w_qkv'][l] + params['b_qkv'][l]
            q, k, v = qkv[:, :W] * scale, qkv[:, W:2 * W], qkv[:, 2 * W:]
            attn = jnp.zeros((S, W), jnp.float32)
            for hh in range(heads):
                sl = slice(hh * head_dim, (hh + 1) * head_dim)
                s = q[:, sl] @ k[:, sl].T
                pm = jax.nn.softmax(s, axis=-1)
                attn = attn + (pm @ v[:, sl]) @ params['w_o'][l][sl, :]
            x = x + attn + params['b_o'][l]
            h = _layernorm(x, params['ln2_w'][l], params['ln2_b'][l])
            h = h @ params['w_fc1'][l] + params['b_fc1'][l]
            h = h * jax.nn.sigmoid(1.702 * h)
            h = h @ params['w_fc2'][l] + params['b_fc2'][l]
            x = x + h
        cls = _layernorm(x[0:1], params['lnpost_w'], params['lnpost_b'])
        return (cls @ params['proj'])[0]

    return jax.vmap(one)(patches)


if __name__ == "__main__":
    # small shapes consistent with the module's forward
    B, T, C, H, Wimg = 2, 2, 3, 16, 16
    patch = 8
    width = 32
    layers = 2
    head_width = 16               # heads = width // head_width = 2
    heads = width // head_width
    out_dim = 16
    grid = H // patch

    key = jax.random.PRNGKey(0)
    k_img, k_mask, k_par = jax.random.split(key, 3)
    image = jax.random.normal(k_img, (B, T, C, H, Wimg), jnp.float32)
    image_mask = jax.random.bernoulli(k_mask, 0.3, (B, T, H, Wimg))

    params = init_params(k_par, in_ch=C, patch=patch, grid=grid,
                         width=width, layers=layers, out_dim=out_dim)
    # group=2 keeps the parallel grid extent at BT//G = 2 (even -> both v7x cores busy)
    cfg = dict(patch=patch, layers=layers, heads=heads,
               head_dim=head_width, out_dim=out_dim, group=2)

    out = vit_image_encoder_forward(image, image_mask, params, cfg)
    jax.block_until_ready(out['grid_feature'])

    assert out['grid_feature'].shape == (B, T, out_dim, 1, 1)
    assert out['grid_feature'].dtype == jnp.float32
    assert out['grid_mask'].shape == (B, T, 1, 1)
    assert out['grid_mask'].dtype == jnp.bool_
    assert out['grid_feature_with_pos'] is None

    patches = im2col(image.reshape(B * T, C, H, Wimg), patch)
    ref = ref_forward(patches, params, layers=layers, heads=heads,
                      head_dim=head_width, out_dim=out_dim)
    got = out['grid_feature'].reshape(B * T, out_dim)
    if not jnp.allclose(got, ref, atol=2e-2, rtol=2e-2):
        raise AssertionError("Pallas kernel output mismatch vs JAX reference")

    print("KERNEL_OK")
</pallas_src>

<mosaic_0001>
module attributes {stable_mosaic.version = 11 : i64} {
  func.func @_vit_kernel(%arg0: i32, %arg1: i32, %arg2: memref<1x8x192xbf16, #tpu.memory_space<vmem>>, %arg3: memref<192x32xbf16, #tpu.memory_space<vmem>>, %arg4: memref<1x32xf32, #tpu.memory_space<vmem>>, %arg5: memref<5x32xf32, #tpu.memory_space<vmem>>, %arg6: memref<1x32xf32, #tpu.memory_space<vmem>>, %arg7: memref<1x32xf32, #tpu.memory_space<vmem>>, %arg8: memref<1x32xf32, #tpu.memory_space<vmem>>, %arg9: memref<1x32xf32, #tpu.memory_space<vmem>>, %arg10: memref<32x16xbf16, #tpu.memory_space<vmem>>, %arg11: memref<1x1x32xf32, #tpu.memory_space<vmem>>, %arg12: memref<1x1x32xf32, #tpu.memory_space<vmem>>, %arg13: memref<1x32x96xbf16, #tpu.memory_space<vmem>>, %arg14: memref<1x1x96xf32, #tpu.memory_space<vmem>>, %arg15: memref<1x32x32xbf16, #tpu.memory_space<vmem>>, %arg16: memref<1x1x32xf32, #tpu.memory_space<vmem>>, %arg17: memref<1x1x32xf32, #tpu.memory_space<vmem>>, %arg18: memref<1x1x32xf32, #tpu.memory_space<vmem>>, %arg19: memref<1x32x128xbf16, #tpu.memory_space<vmem>>, %arg20: memref<1x1x128xf32, #tpu.memory_space<vmem>>, %arg21: memref<1x128x32xbf16, #tpu.memory_space<vmem>>, %arg22: memref<1x1x32xf32, #tpu.memory_space<vmem>>, %arg23: memref<1x2x16xf32, #tpu.memory_space<vmem>>, %arg24: memref<2x8x32xf32, #tpu.memory_space<vmem>>) attributes {dimension_semantics = [#tpu.dimension_semantics<parallel>, #tpu.dimension_semantics<arbitrary>], iteration_bounds = array<i64: 2, 2>, scalar_prefetch = 0 : i64, scratch_operands = 1 : i64, tpu.core_type = #tpu.core_type<tc>, window_params = [{transform_indices = @transform_0, window_bounds = array<i64: 1, 8, 192>}, {pipeline_mode = #tpu.pipeline_mode<synchronous>, transform_indices = @transform_1, window_bounds = array<i64: 192, 32>}, {pipeline_mode = #tpu.pipeline_mode<synchronous>, transform_indices = @transform_2, window_bounds = array<i64: 1, 32>}, {pipeline_mode = #tpu.pipeline_mode<synchronous>, transform_indices = @transform_3, window_bounds = array<i64: 5, 32>}, {pipeline_mode = #tpu.pipeline_mode<synchronous>, transform_indices = @transform_4, window_bounds = array<i64: 1, 32>}, {pipeline_mode = #tpu.pipeline_mode<synchronous>, transform_indices = @transform_5, window_bounds = array<i64: 1, 32>}, {pipeline_mode = #tpu.pipeline_mode<synchronous>, transform_indices = @transform_6, window_bounds = array<i64: 1, 32>}, {pipeline_mode = #tpu.pipeline_mode<synchronous>, transform_indices = @transform_7, window_bounds = array<i64: 1, 32>}, {pipeline_mode = #tpu.pipeline_mode<synchronous>, transform_indices = @transform_8, window_bounds = array<i64: 32, 16>}, {transform_indices = @transform_9, window_bounds = array<i64: 1, 1, 32>}, {transform_indices = @transform_10, window_bounds = array<i64: 1, 1, 32>}, {transform_indices = @transform_11, window_bounds = array<i64: 1, 32, 96>}, {transform_indices = @transform_12, window_bounds = array<i64: 1, 1, 96>}, {transform_indices = @transform_13, window_bounds = array<i64: 1, 32, 32>}, {transform_indices = @transform_14, window_bounds = array<i64: 1, 1, 32>}, {transform_indices = @transform_15, window_bounds = array<i64: 1, 1, 32>}, {transform_indices = @transform_16, window_bounds = array<i64: 1, 1, 32>}, {transform_indices = @transform_17, window_bounds = array<i64: 1, 32, 128>}, {transform_indices = @transform_18, window_bounds = array<i64: 1, 1, 128>}, {transform_indices = @transform_19, window_bounds = array<i64: 1, 128, 32>}, {transform_indices = @transform_20, window_bounds = array<i64: 1, 1, 32>}, {transform_indices = @transform_21, window_bounds = array<i64: 1, 2, 16>}]} {
    %c0_i32 = arith.constant 0 : i32
    %0 = arith.cmpi eq, %arg1, %c0_i32 : i32
    %1 = arith.extui %0 : i1 to i32
    %c0_i32_0 = arith.constant 0 : i32
    %2 = arith.cmpi ne, %1, %c0_i32_0 : i32
    scf.if %2 {
      %c0_68 = arith.constant 0 : index
      %c0_69 = arith.constant 0 : index
      %c0_70 = arith.constant 0 : index
      %170 = vector.load %arg2[%c0_68, %c0_69, %c0_70] : memref<1x8x192xbf16, #tpu.memory_space<vmem>>, vector<1x8x192xbf16>
      %171 = vector.shape_cast %170 : vector<1x8x192xbf16> to vector<8x192xbf16>
      %c0_71 = arith.constant 0 : index
      %c0_72 = arith.constant 0 : index
      %172 = vector.load %arg3[%c0_71, %c0_72] : memref<192x32xbf16, #tpu.memory_space<vmem>>, vector<192x32xbf16>
      %cst_73 = arith.constant dense<0.000000e+00> : vector<8x32xf32>
      %173 = tpu.matmul %171, %172, %cst_73 {dimension_numbers = #tpu.dot_dimension_numbers<[1], [0], [0], [1], [0, 0, 1, 1], [], []>} : vector<8x192xbf16>, vector<192x32xbf16>, vector<8x32xf32> -> vector<8x32xf32>
      %cst_74 = arith.constant 0.000000e+00 : f32
      %174 = vector.broadcast %cst_74 : f32 to vector<2x8x32xf32>
      %c0_75 = arith.constant 0 : index
      %c0_76 = arith.constant 0 : index
      %c0_77 = arith.constant 0 : index
      %175 = vector.load %arg24[%c0_75, %c0_76, %c0_77] : memref<2x8x32xf32, #tpu.memory_space<vmem>>, vector<2x8x32xf32>
      tpu.vector_store %arg24[%c0_75, %c0_76, %c0_77], %174 {strides = array<i32>} : memref<2x8x32xf32, #tpu.memory_space<vmem>>, vector<2x8x32xf32>,
      %c0_78 = arith.constant 0 : index
      %c0_79 = arith.constant 0 : index
      %176 = vector.load %arg4[%c0_78, %c0_79] : memref<1x32xf32, #tpu.memory_space<vmem>>, vector<1x32xf32>
      %c0_80 = arith.constant 0 : index
      %c0_81 = arith.constant 0 : index
      %177 = vector.load %arg5[%c0_80, %c0_81] : memref<5x32xf32, #tpu.memory_space<vmem>>, vector<1x32xf32>
      %178 = arith.addf %176, %177 : vector<1x32xf32>
      %c0_82 = arith.constant 0 : index
      %c0_83 = arith.constant 0 : index
      %c0_84 = arith.constant 0 : index
      %179 = vector.load %arg24[%c0_82, %c0_83, %c0_84] : memref<2x8x32xf32, #tpu.memory_space<vmem>>, vector<1x1x32xf32>
      %180 = vector.shape_cast %179 : vector<1x1x32xf32> to vector<1x32xf32>
      %181 = vector.shape_cast %178 : vector<1x32xf32> to vector<1x1x32xf32>
      tpu.vector_store %arg24[%c0_82, %c0_83, %c0_84], %181 {strides = array<i32>} : memref<2x8x32xf32, #tpu.memory_space<vmem>>, vector<1x1x32xf32>,
      %182 = vector.extract_strided_slice %173 {offsets = [0, 0], sizes = [4, 32], strides = [1, 1]} : vector<8x32xf32> to vector<4x32xf32>
      %c1 = arith.constant 1 : index
      %c0_85 = arith.constant 0 : index
      %183 = vector.load %arg5[%c1, %c0_85] : memref<5x32xf32, #tpu.memory_space<vmem>>, vector<4x32xf32>
      %184 = arith.addf %182, %183 : vector<4x32xf32>
      %c0_86 = arith.constant 0 : index
      %c1_87 = arith.constant 1 : index
      %c0_88 = arith.constant 0 : index
      %185 = vector.load %arg24[%c0_86, %c1_87, %c0_88] : memref<2x8x32xf32, #tpu.memory_space<vmem>>, vector<1x4x32xf32>
      %186 = vector.shape_cast %185 : vector<1x4x32xf32> to vector<4x32xf32>
      %187 = vector.shape_cast %184 : vector<4x32xf32> to vector<1x4x32xf32>
      tpu.vector_store %arg24[%c0_86, %c1_87, %c0_88], %187 {strides = array<i32>} : memref<2x8x32xf32, #tpu.memory_space<vmem>>, vector<1x4x32xf32>,
      %c0_89 = arith.constant 0 : index
      %c0_90 = arith.constant 0 : index
      %188 = vector.load %arg4[%c0_89, %c0_90] : memref<1x32xf32, #tpu.memory_space<vmem>>, vector<1x32xf32>
      %c0_91 = arith.constant 0 : index
      %c0_92 = arith.constant 0 : index
      %189 = vector.load %arg5[%c0_91, %c0_92] : memref<5x32xf32, #tpu.memory_space<vmem>>, vector<1x32xf32>
      %190 = arith.addf %188, %189 : vector<1x32xf32>
      %c1_93 = arith.constant 1 : index
      %c0_94 = arith.constant 0 : index
      %c0_95 = arith.constant 0 : index
      %191 = vector.load %arg24[%c1_93, %c0_94, %c0_95] : memref<2x8x32xf32, #tpu.memory_space<vmem>>, vector<1x1x32xf32>
      %192 = vector.shape_cast %191 : vector<1x1x32xf32> to vector<1x32xf32>
      %193 = vector.shape_cast %190 : vector<1x32xf32> to vector<1x1x32xf32>
      tpu.vector_store %arg24[%c1_93, %c0_94, %c0_95], %193 {strides = array<i32>} : memref<2x8x32xf32, #tpu.memory_space<vmem>>, vector<1x1x32xf32>,
      %194 = vector.extract_strided_slice %173 {offsets = [4, 0], sizes = [4, 32], strides = [1, 1]} : vector<8x32xf32> to vector<4x32xf32>
      %c1_96 = arith.constant 1 : index
      %c0_97 = arith.constant 0 : index
      %195 = vector.load %arg5[%c1_96, %c0_97] : memref<5x32xf32, #tpu.memory_space<vmem>>, vector<4x32xf32>
      %196 = arith.addf %194, %195 : vector<4x32xf32>
      %c1_98 = arith.constant 1 : index
      %c1_99 = arith.constant 1 : index
      %c0_100 = arith.constant 0 : index
      %197 = vector.load %arg24[%c1_98, %c1_99, %c0_100] : memref<2x8x32xf32, #tpu.memory_space<vmem>>, vector<1x4x32xf32>
      %198 = vector.shape_cast %197 : vector<1x4x32xf32> to vector<4x32xf32>
      %199 = vector.shape_cast %196 : vector<4x32xf32> to vector<1x4x32xf32>
      tpu.vector_store %arg24[%c1_98, %c1_99, %c0_100], %199 {strides = array<i32>} : memref<2x8x32xf32, #tpu.memory_space<vmem>>, vector<1x4x32xf32>,
      %c0_101 = arith.constant 0 : index
      %c0_102 = arith.constant 0 : index
      %c0_103 = arith.constant 0 : index
      %200 = vector.load %arg24[%c0_101, %c0_102, %c0_103] : memref<2x8x32xf32, #tpu.memory_space<vmem>>, vector<2x8x32xf32>
      %c0_104 = arith.constant 0 : index
      %c0_105 = arith.constant 0 : index
      %201 = vector.load %arg6[%c0_104, %c0_105] : memref<1x32xf32, #tpu.memory_space<vmem>>, vector<1x32xf32>
      %c0_106 = arith.constant 0 : index
      %c0_107 = arith.constant 0 : index
      %202 = vector.load %arg7[%c0_106, %c0_107] : memref<1x32xf32, #tpu.memory_space<vmem>>, vector<1x32xf32>
      %cst_108 = arith.constant dense<0.000000e+00> : vector<2x8xf32>
      %203 = vector.multi_reduction <add>, %200, %cst_108 [2] : vector<2x8x32xf32> to vector<2x8xf32>
      %204 = vector.shape_cast %203 : vector<2x8xf32> to vector<2x8x1xf32>
      %cst_109 = arith.constant 3.200000e+01 : f32
      %205 = vector.broadcast %cst_109 : f32 to vector<2x8x1xf32>
      %206 = arith.divf %204, %205 : vector<2x8x1xf32>
      %207 = vector.broadcast %206 : vector<2x8x1xf32> to vector<2x8x32xf32>
      %208 = arith.subf %200, %207 : vector<2x8x32xf32>
      %209 = arith.mulf %208, %208 : vector<2x8x32xf32>
      %cst_110 = arith.constant dense<0.000000e+00> : vector<2x8xf32>
      %210 = vector.multi_reduction <add>, %209, %cst_110 [2] : vector<2x8x32xf32> to vector<2x8xf32>
      %211 = vector.shape_cast %210 : vector<2x8xf32> to vector<2x8x1xf32>
      %cst_111 = arith.constant 3.200000e+01 : f32
      %212 = vector.broadcast %cst_111 : f32 to vector<2x8x1xf32>
      %213 = arith.divf %211, %212 : vector<2x8x1xf32>
      %214 = vector.broadcast %206 : vector<2x8x1xf32> to vector<2x8x32xf32>
      %215 = arith.subf %200, %214 : vector<2x8x32xf32>
      %cst_112 = arith.constant 9.99999974E-6 : f32
      %216 = vector.broadcast %cst_112 : f32 to vector<2x8x1xf32>
      %217 = arith.addf %213, %216 : vector<2x8x1xf32>
      %218 = math.rsqrt %217 : vector<2x8x1xf32>
      %219 = vector.broadcast %218 : vector<2x8x1xf32> to vector<2x8x32xf32>
      %220 = arith.mulf %215, %219 : vector<2x8x32xf32>
      %221 = vector.shape_cast %201 : vector<1x32xf32> to vector<1x1x32xf32>
      %222 = vector.broadcast %221 : vector<1x1x32xf32> to vector<2x8x32xf32>
      %223 = arith.mulf %220, %222 : vector<2x8x32xf32>
      %224 = vector.shape_cast %202 : vector<1x32xf32> to vector<1x1x32xf32>
      %225 = vector.broadcast %224 : vector<1x1x32xf32> to vector<2x8x32xf32>
      %226 = arith.addf %223, %225 : vector<2x8x32xf32>
      %c0_113 = arith.constant 0 : index
      %c0_114 = arith.constant 0 : index
      %c0_115 = arith.constant 0 : index
      %227 = vector.load %arg24[%c0_113, %c0_114, %c0_115] : memref<2x8x32xf32, #tpu.memory_space<vmem>>, vector<2x8x32xf32>
      tpu.vector_store %arg24[%c0_113, %c0_114, %c0_115], %226 {strides = array<i32>} : memref<2x8x32xf32, #tpu.memory_space<vmem>>, vector<2x8x32xf32>,
    } else {
    }
    %c0 = arith.constant 0 : index
    %c0_1 = arith.constant 0 : index
    %c0_2 = arith.constant 0 : index
    %3 = vector.load %arg24[%c0, %c0_1, %c0_2] : memref<2x8x32xf32, #tpu.memory_space<vmem>>, vector<2x8x32xf32>
    %4 = vector.shape_cast %3 : vector<2x8x32xf32> to vector<16x32xf32>
    %c0_3 = arith.constant 0 : index
    %c0_4 = arith.constant 0 : index
    %c0_5 = arith.constant 0 : index
    %5 = vector.load %arg11[%c0_3, %c0_4, %c0_5] : memref<1x1x32xf32, #tpu.memory_space<vmem>>, vector<1x1x32xf32>
    %6 = vector.shape_cast %5 : vector<1x1x32xf32> to vector<1x32xf32>
    %c0_6 = arith.constant 0 : index
    %c0_7 = arith.constant 0 : index
    %c0_8 = arith.constant 0 : index
    %7 = vector.load %arg12[%c0_6, %c0_7, %c0_8] : memref<1x1x32xf32, #tpu.memory_space<vmem>>, vector<1x1x32xf32>
    %8 = vector.shape_cast %7 : vector<1x1x32xf32> to vector<1x32xf32>
    %cst = arith.constant dense<0.000000e+00> : vector<16xf32>
    %9 = vector.multi_reduction <add>, %4, %cst [1] : vector<16x32xf32> to vector<16xf32>
    %10 = vector.shape_cast %9 : vector<16xf32> to vector<16x1xf32>
    %cst_9 = arith.constant 3.200000e+01 : f32
    %11 = vector.broadcast %cst_9 : f32 to vector<16x1xf32>
    %12 = arith.divf %10, %11 : vector<16x1xf32>
    %13 = vector.broadcast %12 : vector<16x1xf32> to vector<16x32xf32>
    %14 = arith.subf %4, %13 : vector<16x32xf32>
    %15 = arith.mulf %14, %14 : vector<16x32xf32>
    %cst_10 = arith.constant dense<0.000000e+00> : vector<16xf32>
    %16 = vector.multi_reduction <add>, %15, %cst_10 [1] : vector<16x32xf32> to vector<16xf32>
    %17 = vector.shape_cast %16 : vector<16xf32> to vector<16x1xf32>
    %cst_11 = arith.constant 3.200000e+01 : f32
    %18 = vector.broadcast %cst_11 : f32 to vector<16x1xf32>
    %19 = arith.divf %17, %18 : vector<16x1xf32>
    %20 = vector.broadcast %12 : vector<16x1xf32> to vector<16x32xf32>
    %21 = arith.subf %4, %20 : vector<16x32xf32>
    %cst_12 = arith.constant 9.99999974E-6 : f32
    %22 = vector.broadcast %cst_12 : f32 to vector<16x1xf32>
    %23 = arith.addf %19, %22 : vector<16x1xf32>
    %24 = math.rsqrt %23 : vector<16x1xf32>
    %25 = vector.broadcast %24 : vector<16x1xf32> to vector<16x32xf32>
    %26 = arith.mulf %21, %25 : vector<16x32xf32>
    %27 = vector.broadcast %6 : vector<1x32xf32> to vector<16x32xf32>
    %28 = arith.mulf %26, %27 : vector<16x32xf32>
    %29 = vector.broadcast %8 : vector<1x32xf32> to vector<16x32xf32>
    %30 = arith.addf %28, %29 : vector<16x32xf32>
    %31 = arith.truncf %30 : vector<16x32xf32> to vector<16x32xbf16>
    %c0_13 = arith.constant 0 : index
    %c0_14 = arith.constant 0 : index
    %c0_15 = arith.constant 0 : index
    %32 = vector.load %arg13[%c0_13, %c0_14, %c0_15] : memref<1x32x96xbf16, #tpu.memory_space<vmem>>, vector<1x32x96xbf16>
    %33 = vector.shape_cast %32 : vector<1x32x96xbf16> to vector<32x96xbf16>
    %cst_16 = arith.constant dense<0.000000e+00> : vector<16x96xf32>
    %34 = tpu.matmul %31, %33, %cst_16 {dimension_numbers = #tpu.dot_dimension_numbers<[1], [0], [0], [1], [0, 0, 1, 1], [], []>} : vector<16x32xbf16>, vector<32x96xbf16>, vector<16x96xf32> -> vector<16x96xf32>
    %c0_17 = arith.constant 0 : index
    %c0_18 = arith.constant 0 : index
    %c0_19 = arith.constant 0 : index
    %35 = vector.load %arg14[%c0_17, %c0_18, %c0_19] : memref<1x1x96xf32, #tpu.memory_space<vmem>>, vector<1x1x96xf32>
    %36 = vector.shape_cast %35 : vector<1x1x96xf32> to vector<1x96xf32>
    %37 = vector.broadcast %36 : vector<1x96xf32> to vector<16x96xf32>
    %38 = arith.addf %34, %37 : vector<16x96xf32>
    %39 = tpu.iota {dimensions = array<i32: 2>} : vector<1x1x8xi32>
    %c5_i32 = arith.constant 5 : i32
    %40 = vector.broadcast %c5_i32 : i32 to vector<1x1x8xi32>
    %41 = arith.cmpi slt, %39, %40 : vector<1x1x8xi32>
    %42 = vector.extract_strided_slice %38 {offsets = [0, 0], sizes = [8, 32], strides = [1, 1]} : vector<16x96xf32> to vector<8x32xf32>
    %43 = vector.shape_cast %42 : vector<8x32xf32> to vector<8x2x16xf32>
    %44 = tpu.transpose %43, [1, 0, 2] : vector<8x2x16xf32> -> vector<2x8x16xf32>
    %45 = vector.extract_strided_slice %38 {offsets = [0, 32], sizes = [8, 32], strides = [1, 1]} : vector<16x96xf32> to vector<8x32xf32>
    %46 = vector.shape_cast %45 : vector<8x32xf32> to vector<8x2x16xf32>
    %47 = tpu.transpose %46, [1, 0, 2] : vector<8x2x16xf32> -> vector<2x8x16xf32>
    %48 = vector.extract_strided_slice %38 {offsets = [0, 64], sizes = [8, 32], strides = [1, 1]} : vector<16x96xf32> to vector<8x32xf32>
    %49 = vector.shape_cast %48 : vector<8x32xf32> to vector<8x2x16xf32>
    %50 = tpu.transpose %49, [1, 0, 2] : vector<8x2x16xf32> -> vector<2x8x16xf32>
    %51 = arith.truncf %44 : vector<2x8x16xf32> to vector<2x8x16xbf16>
    %52 = arith.truncf %47 : vector<2x8x16xf32> to vector<2x8x16xbf16>
    "tpu.trace_start"() <{level = 10 : i32, message = "hqd,hkd->hqk"}> : () -> ()
    %cst_20 = arith.constant dense<0.000000e+00> : vector<2x8x8xf32>
    %53 = tpu.matmul %51, %52, %cst_20 {dimension_numbers = #tpu.dot_dimension_numbers<[2], [2], [1], [1], [0, 0, 0, 1, 1, 1], [0], [0]>} : vector<2x8x16xbf16>, vector<2x8x16xbf16>, vector<2x8x8xf32> -> vector<2x8x8xf32>
    %cst_21 = arith.constant -1.000000e+30 : f32
    "tpu.trace_stop"() : () -> ()
    %54 = vector.shape_cast %41 : vector<1x1x8xi1> to vector<1x1x8xi1>
    %55 = vector.broadcast %54 : vector<1x1x8xi1> to vector<2x8x8xi1>
    %56 = vector.broadcast %cst_21 : f32 to vector<2x8x8xf32>
    %57 = arith.select %55, %53, %56 : vector<2x8x8xi1>, vector<2x8x8xf32>
    %cst_22 = arith.constant dense<0xFF800000> : vector<2x8xf32>
    %58 = vector.multi_reduction <maximumf>, %57, %cst_22 [2] : vector<2x8x8xf32> to vector<2x8xf32>
    %59 = vector.shape_cast %58 : vector<2x8xf32> to vector<2x8x1xf32>
    %60 = vector.broadcast %59 : vector<2x8x1xf32> to vector<2x8x8xf32>
    %61 = arith.subf %57, %60 : vector<2x8x8xf32>
    %62 = math.exp %61 : vector<2x8x8xf32>
    %cst_23 = arith.constant dense<0.000000e+00> : vector<2x8xf32>
    %63 = vector.multi_reduction <add>, %62, %cst_23 [2] : vector<2x8x8xf32> to vector<2x8xf32>
    %64 = vector.shape_cast %63 : vector<2x8xf32> to vector<2x8x1xf32>
    %65 = tpu.reciprocal %64 {approx = true} : vector<2x8x1xf32> -> vector<2x8x1xf32>
    %66 = vector.broadcast %65 : vector<2x8x1xf32> to vector<2x8x8xf32>
    %67 = arith.mulf %62, %66 : vector<2x8x8xf32>
    %68 = arith.truncf %67 : vector<2x8x8xf32> to vector<2x8x8xbf16>
    %69 = arith.truncf %50 : vector<2x8x16xf32> to vector<2x8x16xbf16>
    "tpu.trace_start"() <{level = 10 : i32, message = "hqk,hkd->hqd"}> : () -> ()
    %cst_24 = arith.constant dense<0.000000e+00> : vector<2x8x16xf32>
    %70 = tpu.matmul %68, %69, %cst_24 {dimension_numbers = #tpu.dot_dimension_numbers<[2], [1], [1], [2], [0, 0, 0, 1, 1, 2], [0], [0]>} : vector<2x8x8xbf16>, vector<2x8x16xbf16>, vector<2x8x16xf32> -> vector<2x8x16xf32>
    "tpu.trace_stop"() : () -> ()
    %71 = tpu.transpose %70, [1, 0, 2] : vector<2x8x16xf32> -> vector<8x2x16xf32>
    %72 = vector.shape_cast %71 : vector<8x2x16xf32> to vector<8x32xf32>
    %73 = vector.extract_strided_slice %38 {offsets = [8, 0], sizes = [8, 32], strides = [1, 1]} : vector<16x96xf32> to vector<8x32xf32>
    %74 = vector.shape_cast %73 : vector<8x32xf32> to vector<8x2x16xf32>
    %75 = tpu.transpose %74, [1, 0, 2] : vector<8x2x16xf32> -> vector<2x8x16xf32>
    %76 = vector.extract_strided_slice %38 {offsets = [8, 32], sizes = [8, 32], strides = [1, 1]} : vector<16x96xf32> to vector<8x32xf32>
    %77 = vector.shape_cast %76 : vector<8x32xf32> to vector<8x2x16xf32>
    %78 = tpu.transpose %77, [1, 0, 2] : vector<8x2x16xf32> -> vector<2x8x16xf32>
    %79 = vector.extract_strided_slice %38 {offsets = [8, 64], sizes = [8, 32], strides = [1, 1]} : vector<16x96xf32> to vector<8x32xf32>
    %80 = vector.shape_cast %79 : vector<8x32xf32> to vector<8x2x16xf32>
    %81 = tpu.transpose %80, [1, 0, 2] : vector<8x2x16xf32> -> vector<2x8x16xf32>
    %82 = arith.truncf %75 : vector<2x8x16xf32> to vector<2x8x16xbf16>
    %83 = arith.truncf %78 : vector<2x8x16xf32> to vector<2x8x16xbf16>
    "tpu.trace_start"() <{level = 10 : i32, message = "hqd,hkd->hqk"}> : () -> ()
    %cst_25 = arith.constant dense<0.000000e+00> : vector<2x8x8xf32>
    %84 = tpu.matmul %82, %83, %cst_25 {dimension_numbers = #tpu.dot_dimension_numbers<[2], [2], [1], [1], [0, 0, 0, 1, 1, 1], [0], [0]>} : vector<2x8x16xbf16>, vector<2x8x16xbf16>, vector<2x8x8xf32> -> vector<2x8x8xf32>
    %cst_26 = arith.constant -1.000000e+30 : f32
    "tpu.trace_stop"() : () -> ()
    %85 = vector.shape_cast %41 : vector<1x1x8xi1> to vector<1x1x8xi1>
    %86 = vector.broadcast %85 : vector<1x1x8xi1> to vector<2x8x8xi1>
    %87 = vector.broadcast %cst_26 : f32 to vector<2x8x8xf32>
    %88 = arith.select %86, %84, %87 : vector<2x8x8xi1>, vector<2x8x8xf32>
    %cst_27 = arith.constant dense<0xFF800000> : vector<2x8xf32>
    %89 = vector.multi_reduction <maximumf>, %88, %cst_27 [2] : vector<2x8x8xf32> to vector<2x8xf32>
    %90 = vector.shape_cast %89 : vector<2x8xf32> to vector<2x8x1xf32>
    %91 = vector.broadcast %90 : vector<2x8x1xf32> to vector<2x8x8xf32>
    %92 = arith.subf %88, %91 : vector<2x8x8xf32>
    %93 = math.exp %92 : vector<2x8x8xf32>
    %cst_28 = arith.constant dense<0.000000e+00> : vector<2x8xf32>
    %94 = vector.multi_reduction <add>, %93, %cst_28 [2] : vector<2x8x8xf32> to vector<2x8xf32>
    %95 = vector.shape_cast %94 : vector<2x8xf32> to vector<2x8x1xf32>
    %96 = tpu.reciprocal %95 {approx = true} : vector<2x8x1xf32> -> vector<2x8x1xf32>
    %97 = vector.broadcast %96 : vector<2x8x1xf32> to vector<2x8x8xf32>
    %98 = arith.mulf %93, %97 : vector<2x8x8xf32>
    %99 = arith.truncf %98 : vector<2x8x8xf32> to vector<2x8x8xbf16>
    %100 = arith.truncf %81 : vector<2x8x16xf32> to vector<2x8x16xbf16>
    "tpu.trace_start"() <{level = 10 : i32, message = "hqk,hkd->hqd"}> : () -> ()
    %cst_29 = arith.constant dense<0.000000e+00> : vector<2x8x16xf32>
    %101 = tpu.matmul %99, %100, %cst_29 {dimension_numbers = #tpu.dot_dimension_numbers<[2], [1], [1], [2], [0, 0, 0, 1, 1, 2], [0], [0]>} : vector<2x8x8xbf16>, vector<2x8x16xbf16>, vector<2x8x16xf32> -> vector<2x8x16xf32>
    "tpu.trace_stop"() : () -> ()
    %102 = tpu.transpose %101, [1, 0, 2] : vector<2x8x16xf32> -> vector<8x2x16xf32>
    %103 = vector.shape_cast %102 : vector<8x2x16xf32> to vector<8x32xf32>
    %104 = tpu.concatenate %72, %103 in 0 : vector<8x32xf32>, vector<8x32xf32> -> vector<16x32xf32>
    %105 = arith.truncf %104 : vector<16x32xf32> to vector<16x32xbf16>
    %c0_30 = arith.constant 0 : index
    %c0_31 = arith.constant 0 : index
    %c0_32 = arith.constant 0 : index
    %106 = vector.load %arg15[%c0_30, %c0_31, %c0_32] : memref<1x32x32xbf16, #tpu.memory_space<vmem>>, vector<1x32x32xbf16>
    %107 = vector.shape_cast %106 : vector<1x32x32xbf16> to vector<32x32xbf16>
    %cst_33 = arith.constant dense<0.000000e+00> : vector<16x32xf32>
    %108 = tpu.matmul %105, %107, %cst_33 {dimension_numbers = #tpu.dot_dimension_numbers<[1], [0], [0], [1], [0, 0, 1, 1], [], []>} : vector<16x32xbf16>, vector<32x32xbf16>, vector<16x32xf32> -> vector<16x32xf32>
    %c0_34 = arith.constant 0 : index
    %c0_35 = arith.constant 0 : index
    %c0_36 = arith.constant 0 : index
    %109 = vector.load %arg16[%c0_34, %c0_35, %c0_36] : memref<1x1x32xf32, #tpu.memory_space<vmem>>, vector<1x1x32xf32>
    %110 = vector.shape_cast %109 : vector<1x1x32xf32> to vector<1x32xf32>
    %111 = vector.broadcast %110 : vector<1x32xf32> to vector<16x32xf32>
    %112 = arith.addf %108, %111 : vector<16x32xf32>
    %113 = arith.addf %4, %112 : vector<16x32xf32>
    %c0_37 = arith.constant 0 : index
    %c0_38 = arith.constant 0 : index
    %c0_39 = arith.constant 0 : index
    %114 = vector.load %arg17[%c0_37, %c0_38, %c0_39] : memref<1x1x32xf32, #tpu.memory_space<vmem>>, vector<1x1x32xf32>
    %115 = vector.shape_cast %114 : vector<1x1x32xf32> to vector<1x32xf32>
    %c0_40 = arith.constant 0 : index
    %c0_41 = arith.constant 0 : index
    %c0_42 = arith.constant 0 : index
    %116 = vector.load %arg18[%c0_40, %c0_41, %c0_42] : memref<1x1x32xf32, #tpu.memory_space<vmem>>, vector<1x1x32xf32>
    %117 = vector.shape_cast %116 : vector<1x1x32xf32> to vector<1x32xf32>
    %cst_43 = arith.constant dense<0.000000e+00> : vector<16xf32>
    %118 = vector.multi_reduction <add>, %113, %cst_43 [1] : vector<16x32xf32> to vector<16xf32>
    %119 = vector.shape_cast %118 : vector<16xf32> to vector<16x1xf32>
    %cst_44 = arith.constant 3.200000e+01 : f32
    %120 = vector.broadcast %cst_44 : f32 to vector<16x1xf32>
    %121 = arith.divf %119, %120 : vector<16x1xf32>
    %122 = vector.broadcast %121 : vector<16x1xf32> to vector<16x32xf32>
    %123 = arith.subf %113, %122 : vector<16x32xf32>
    %124 = arith.mulf %123, %123 : vector<16x32xf32>
    %cst_45 = arith.constant dense<0.000000e+00> : vector<16xf32>
    %125 = vector.multi_reduction <add>, %124, %cst_45 [1] : vector<16x32xf32> to vector<16xf32>
    %126 = vector.shape_cast %125 : vector<16xf32> to vector<16x1xf32>
    %cst_46 = arith.constant 3.200000e+01 : f32
    %127 = vector.broadcast %cst_46 : f32 to vector<16x1xf32>
    %128 = arith.divf %126, %127 : vector<16x1xf32>
    %129 = vector.broadcast %121 : vector<16x1xf32> to vector<16x32xf32>
    %130 = arith.subf %113, %129 : vector<16x32xf32>
    %cst_47 = arith.constant 9.99999974E-6 : f32
    %131 = vector.broadcast %cst_47 : f32 to vector<16x1xf32>
    %132 = arith.addf %128, %131 : vector<16x1xf32>
    %133 = math.rsqrt %132 : vector<16x1xf32>
    %134 = vector.broadcast %133 : vector<16x1xf32> to vector<16x32xf32>
    %135 = arith.mulf %130, %134 : vector<16x32xf32>
    %136 = vector.broadcast %115 : vector<1x32xf32> to vector<16x32xf32>
    %137 = arith.mulf %135, %136 : vector<16x32xf32>
    %138 = vector.broadcast %117 : vector<1x32xf32> to vector<16x32xf32>
    %139 = arith.addf %137, %138 : vector<16x32xf32>
    %140 = arith.truncf %139 : vector<16x32xf32> to vector<16x32xbf16>
    %c0_48 = arith.constant 0 : index
    %c0_49 = arith.constant 0 : index
    %c0_50 = arith.constant 0 : index
    %141 = vector.load %arg19[%c0_48, %c0_49, %c0_50] : memref<1x32x128xbf16, #tpu.memory_space<vmem>>, vector<1x32x128xbf16>
    %142 = vector.shape_cast %141 : vector<1x32x128xbf16> to vector<32x128xbf16>
    %cst_51 = arith.constant dense<0.000000e+00> : vector<16x128xf32>
    %143 = tpu.matmul %140, %142, %cst_51 {dimension_numbers = #tpu.dot_dimension_numbers<[1], [0], [0], [1], [0, 0, 1, 1], [], []>} : vector<16x32xbf16>, vector<32x128xbf16>, vector<16x128xf32> -> vector<16x128xf32>
    %c0_52 = arith.constant 0 : index
    %c0_53 = arith.constant 0 : index
    %c0_54 = arith.constant 0 : index
    %144 = vector.load %arg20[%c0_52, %c0_53, %c0_54] : memref<1x1x128xf32, #tpu.memory_space<vmem>>, vector<1x1x128xf32>
    %145 = vector.shape_cast %144 : vector<1x1x128xf32> to vector<1x128xf32>
    %146 = vector.broadcast %145 : vector<1x128xf32> to vector<16x128xf32>
    %147 = arith.addf %143, %146 : vector<16x128xf32>
    %cst_55 = arith.constant 1.702000e+00 : f32
    %148 = vector.broadcast %cst_55 : f32 to vector<16x128xf32>
    %149 = arith.mulf %148, %147 : vector<16x128xf32>
    %150 = arith.negf %149 : vector<16x128xf32>
    %151 = math.exp %150 : vector<16x128xf32>
    %cst_56 = arith.constant 1.000000e+00 : f32
    %152 = vector.broadcast %cst_56 : f32 to vector<16x128xf32>
    %153 = arith.addf %152, %151 : vector<16x128xf32>
    %154 = arith.divf %152, %153 : vector<16x128xf32>
    %155 = arith.mulf %147, %154 : vector<16x128xf32>
    %156 = arith.truncf %155 : vector<16x128xf32> to vector<16x128xbf16>
    %c0_57 = arith.constant 0 : index
    %c0_58 = arith.constant 0 : index
    %c0_59 = arith.constant 0 : index
    %157 = vector.load %arg21[%c0_57, %c0_58, %c0_59] : memref<1x128x32xbf16, #tpu.memory_space<vmem>>, vector<1x128x32xbf16>
    %158 = vector.shape_cast %157 : vector<1x128x32xbf16> to vector<128x32xbf16>
    %cst_60 = arith.constant dense<0.000000e+00> : vector<16x32xf32>
    %159 = tpu.matmul %156, %158, %cst_60 {dimension_numbers = #tpu.dot_dimension_numbers<[1], [0], [0], [1], [0, 0, 1, 1], [], []>} : vector<16x128xbf16>, vector<128x32xbf16>, vector<16x32xf32> -> vector<16x32xf32>
    %c0_61 = arith.constant 0 : index
    %c0_62 = arith.constant 0 : index
    %c0_63 = arith.constant 0 : index
    %160 = vector.load %arg22[%c0_61, %c0_62, %c0_63] : memref<1x1x32xf32, #tpu.memory_space<vmem>>, vector<1x1x32xf32>
    %161 = vector.shape_cast %160 : vector<1x1x32xf32> to vector<1x32xf32>
    %162 = vector.broadcast %161 : vector<1x32xf32> to vector<16x32xf32>
    %163 = arith.addf %159, %162 : vector<16x32xf32>
    %164 = arith.addf %113, %163 : vector<16x32xf32>
    %165 = vector.shape_cast %164 : vector<16x32xf32> to vector<2x8x32xf32>
    %c0_64 = arith.constant 0 : index
    %c0_65 = arith.constant 0 : index
    %c0_66 = arith.constant 0 : index
    %166 = vector.load %arg24[%c0_64, %c0_65, %c0_66] : memref<2x8x32xf32, #tpu.memory_space<vmem>>, vector<2x8x32xf32>
    tpu.vector_store %arg24[%c0_64, %c0_65, %c0_66], %165 {strides = array<i32>} : memref<2x8x32xf32, #tpu.memory_space<vmem>>, vector<2x8x32xf32>,
    %c1_i32 = arith.constant 1 : i32
    %167 = arith.cmpi eq, %arg1, %c1_i32 : i32
    %168 = arith.extui %167 : i1 to i32
    %c0_i32_67 = arith.constant 0 : i32
    %169 = arith.cmpi ne, %168, %c0_i32_67 : i32
    scf.if %169 {
      %170 = vector.shape_cast %164 : vector<16x32xf32> to vector<2x8x32xf32>
      %171 = vector.extract_strided_slice %170 {offsets = [0, 0, 0], sizes = [2, 1, 32], strides = [1, 1, 1]} : vector<2x8x32xf32> to vector<2x1x32xf32>
      %172 = vector.shape_cast %171 : vector<2x1x32xf32> to vector<2x32xf32>
      %c0_68 = arith.constant 0 : index
      %c0_69 = arith.constant 0 : index
      %173 = vector.load %arg8[%c0_68, %c0_69] : memref<1x32xf32, #tpu.memory_space<vmem>>, vector<1x32xf32>
      %c0_70 = arith.constant 0 : index
      %c0_71 = arith.constant 0 : index
      %174 = vector.load %arg9[%c0_70, %c0_71] : memref<1x32xf32, #tpu.memory_space<vmem>>, vector<1x32xf32>
      %cst_72 = arith.constant dense<0.000000e+00> : vector<2xf32>
      %175 = vector.multi_reduction <add>, %172, %cst_72 [1] : vector<2x32xf32> to vector<2xf32>
      %176 = vector.shape_cast %175 : vector<2xf32> to vector<2x1xf32>
      %cst_73 = arith.constant 3.200000e+01 : f32
      %177 = vector.broadcast %cst_73 : f32 to vector<2x1xf32>
      %178 = arith.divf %176, %177 : vector<2x1xf32>
      %179 = vector.broadcast %178 : vector<2x1xf32> to vector<2x32xf32>
      %180 = arith.subf %172, %179 : vector<2x32xf32>
      %181 = arith.mulf %180, %180 : vector<2x32xf32>
      %cst_74 = arith.constant dense<0.000000e+00> : vector<2xf32>
      %182 = vector.multi_reduction <add>, %181, %cst_74 [1] : vector<2x32xf32> to vector<2xf32>
      %183 = vector.shape_cast %182 : vector<2xf32> to vector<2x1xf32>
      %cst_75 = arith.constant 3.200000e+01 : f32
      %184 = vector.broadcast %cst_75 : f32 to vector<2x1xf32>
      %185 = arith.divf %183, %184 : vector<2x1xf32>
      %186 = vector.broadcast %178 : vector<2x1xf32> to vector<2x32xf32>
      %187 = arith.subf %172, %186 : vector<2x32xf32>
      %cst_76 = arith.constant 9.99999974E-6 : f32
      %188 = vector.broadcast %cst_76 : f32 to vector<2x1xf32>
      %189 = arith.addf %185, %188 : vector<2x1xf32>
      %190 = math.rsqrt %189 : vector<2x1xf32>
      %191 = vector.broadcast %190 : vector<2x1xf32> to vector<2x32xf32>
      %192 = arith.mulf %187, %191 : vector<2x32xf32>
      %193 = vector.broadcast %173 : vector<1x32xf32> to vector<2x32xf32>
      %194 = arith.mulf %192, %193 : vector<2x32xf32>
      %195 = vector.broadcast %174 : vector<1x32xf32> to vector<2x32xf32>
      %196 = arith.addf %194, %195 : vector<2x32xf32>
      %197 = arith.truncf %196 : vector<2x32xf32> to vector<2x32xbf16>
      %c0_77 = arith.constant 0 : index
      %c0_78 = arith.constant 0 : index
      %198 = vector.load %arg10[%c0_77, %c0_78] : memref<32x16xbf16, #tpu.memory_space<vmem>>, vector<32x16xbf16>
      %cst_79 = arith.constant dense<0.000000e+00> : vector<2x16xf32>
      %199 = tpu.matmul %197, %198, %cst_79 {dimension_numbers = #tpu.dot_dimension_numbers<[1], [0], [0], [1], [0, 0, 1, 1], [], []>} : vector<2x32xbf16>, vector<32x16xbf16>, vector<2x16xf32> -> vector<2x16xf32>
      %c0_80 = arith.constant 0 : index
      %c0_81 = arith.constant 0 : index
      %c0_82 = arith.constant 0 : index
      %200 = vector.load %arg23[%c0_80, %c0_81, %c0_82] : memref<1x2x16xf32, #tpu.memory_space<vmem>>, vector<1x2x16xf32>
      %201 = vector.shape_cast %200 : vector<1x2x16xf32> to vector<2x16xf32>
      %202 = vector.shape_cast %199 : vector<2x16xf32> to vector<1x2x16xf32>
      tpu.vector_store %arg23[%c0_80, %c0_81, %c0_82], %202 {strides = array<i32>} : memref<1x2x16xf32, #tpu.memory_space<vmem>>, vector<1x2x16xf32>,
    } else {
    }
    return
  }
  func.func @transform_0(%arg0: i32, %arg1: i32) -> (i32, i32, i32) {
    %c0_i32 = arith.constant 0 : i32
    %c0_i32_0 = arith.constant 0 : i32
    %c0_i32_1 = arith.constant 0 : i32
    return %arg0, %c0_i32, %c0_i32_0 : i32, i32, i32
  }
  func.func @transform_1(%arg0: i32, %arg1: i32) -> (i32, i32) {
    %c0_i32 = arith.constant 0 : i32
    %c0_i32_0 = arith.constant 0 : i32
    %c0_i32_1 = arith.constant 0 : i32
    return %c0_i32, %c0_i32_0 : i32, i32
  }
  func.func @transform_2(%arg0: i32, %arg1: i32) -> (i32, i32) {
    %c0_i32 = arith.constant 0 : i32
    %c0_i32_0 = arith.constant 0 : i32
    %c0_i32_1 = arith.constant 0 : i32
    return %c0_i32, %c0_i32_0 : i32, i32
  }
  func.func @transform_3(%arg0: i32, %arg1: i32) -> (i32, i32) {
    %c0_i32 = arith.constant 0 : i32
    %c0_i32_0 = arith.constant 0 : i32
    %c0_i32_1 = arith.constant 0 : i32
    return %c0_i32, %c0_i32_0 : i32, i32
  }
  func.func @transform_4(%arg0: i32, %arg1: i32) -> (i32, i32) {
    %c0_i32 = arith.constant 0 : i32
    %c0_i32_0 = arith.constant 0 : i32
    %c0_i32_1 = arith.constant 0 : i32
    return %c0_i32, %c0_i32_0 : i32, i32
  }
  func.func @transform_5(%arg0: i32, %arg1: i32) -> (i32, i32) {
    %c0_i32 = arith.constant 0 : i32
    %c0_i32_0 = arith.constant 0 : i32
    %c0_i32_1 = arith.constant 0 : i32
    return %c0_i32, %c0_i32_0 : i32, i32
  }
  func.func @transform_6(%arg0: i32, %arg1: i32) -> (i32, i32) {
    %c0_i32 = arith.constant 0 : i32
    %c0_i32_0 = arith.constant 0 : i32
    %c0_i32_1 = arith.constant 0 : i32
    return %c0_i32, %c0_i32_0 : i32, i32
  }
  func.func @transform_7(%arg0: i32, %arg1: i32) -> (i32, i32) {
    %c0_i32 = arith.constant 0 : i32
    %c0_i32_0 = arith.constant 0 : i32
    %c0_i32_1 = arith.constant 0 : i32
    return %c0_i32, %c0_i32_0 : i32, i32
  }
  func.func @transform_8(%arg0: i32, %arg1: i32) -> (i32, i32) {
    %c0_i32 = arith.constant 0 : i32
    %c0_i32_0 = arith.constant 0 : i32
    %c0_i32_1 = arith.constant 0 : i32
    return %c0_i32, %c0_i32_0 : i32, i32
  }
  func.func @transform_9(%arg0: i32, %arg1: i32) -> (i32, i32, i32) {
    %c0_i32 = arith.constant 0 : i32
    %c0_i32_0 = arith.constant 0 : i32
    %c0_i32_1 = arith.constant 0 : i32
    return %arg1, %c0_i32, %c0_i32_0 : i32, i32, i32
  }
  func.func @transform_10(%arg0: i32, %arg1: i32) -> (i32, i32, i32) {
    %c0_i32 = arith.constant 0 : i32
    %c0_i32_0 = arith.constant 0 : i32
    %c0_i32_1 = arith.constant 0 : i32
    return %arg1, %c0_i32, %c0_i32_0 : i32, i32, i32
  }
  func.func @transform_11(%arg0: i32, %arg1: i32) -> (i32, i32, i32) {
    %c0_i32 = arith.constant 0 : i32
    %c0_i32_0 = arith.constant 0 : i32
    %c0_i32_1 = arith.constant 0 : i32
    return %arg1, %c0_i32, %c0_i32_0 : i32, i32, i32
  }
  func.func @transform_12(%arg0: i32, %arg1: i32) -> (i32, i32, i32) {
    %c0_i32 = arith.constant 0 : i32
    %c0_i32_0 = arith.constant 0 : i32
    %c0_i32_1 = arith.constant 0 : i32
    return %arg1, %c0_i32, %c0_i32_0 : i32, i32, i32
  }
  func.func @transform_13(%arg0: i32, %arg1: i32) -> (i32, i32, i32) {
    %c0_i32 = arith.constant 0 : i32
    %c0_i32_0 = arith.constant 0 : i32
    %c0_i32_1 = arith.constant 0 : i32
    return %arg1, %c0_i32, %c0_i32_0 : i32, i32, i32
  }
  func.func @transform_14(%arg0: i32, %arg1: i32) -> (i32, i32, i32) {
    %c0_i32 = arith.constant 0 : i32
    %c0_i32_0 = arith.constant 0 : i32
    %c0_i32_1 = arith.constant 0 : i32
    return %arg1, %c0_i32, %c0_i32_0 : i32, i32, i32
  }
  func.func @transform_15(%arg0: i32, %arg1: i32) -> (i32, i32, i32) {
    %c0_i32 = arith.constant 0 : i32
    %c0_i32_0 = arith.constant 0 : i32
    %c0_i32_1 = arith.constant 0 : i32
    return %arg1, %c0_i32, %c0_i32_0 : i32, i32, i32
  }
  func.func @transform_16(%arg0: i32, %arg1: i32) -> (i32, i32, i32) {
    %c0_i32 = arith.constant 0 : i32
    %c0_i32_0 = arith.constant 0 : i32
    %c0_i32_1 = arith.constant 0 : i32
    return %arg1, %c0_i32, %c0_i32_0 : i32, i32, i32
  }
  func.func @transform_17(%arg0: i32, %arg1: i32) -> (i32, i32, i32) {
    %c0_i32 = arith.constant 0 : i32
    %c0_i32_0 = arith.constant 0 : i32
    %c0_i32_1 = arith.constant 0 : i32
    return %arg1, %c0_i32, %c0_i32_0 : i32, i32, i32
  }
  func.func @transform_18(%arg0: i32, %arg1: i32) -> (i32, i32, i32) {
    %c0_i32 = arith.constant 0 : i32
    %c0_i32_0 = arith.constant 0 : i32
    %c0_i32_1 = arith.constant 0 : i32
    return %arg1, %c0_i32, %c0_i32_0 : i32, i32, i32
  }
  func.func @transform_19(%arg0: i32, %arg1: i32) -> (i32, i32, i32) {
    %c0_i32 = arith.constant 0 : i32
    %c0_i32_0 = arith.constant 0 : i32
    %c0_i32_1 = arith.constant 0 : i32
    return %arg1, %c0_i32, %c0_i32_0 : i32, i32, i32
  }
  func.func @transform_20(%arg0: i32, %arg1: i32) -> (i32, i32, i32) {
    %c0_i32 = arith.constant 0 : i32
    %c0_i32_0 = arith.constant 0 : i32
    %c0_i32_1 = arith.constant 0 : i32
    return %arg1, %c0_i32, %c0_i32_0 : i32, i32, i32
  }
  func.func @transform_21(%arg0: i32, %arg1: i32) -> (i32, i32, i32) {
    %c0_i32 = arith.constant 0 : i32
    %c0_i32_0 = arith.constant 0 : i32
    %c0_i32_1 = arith.constant 0 : i32
    return %arg0, %c0_i32, %c0_i32_0 : i32, i32, i32
  }
}

</mosaic_0001>

<llo_original>
// kernel: tpu_custom_call.1
$region0: #{tpu_custom_call.1}
  #allocation0 [shape = 'u32[]', space=smem, size = 0x4, offset = 0x4, fixed_abs, tag = 'smem constant byte address 0x4 - core index']
  #allocation1 [shape = 'u32[144,128]{1,0:T(1,128)}', space=vmem, size = 0x12000, scoped, tag = 'internal scratch']
  #allocation2 [shape = 'f32[2,8,32]{2,1,0:T(8,128)}', space=vmem, size = 0x2000, scoped, tag = 'scratch operand']
  %s0 = inlined_call_operand.vmem [shape: bf16[2,8,192], index: 0, kind: input, shape index: {}]
  %s1 = inlined_call_operand.vmem [shape: bf16[192,32], index: 1, kind: input, shape index: {}]
  %s2 = inlined_call_operand.vmem [shape: f32[1,32], index: 2, kind: input, shape index: {}]
  %s3 = inlined_call_operand.vmem [shape: f32[5,32], index: 3, kind: input, shape index: {}]
  %s4 = inlined_call_operand.vmem [shape: f32[1,32], index: 4, kind: input, shape index: {}]
  %s5 = inlined_call_operand.vmem [shape: f32[1,32], index: 5, kind: input, shape index: {}]
  %s6 = inlined_call_operand.vmem [shape: f32[1,32], index: 6, kind: input, shape index: {}]
  %s7 = inlined_call_operand.vmem [shape: f32[1,32], index: 7, kind: input, shape index: {}]
  %s8 = inlined_call_operand.vmem [shape: bf16[32,16], index: 8, kind: input, shape index: {}]
  %s9 = inlined_call_operand.vmem [shape: f32[2,1,32], index: 9, kind: input, shape index: {}]
  %s10 = inlined_call_operand.vmem [shape: f32[2,1,32], index: 10, kind: input, shape index: {}]
  %s11 = inlined_call_operand.vmem [shape: bf16[2,32,96], index: 11, kind: input, shape index: {}]
  %s12 = inlined_call_operand.vmem [shape: f32[2,1,96], index: 12, kind: input, shape index: {}]
  %s13 = inlined_call_operand.vmem [shape: bf16[2,32,32], index: 13, kind: input, shape index: {}]
  %s14 = inlined_call_operand.vmem [shape: f32[2,1,32], index: 14, kind: input, shape index: {}]
  %s15 = inlined_call_operand.vmem [shape: f32[2,1,32], index: 15, kind: input, shape index: {}]
  %s16 = inlined_call_operand.vmem [shape: f32[2,1,32], index: 16, kind: input, shape index: {}]
  %s17 = inlined_call_operand.vmem [shape: bf16[2,32,128], index: 17, kind: input, shape index: {}]
  %s18 = inlined_call_operand.vmem [shape: f32[2,1,128], index: 18, kind: input, shape index: {}]
  %s19 = inlined_call_operand.vmem [shape: bf16[2,128,32], index: 19, kind: input, shape index: {}]
  %s20 = inlined_call_operand.vmem [shape: f32[2,1,32], index: 20, kind: input, shape index: {}]
  %s21 = inlined_call_operand.hbm [shape: f32[2,2,16], index: 21, kind: output, shape index: {}]
  %s22 = sld [smem:[#allocation0]]
  $region125: #{tpu_custom_call.1} parent=0
    _
  %s24 = ssub.s32 1, %s22
  %s25 = scalar_select 0, %s24, %s22
  $region1: #{tpu_custom_call.1} parent=0
    #allocation3 [shape = 'u8[2048]{0}', space=vmem, size = 0x800, scoped, tag = 'output window, operand 0']
    #allocation4 [shape = 's32[2]{0}', space=sflag, size = 0x8, scoped, tag = 'scoped memory for tpu_custom_call.1']
    %26 = vsyncpa [#allocation4], 0
    %s27 = scalar_lea.sflag [#allocation4], 1
    %28 = vsyncpa %s27, 0
    loop: start=0, step=1, limit=6
    $region2: #{tpu_custom_call.1} parent=1 // loop_pre_header
      _
    $region3: #{tpu_custom_call.1} parent=1 // loop_header
      %s30 = sphi 0, %s34
      %p31 = scmp.ge.s32.totalorder %s30, 6
      %s37 = sphi 0, %s49
      %s38 = sphi 0, %s45
      %s39 = sphi 0, %s37
      %s40 = sphi 0, %s38
      %s41 = sphi 0, %s39
      %s42 = sphi 0, %s40
      %s52 = sphi 0, %s54
      %s55 = sphi 0, %s52
      %s56 = sphi 0, %s55
      %s72 = sphi 0, %s56
      %s76 = sphi 0, %s76
      %s78 = sphi 0, %s76
      %s79 = sphi 0, %s78
      %s93 = sphi 0, %s79
      %s97 = sphi 0, %s97
      %s99 = sphi 0, %s97
      %s100 = sphi 0, %s99
      %s114 = sphi 0, %s100
      %s118 = sphi 0, %s118
      %s120 = sphi 0, %s118
      %s121 = sphi 0, %s120
      %s135 = sphi 0, %s121
      %s139 = sphi 0, %s139
      %s141 = sphi 0, %s139
      %s142 = sphi 0, %s141
      %s156 = sphi 0, %s142
      %s160 = sphi 0, %s160
      %s162 = sphi 0, %s160
      %s163 = sphi 0, %s162
      %s177 = sphi 0, %s163
      %s181 = sphi 0, %s181
      %s183 = sphi 0, %s181
      %s184 = sphi 0, %s183
      %s198 = sphi 0, %s184
      %s202 = sphi 0, %s202
      %s204 = sphi 0, %s202
      %s205 = sphi 0, %s204
      %s219 = sphi 0, %s205
      %s223 = sphi 0, %s223
      %s225 = sphi 0, %s223
      %s226 = sphi 0, %s225
      %s240 = sphi 0, %s226
      %s246 = sphi 0, %s248
      %s249 = sphi 0, %s246
      %s250 = sphi 0, %s249
      %s266 = sphi 0, %s250
      %s272 = sphi 0, %s274
      %s275 = sphi 0, %s272
      %s276 = sphi 0, %s275
      %s292 = sphi 0, %s276
      %s298 = sphi 0, %s300
      %s301 = sphi 0, %s298
      %s302 = sphi 0, %s301
      %s318 = sphi 0, %s302
      %s324 = sphi 0, %s326
      %s327 = sphi 0, %s324
      %s328 = sphi 0, %s327
      %s344 = sphi 0, %s328
      %s350 = sphi 0, %s352
      %s353 = sphi 0, %s350
      %s354 = sphi 0, %s353
      %s370 = sphi 0, %s354
      %s376 = sphi 0, %s378
      %s379 = sphi 0, %s376
      %s380 = sphi 0, %s379
      %s396 = sphi 0, %s380
      %s402 = sphi 0, %s404
      %s405 = sphi 0, %s402
      %s406 = sphi 0, %s405
      %s422 = sphi 0, %s406
      %s428 = sphi 0, %s430
      %s431 = sphi 0, %s428
      %s432 = sphi 0, %s431
      %s448 = sphi 0, %s432
      %s454 = sphi 0, %s456
      %s457 = sphi 0, %s454
      %s458 = sphi 0, %s457
      %s474 = sphi 0, %s458
      %s480 = sphi 0, %s482
      %s483 = sphi 0, %s480
      %s484 = sphi 0, %s483
      %s500 = sphi 0, %s484
      %s506 = sphi 0, %s508
      %s509 = sphi 0, %s506
      %s510 = sphi 0, %s509
      %s526 = sphi 0, %s510
      %s532 = sphi 0, %s534
      %s535 = sphi 0, %s532
      %s536 = sphi 0, %s535
      %s552 = sphi 0, %s536
      %s558 = sphi 0, %s560
      %s561 = sphi 0, %s558
      %s562 = sphi 0, %s561
      %s578 = sphi 0, %s562
    $region4: #{tpu_custom_call.1} parent=1 // loop_header_branch
      %33 = sbr.rel (%p31) target = $region8
    $region5: #{tpu_custom_call.1} parent=1 // loop_body
      %s35 = ssub.s32 %s30, 1
      %s36 = ssub.s32 %s30, 2
      %s43 = sadd.s32 1, %s38
      %p44 = scmp.ge.s32.totalorder %s43, 2
      %s45 = scalar_select %p44, 0, %s43
      %s46 = sadd.s32 1, %s37
      %s47 = scalar_select %p44, %s46, %s37
      %p48 = scmp.ge.s32.totalorder %s47, 2
      %s49 = scalar_select %p48, 0, %s47
      %s50 = ssub.s32 %s37, %s49
      %p51 = scmp.eq.s32.totalorder %s50, 0
      %s53 = sadd.s32 %s52, 1
      %s54 = scalar_select %p51, %s52, %s53
      %p57 = pneg %p51
      %p58 = scmp.eq.s32.totalorder %s30, 3
      %p59 = por %p57, %p58
      %p60 = scmp.ne.s32.totalorder %s52, %s55
      %p61 = scmp.eq.s32.totalorder %s30, 0
      %p62 = por %p60, %p61
      %p63 = scmp.ne.s32.totalorder %s52, %s55
      %p64 = scmp.eq.s32.totalorder %s35, 3
      %p65 = por %p63, %p64
      %p66 = scmp.ne.s32.totalorder %s55, %s56
      %p67 = scmp.eq.s32.totalorder %s35, 0
      %p68 = por %p66, %p67
      %p69 = scmp.ne.s32.totalorder %s55, %s56
      %p70 = scmp.eq.s32.totalorder %s36, 3
      %p71 = por %p69, %p70
      %p73 = scmp.ne.s32.totalorder %s56, %s72
      %p74 = scmp.eq.s32.totalorder %s36, 0
      %p75 = por %p73, %p74
      %s77 = sadd.s32 %s76, 1
      %p80 = scmp.eq.s32.totalorder %s30, 3
      %p81 = scmp.ne.s32.totalorder %s76, %s78
      %p82 = scmp.eq.s32.totalorder %s30, 0
      %p83 = por %p81, %p82
      %p84 = scmp.ne.s32.totalorder %s76, %s78
      %p85 = scmp.eq.s32.totalorder %s35, 3
      %p86 = por %p84, %p85
      %p87 = scmp.ne.s32.totalorder %s78, %s79
      %p88 = scmp.eq.s32.totalorder %s35, 0
      %p89 = por %p87, %p88
      %p90 = scmp.ne.s32.totalorder %s78, %s79
      %p91 = scmp.eq.s32.totalorder %s36, 3
      %p92 = por %p90, %p91
      %p94 = scmp.ne.s32.totalorder %s79, %s93
      %p95 = scmp.eq.s32.totalorder %s36, 0
      %p96 = por %p94, %p95
      %s98 = sadd.s32 %s97, 1
      %p101 = scmp.eq.s32.totalorder %s30, 3
      %p102 = scmp.ne.s32.totalorder %s97, %s99
      %p103 = scmp.eq.s32.totalorder %s30, 0
      %p104 = por %p102, %p103
      %p105 = scmp.ne.s32.totalorder %s97, %s99
      %p106 = scmp.eq.s32.totalorder %s35, 3
      %p107 = por %p105, %p106
      %p108 = scmp.ne.s32.totalorder %s99, %s100
      %p109 = scmp.eq.s32.totalorder %s35, 0
      %p110 = por %p108, %p109
      %p111 = scmp.ne.s32.totalorder %s99, %s100
      %p112 = scmp.eq.s32.totalorder %s36, 3
      %p113 = por %p111, %p112
      %p115 = scmp.ne.s32.totalorder %s100, %s114
      %p116 = scmp.eq.s32.totalorder %s36, 0
      %p117 = por %p115, %p116
      %s119 = sadd.s32 %s118, 1
      %p122 = scmp.eq.s32.totalorder %s30, 3
      %p123 = scmp.ne.s32.totalorder %s118, %s120
      %p124 = scmp.eq.s32.totalorder %s30, 0
      %p125 = por %p123, %p124
      %p126 = scmp.ne.s32.totalorder %s118, %s120
      %p127 = scmp.eq.s32.totalorder %s35, 3
      %p128 = por %p126, %p127
      %p129 = scmp.ne.s32.totalorder %s120, %s121
      %p130 = scmp.eq.s32.totalorder %s35, 0
      %p131 = por %p129, %p130
      %p132 = scmp.ne.s32.totalorder %s120, %s121
      %p133 = scmp.eq.s32.totalorder %s36, 3
      %p134 = por %p132, %p133
      %p136 = scmp.ne.s32.totalorder %s121, %s135
      %p137 = scmp.eq.s32.totalorder %s36, 0
      %p138 = por %p136, %p137
      %s140 = sadd.s32 %s139, 1
      %p143 = scmp.eq.s32.totalorder %s30, 3
      %p144 = scmp.ne.s32.totalorder %s139, %s141
      %p145 = scmp.eq.s32.totalorder %s30, 0
      %p146 = por %p144, %p145
      %p147 = scmp.ne.s32.totalorder %s139, %s141
      %p148 = scmp.eq.s32.totalorder %s35, 3
      %p149 = por %p147, %p148
      %p150 = scmp.ne.s32.totalorder %s141, %s142
      %p151 = scmp.eq.s32.totalorder %s35, 0
      %p152 = por %p150, %p151
      %p153 = scmp.ne.s32.totalorder %s141, %s142
      %p154 = scmp.eq.s32.totalorder %s36, 3
      %p155 = por %p153, %p154
      %p157 = scmp.ne.s32.totalorder %s142, %s156
      %p158 = scmp.eq.s32.totalorder %s36, 0
      %p159 = por %p157, %p158
      %s161 = sadd.s32 %s160, 1
      %p164 = scmp.eq.s32.totalorder %s30, 3
      %p165 = scmp.ne.s32.totalorder %s160, %s162
      %p166 = scmp.eq.s32.totalorder %s30, 0
      %p167 = por %p165, %p166
      %p168 = scmp.ne.s32.totalorder %s160, %s162
      %p169 = scmp.eq.s32.totalorder %s35, 3
      %p170 = por %p168, %p169
      %p171 = scmp.ne.s32.totalorder %s162, %s163
      %p172 = scmp.eq.s32.totalorder %s35, 0
      %p173 = por %p171, %p172
      %p174 = scmp.ne.s32.totalorder %s162, %s163
      %p175 = scmp.eq.s32.totalorder %s36, 3
      %p176 = por %p174, %p175
      %p178 = scmp.ne.s32.totalorder %s163, %s177
      %p179 = scmp.eq.s32.totalorder %s36, 0
      %p180 = por %p178, %p179
      %s182 = sadd.s32 %s181, 1
      %p185 = scmp.eq.s32.totalorder %s30, 3
      %p186 = scmp.ne.s32.totalorder %s181, %s183
      %p187 = scmp.eq.s32.totalorder %s30, 0
      %p188 = por %p186, %p187
      %p189 = scmp.ne.s32.totalorder %s181, %s183
      %p190 = scmp.eq.s32.totalorder %s35, 3
      %p191 = por %p189, %p190
      %p192 = scmp.ne.s32.totalorder %s183, %s184
      %p193 = scmp.eq.s32.totalorder %s35, 0
      %p194 = por %p192, %p193
      %p195 = scmp.ne.s32.totalorder %s183, %s184
      %p196 = scmp.eq.s32.totalorder %s36, 3
      %p197 = por %p195, %p196
      %p199 = scmp.ne.s32.totalorder %s184, %s198
      %p200 = scmp.eq.s32.totalorder %s36, 0
      %p201 = por %p199, %p200
      %s203 = sadd.s32 %s202, 1
      %p206 = scmp.eq.s32.totalorder %s30, 3
      %p207 = scmp.ne.s32.totalorder %s202, %s204
      %p208 = scmp.eq.s32.totalorder %s30, 0
      %p209 = por %p207, %p208
      %p210 = scmp.ne.s32.totalorder %s202, %s204
      %p211 = scmp.eq.s32.totalorder %s35, 3
      %p212 = por %p210, %p211
      %p213 = scmp.ne.s32.totalorder %s204, %s205
      %p214 = scmp.eq.s32.totalorder %s35, 0
      %p215 = por %p213, %p214
      %p216 = scmp.ne.s32.totalorder %s204, %s205
      %p217 = scmp.eq.s32.totalorder %s36, 3
      %p218 = por %p216, %p217
      %p220 = scmp.ne.s32.totalorder %s205, %s219
      %p221 = scmp.eq.s32.totalorder %s36, 0
      %p222 = por %p220, %p221
      %s224 = sadd.s32 %s223, 1
      %p227 = scmp.eq.s32.totalorder %s30, 3
      %p228 = scmp.ne.s32.totalorder %s223, %s225
      %p229 = scmp.eq.s32.totalorder %s30, 0
      %p230 = por %p228, %p229
      %p231 = scmp.ne.s32.totalorder %s223, %s225
      %p232 = scmp.eq.s32.totalorder %s35, 3
      %p233 = por %p231, %p232
      %p234 = scmp.ne.s32.totalorder %s225, %s226
      %p235 = scmp.eq.s32.totalorder %s35, 0
      %p236 = por %p234, %p235
      %p237 = scmp.ne.s32.totalorder %s225, %s226
      %p238 = scmp.eq.s32.totalorder %s36, 3
      %p239 = por %p237, %p238
      %p241 = scmp.ne.s32.totalorder %s226, %s240
      %p242 = scmp.eq.s32.totalorder %s36, 0
      %p243 = por %p241, %p242
      %s244 = ssub.s32 %s38, %s45
      %p245 = scmp.eq.s32.totalorder %s244, 0
      %s247 = sadd.s32 %s246, 1
      %s248 = scalar_select %p245, %s246, %s247
      %p251 = pneg %p245
      %p252 = scmp.eq.s32.totalorder %s30, 3
      %p253 = por %p251, %p252
      %p254 = scmp.ne.s32.totalorder %s246, %s249
      %p255 = scmp.eq.s32.totalorder %s30, 0
      %p256 = por %p254, %p255
      %p257 = scmp.ne.s32.totalorder %s246, %s249
      %p258 = scmp.eq.s32.totalorder %s35, 3
      %p259 = por %p257, %p258
      %p260 = scmp.ne.s32.totalorder %s249, %s250
      %p261 = scmp.eq.s32.totalorder %s35, 0
      %p262 = por %p260, %p261
      %p263 = scmp.ne.s32.totalorder %s249, %s250
      %p264 = scmp.eq.s32.totalorder %s36, 3
      %p265 = por %p263, %p264
      %p267 = scmp.ne.s32.totalorder %s250, %s266
      %p268 = scmp.eq.s32.totalorder %s36, 0
      %p269 = por %p267, %p268
      %s270 = ssub.s32 %s38, %s45
      %p271 = scmp.eq.s32.totalorder %s270, 0
      %s273 = sadd.s32 %s272, 1
      %s274 = scalar_select %p271, %s272, %s273
      %p277 = pneg %p271
      %p278 = scmp.eq.s32.totalorder %s30, 3
      %p279 = por %p277, %p278
      %p280 = scmp.ne.s32.totalorder %s272, %s275
      %p281 = scmp.eq.s32.totalorder %s30, 0
      %p282 = por %p280, %p281
      %p283 = scmp.ne.s32.totalorder %s272, %s275
      %p284 = scmp.eq.s32.totalorder %s35, 3
      %p285 = por %p283, %p284
      %p286 = scmp.ne.s32.totalorder %s275, %s276
      %p287 = scmp.eq.s32.totalorder %s35, 0
      %p288 = por %p286, %p287
      %p289 = scmp.ne.s32.totalorder %s275, %s276
      %p290 = scmp.eq.s32.totalorder %s36, 3
      %p291 = por %p289, %p290
      %p293 = scmp.ne.s32.totalorder %s276, %s292
      %p294 = scmp.eq.s32.totalorder %s36, 0
      %p295 = por %p293, %p294
      %s296 = ssub.s32 %s38, %s45
      %p297 = scmp.eq.s32.totalorder %s296, 0
      %s299 = sadd.s32 %s298, 1
      %s300 = scalar_select %p297, %s298, %s299
      %p303 = pneg %p297
      %p304 = scmp.eq.s32.totalorder %s30, 3
      %p305 = por %p303, %p304
      %p306 = scmp.ne.s32.totalorder %s298, %s301
      %p307 = scmp.eq.s32.totalorder %s30, 0
      %p308 = por %p306, %p307
      %p309 = scmp.ne.s32.totalorder %s298, %s301
      %p310 = scmp.eq.s32.totalorder %s35, 3
      %p311 = por %p309, %p310
      %p312 = scmp.ne.s32.totalorder %s301, %s302
      %p313 = scmp.eq.s32.totalorder %s35, 0
      %p314 = por %p312, %p313
      %p315 = scmp.ne.s32.totalorder %s301, %s302
      %p316 = scmp.eq.s32.totalorder %s36, 3
      %p317 = por %p315, %p316
      %p319 = scmp.ne.s32.totalorder %s302, %s318
      %p320 = scmp.eq.s32.totalorder %s36, 0
      %p321 = por %p319, %p320
      %s322 = ssub.s32 %s38, %s45
      %p323 = scmp.eq.s32.totalorder %s322, 0
      %s325 = sadd.s32 %s324, 1
      %s326 = scalar_select %p323, %s324, %s325
      %p329 = pneg %p323
      %p330 = scmp.eq.s32.totalorder %s30, 3
      %p331 = por %p329, %p330
      %p332 = scmp.ne.s32.totalorder %s324, %s327
      %p333 = scmp.eq.s32.totalorder %s30, 0
      %p334 = por %p332, %p333
      %p335 = scmp.ne.s32.totalorder %s324, %s327
      %p336 = scmp.eq.s32.totalorder %s35, 3
      %p337 = por %p335, %p336
      %p338 = scmp.ne.s32.totalorder %s327, %s328
      %p339 = scmp.eq.s32.totalorder %s35, 0
      %p340 = por %p338, %p339
      %p341 = scmp.ne.s32.totalorder %s327, %s328
      %p342 = scmp.eq.s32.totalorder %s36, 3
      %p343 = por %p341, %p342
      %p345 = scmp.ne.s32.totalorder %s328, %s344
      %p346 = scmp.eq.s32.totalorder %s36, 0
      %p347 = por %p345, %p346
      %s348 = ssub.s32 %s38, %s45
      %p349 = scmp.eq.s32.totalorder %s348, 0
      %s351 = sadd.s32 %s350, 1
      %s352 = scalar_select %p349, %s350, %s351
      %p355 = pneg %p349
      %p356 = scmp.eq.s32.totalorder %s30, 3
      %p357 = por %p355, %p356
      %p358 = scmp.ne.s32.totalorder %s350, %s353
      %p359 = scmp.eq.s32.totalorder %s30, 0
      %p360 = por %p358, %p359
      %p361 = scmp.ne.s32.totalorder %s350, %s353
      %p362 = scmp.eq.s32.totalorder %s35, 3
      %p363 = por %p361, %p362
      %p364 = scmp.ne.s32.totalorder %s353, %s354
      %p365 = scmp.eq.s32.totalorder %s35, 0
      %p366 = por %p364, %p365
      %p367 = scmp.ne.s32.totalorder %s353, %s354
      %p368 = scmp.eq.s32.totalorder %s36, 3
      %p369 = por %p367, %p368
      %p371 = scmp.ne.s32.totalorder %s354, %s370
      %p372 = scmp.eq.s32.totalorder %s36, 0
      %p373 = por %p371, %p372
      %s374 = ssub.s32 %s38, %s45
      %p375 = scmp.eq.s32.totalorder %s374, 0
      %s377 = sadd.s32 %s376, 1
      %s378 = scalar_select %p375, %s376, %s377
      %p381 = pneg %p375
      %p382 = scmp.eq.s32.totalorder %s30, 3
      %p383 = por %p381, %p382
      %p384 = scmp.ne.s32.totalorder %s376, %s379
      %p385 = scmp.eq.s32.totalorder %s30, 0
      %p386 = por %p384, %p385
      %p387 = scmp.ne.s32.totalorder %s376, %s379
      %p388 = scmp.eq.s32.totalorder %s35, 3
      %p389 = por %p387, %p388
      %p390 = scmp.ne.s32.totalorder %s379, %s380
      %p391 = scmp.eq.s32.totalorder %s35, 0
      %p392 = por %p390, %p391
      %p393 = scmp.ne.s32.totalorder %s379, %s380
      %p394 = scmp.eq.s32.totalorder %s36, 3
      %p395 = por %p393, %p394
      %p397 = scmp.ne.s32.totalorder %s380, %s396
      %p398 = scmp.eq.s32.totalorder %s36, 0
      %p399 = por %p397, %p398
      %s400 = ssub.s32 %s38, %s45
      %p401 = scmp.eq.s32.totalorder %s400, 0
      %s403 = sadd.s32 %s402, 1
      %s404 = scalar_select %p401, %s402, %s403
      %p407 = pneg %p401
      %p408 = scmp.eq.s32.totalorder %s30, 3
      %p409 = por %p407, %p408
      %p410 = scmp.ne.s32.totalorder %s402, %s405
      %p411 = scmp.eq.s32.totalorder %s30, 0
      %p412 = por %p410, %p411
      %p413 = scmp.ne.s32.totalorder %s402, %s405
      %p414 = scmp.eq.s32.totalorder %s35, 3
      %p415 = por %p413, %p414
      %p416 = scmp.ne.s32.totalorder %s405, %s406
      %p417 = scmp.eq.s32.totalorder %s35, 0
      %p418 = por %p416, %p417
      %p419 = scmp.ne.s32.totalorder %s405, %s406
      %p420 = scmp.eq.s32.totalorder %s36, 3
      %p421 = por %p419, %p420
      %p423 = scmp.ne.s32.totalorder %s406, %s422
      %p424 = scmp.eq.s32.totalorder %s36, 0
      %p425 = por %p423, %p424
      %s426 = ssub.s32 %s38, %s45
      %p427 = scmp.eq.s32.totalorder %s426, 0
      %s429 = sadd.s32 %s428, 1
      %s430 = scalar_select %p427, %s428, %s429
      %p433 = pneg %p427
      %p434 = scmp.eq.s32.totalorder %s30, 3
      %p435 = por %p433, %p434
      %p436 = scmp.ne.s32.totalorder %s428, %s431
      %p437 = scmp.eq.s32.totalorder %s30, 0
      %p438 = por %p436, %p437
      %p439 = scmp.ne.s32.totalorder %s428, %s431
      %p440 = scmp.eq.s32.totalorder %s35, 3
      %p441 = por %p439, %p440
      %p442 = scmp.ne.s32.totalorder %s431, %s432
      %p443 = scmp.eq.s32.totalorder %s35, 0
      %p444 = por %p442, %p443
      %p445 = scmp.ne.s32.totalorder %s431, %s432
      %p446 = scmp.eq.s32.totalorder %s36, 3
      %p447 = por %p445, %p446
      %p449 = scmp.ne.s32.totalorder %s432, %s448
      %p450 = scmp.eq.s32.totalorder %s36, 0
      %p451 = por %p449, %p450
      %s452 = ssub.s32 %s38, %s45
      %p453 = scmp.eq.s32.totalorder %s452, 0
      %s455 = sadd.s32 %s454, 1
      %s456 = scalar_select %p453, %s454, %s455
      %p459 = pneg %p453
      %p460 = scmp.eq.s32.totalorder %s30, 3
      %p461 = por %p459, %p460
      %p462 = scmp.ne.s32.totalorder %s454, %s457
      %p463 = scmp.eq.s32.totalorder %s30, 0
      %p464 = por %p462, %p463
      %p465 = scmp.ne.s32.totalorder %s454, %s457
      %p466 = scmp.eq.s32.totalorder %s35, 3
      %p467 = por %p465, %p466
      %p468 = scmp.ne.s32.totalorder %s457, %s458
      %p469 = scmp.eq.s32.totalorder %s35, 0
      %p470 = por %p468, %p469
      %p471 = scmp.ne.s32.totalorder %s457, %s458
      %p472 = scmp.eq.s32.totalorder %s36, 3
      %p473 = por %p471, %p472
      %p475 = scmp.ne.s32.totalorder %s458, %s474
      %p476 = scmp.eq.s32.totalorder %s36, 0
      %p477 = por %p475, %p476
      %s478 = ssub.s32 %s38, %s45
      %p479 = scmp.eq.s32.totalorder %s478, 0
      %s481 = sadd.s32 %s480, 1
      %s482 = scalar_select %p479, %s480, %s481
      %p485 = pneg %p479
      %p486 = scmp.eq.s32.totalorder %s30, 3
      %p487 = por %p485, %p486
      %p488 = scmp.ne.s32.totalorder %s480, %s483
      %p489 = scmp.eq.s32.totalorder %s30, 0
      %p490 = por %p488, %p489
      %p491 = scmp.ne.s32.totalorder %s480, %s483
      %p492 = scmp.eq.s32.totalorder %s35, 3
      %p493 = por %p491, %p492
      %p494 = scmp.ne.s32.totalorder %s483, %s484
      %p495 = scmp.eq.s32.totalorder %s35, 0
      %p496 = por %p494, %p495
      %p497 = scmp.ne.s32.totalorder %s483, %s484
      %p498 = scmp.eq.s32.totalorder %s36, 3
      %p499 = por %p497, %p498
      %p501 = scmp.ne.s32.totalorder %s484, %s500
      %p502 = scmp.eq.s32.totalorder %s36, 0
      %p503 = por %p501, %p502
      %s504 = ssub.s32 %s38, %s45
      %p505 = scmp.eq.s32.totalorder %s504, 0
      %s507 = sadd.s32 %s506, 1
      %s508 = scalar_select %p505, %s506, %s507
      %p511 = pneg %p505
      %p512 = scmp.eq.s32.totalorder %s30, 3
      %p513 = por %p511, %p512
      %p514 = scmp.ne.s32.totalorder %s506, %s509
      %p515 = scmp.eq.s32.totalorder %s30, 0
      %p516 = por %p514, %p515
      %p517 = scmp.ne.s32.totalorder %s506, %s509
      %p518 = scmp.eq.s32.totalorder %s35, 3
      %p519 = por %p517, %p518
      %p520 = scmp.ne.s32.totalorder %s509, %s510
      %p521 = scmp.eq.s32.totalorder %s35, 0
      %p522 = por %p520, %p521
      %p523 = scmp.ne.s32.totalorder %s509, %s510
      %p524 = scmp.eq.s32.totalorder %s36, 3
      %p525 = por %p523, %p524
      %p527 = scmp.ne.s32.totalorder %s510, %s526
      %p528 = scmp.eq.s32.totalorder %s36, 0
      %p529 = por %p527, %p528
      %s530 = ssub.s32 %s38, %s45
      %p531 = scmp.eq.s32.totalorder %s530, 0
      %s533 = sadd.s32 %s532, 1
      %s534 = scalar_select %p531, %s532, %s533
      %p537 = pneg %p531
      %p538 = scmp.eq.s32.totalorder %s30, 3
      %p539 = por %p537, %p538
      %p540 = scmp.ne.s32.totalorder %s532, %s535
      %p541 = scmp.eq.s32.totalorder %s30, 0
      %p542 = por %p540, %p541
      %p543 = scmp.ne.s32.totalorder %s532, %s535
      %p544 = scmp.eq.s32.totalorder %s35, 3
      %p545 = por %p543, %p544
      %p546 = scmp.ne.s32.totalorder %s535, %s536
      %p547 = scmp.eq.s32.totalorder %s35, 0
      %p548 = por %p546, %p547
      %p549 = scmp.ne.s32.totalorder %s535, %s536
      %p550 = scmp.eq.s32.totalorder %s36, 3
      %p551 = por %p549, %p550
      %p553 = scmp.ne.s32.totalorder %s536, %s552
      %p554 = scmp.eq.s32.totalorder %s36, 0
      %p555 = por %p553, %p554
      %s556 = ssub.s32 %s37, %s49
      %p557 = scmp.eq.s32.totalorder %s556, 0
      %s559 = sadd.s32 %s558, 1
      %s560 = scalar_select %p557, %s558, %s559
      %p563 = pneg %p557
      %p564 = scmp.eq.s32.totalorder %s30, 3
      %p565 = por %p563, %p564
      %p566 = scmp.ne.s32.totalorder %s558, %s561
      %p567 = scmp.eq.s32.totalorder %s30, 0
      %p568 = por %p566, %p567
      %p569 = scmp.ne.s32.totalorder %s558, %s561
      %p570 = scmp.eq.s32.totalorder %s35, 3
      %p571 = por %p569, %p570
      %p572 = scmp.ne.s32.totalorder %s561, %s562
      %p573 = scmp.eq.s32.totalorder %s35, 0
      %p574 = por %p572, %p573
      %p575 = scmp.ne.s32.totalorder %s561, %s562
      %p576 = scmp.eq.s32.totalorder %s36, 3
      %p577 = por %p575, %p576
      %p579 = scmp.ne.s32.totalorder %s562, %s578
      %p580 = scmp.eq.s32.totalorder %s36, 0
      %p581 = por %p579, %p580
      %p582 = scmp.le.s32.totalorder 1, %s30
      %p583 = scmp.lt.s32.totalorder %s30, 5
      %p584 = pnand %p582, %p583
      %p585 = pneg %p584
      // Predicated region
      $region9: #{tpu_custom_call.1} parent=5 // pred_check
        _
      $region10: #{tpu_custom_call.1} parent=5 // pred_check_branch
        %587 = sbr.rel (%p584) target = $region12
      $region11: #{tpu_custom_call.1} parent=5 // pred_region
        %s588 = ssub.s32 %s30, 1
        // Predicated region
        $region13: #{tpu_custom_call.1} parent=11 // pred_check
          %p589 = pneg %p89
        $region14: #{tpu_custom_call.1} parent=11 // pred_check_branch
          %591 = sbr.rel (%p589) target = $region16
        $region15: #{tpu_custom_call.1} parent=11 // pred_region
          _
        $region16: #{tpu_custom_call.1} parent=11 // pred_fallthru
          _
        // Predicated region
        $region17: #{tpu_custom_call.1} parent=11 // pred_check
          %p592 = pneg %p110
        $region18: #{tpu_custom_call.1} parent=11 // pred_check_branch
          %594 = sbr.rel (%p592) target = $region20
        $region19: #{tpu_custom_call.1} parent=11 // pred_region
          _
        $region20: #{tpu_custom_call.1} parent=11 // pred_fallthru
          _
        // Predicated region
        $region21: #{tpu_custom_call.1} parent=11 // pred_check
          %p595 = pneg %p131
        $region22: #{tpu_custom_call.1} parent=11 // pred_check_branch
          %597 = sbr.rel (%p595) target = $region24
        $region23: #{tpu_custom_call.1} parent=11 // pred_region
          _
        $region24: #{tpu_custom_call.1} parent=11 // pred_fallthru
          _
        // Predicated region
        $region25: #{tpu_custom_call.1} parent=11 // pred_check
          %p598 = pneg %p152
        $region26: #{tpu_custom_call.1} parent=11 // pred_check_branch
          %600 = sbr.rel (%p598) target = $region28
        $region27: #{tpu_custom_call.1} parent=11 // pred_region
          _
        $region28: #{tpu_custom_call.1} parent=11 // pred_fallthru
          _
        // Predicated region
        $region29: #{tpu_custom_call.1} parent=11 // pred_check
          %p601 = pneg %p173
        $region30: #{tpu_custom_call.1} parent=11 // pred_check_branch
          %603 = sbr.rel (%p601) target = $region32
        $region31: #{tpu_custom_call.1} parent=11 // pred_region
          _
        $region32: #{tpu_custom_call.1} parent=11 // pred_fallthru
          _
        // Predicated region
        $region33: #{tpu_custom_call.1} parent=11 // pred_check
          %p604 = pneg %p194
        $region34: #{tpu_custom_call.1} parent=11 // pred_check_branch
          %606 = sbr.rel (%p604) target = $region36
        $region35: #{tpu_custom_call.1} parent=11 // pred_region
          _
        $region36: #{tpu_custom_call.1} parent=11 // pred_fallthru
          _
        // Predicated region
        $region37: #{tpu_custom_call.1} parent=11 // pred_check
          %p607 = pneg %p215
        $region38: #{tpu_custom_call.1} parent=11 // pred_check_branch
          %609 = sbr.rel (%p607) target = $region40
        $region39: #{tpu_custom_call.1} parent=11 // pred_region
          _
        $region40: #{tpu_custom_call.1} parent=11 // pred_fallthru
          _
        // Predicated region
        $region41: #{tpu_custom_call.1} parent=11 // pred_check
          %p610 = pneg %p236
        $region42: #{tpu_custom_call.1} parent=11 // pred_check_branch
          %612 = sbr.rel (%p610) target = $region44
        $region43: #{tpu_custom_call.1} parent=11 // pred_region
          _
        $region44: #{tpu_custom_call.1} parent=11 // pred_fallthru
          _
      $region12: #{tpu_custom_call.1} parent=5 // pred_fallthru
        _
      %p613 = scmp.lt.s32.totalorder %s30, 4
      // Predicated region
      $region45: #{tpu_custom_call.1} parent=5 // pred_check
        %p614 = pneg %p613
      $region46: #{tpu_custom_call.1} parent=5 // pred_check_branch
        %616 = sbr.rel (%p614) target = $region48
      $region47: #{tpu_custom_call.1} parent=5 // pred_region
        // Predicated region
        $region49: #{tpu_custom_call.1} parent=47 // pred_check
          %p617 = pneg %p62
        $region50: #{tpu_custom_call.1} parent=47 // pred_check_branch
          %619 = sbr.rel (%p617) target = $region52
        $region51: #{tpu_custom_call.1} parent=47 // pred_region
          %p620 = scmp.lt.s32.totalorder %s37, 1
          %s621 = scalar_select %p620, %s37, 1
          %s622 = smul.addr %s621, 2
          %s623 = smul.addr %s622, 4
          %s624 = scalar_lea.vmem %s0, %s623
        $region52: #{tpu_custom_call.1} parent=47 // pred_fallthru
          _
        // Predicated region
        $region53: #{tpu_custom_call.1} parent=47 // pred_check
          %p625 = pneg %p256
        $region54: #{tpu_custom_call.1} parent=47 // pred_check_branch
          %627 = sbr.rel (%p625) target = $region56
        $region55: #{tpu_custom_call.1} parent=47 // pred_region
          %p628 = scmp.lt.s32.totalorder %s38, 1
          %s629 = scalar_select %p628, %s38, 1
          %s630 = scalar_lea.vmem %s9, %s629
        $region56: #{tpu_custom_call.1} parent=47 // pred_fallthru
          _
        // Predicated region
        $region57: #{tpu_custom_call.1} parent=47 // pred_check
          %p631 = pneg %p282
        $region58: #{tpu_custom_call.1} parent=47 // pred_check_branch
          %633 = sbr.rel (%p631) target = $region60
        $region59: #{tpu_custom_call.1} parent=47 // pred_region
          %p634 = scmp.lt.s32.totalorder %s38, 1
          %s635 = scalar_select %p634, %s38, 1
          %s636 = scalar_lea.vmem %s10, %s635
        $region60: #{tpu_custom_call.1} parent=47 // pred_fallthru
          _
        // Predicated region
        $region61: #{tpu_custom_call.1} parent=47 // pred_check
          %p637 = pneg %p308
        $region62: #{tpu_custom_call.1} parent=47 // pred_check_branch
          %639 = sbr.rel (%p637) target = $region64
        $region63: #{tpu_custom_call.1} parent=47 // pred_region
          %p640 = scmp.lt.s32.totalorder %s38, 1
          %s641 = scalar_select %p640, %s38, 1
          %s642 = smul.addr %s641, 4
          %s643 = smul.addr %s642, 4
          %s644 = scalar_lea.vmem %s11, %s643
        $region64: #{tpu_custom_call.1} parent=47 // pred_fallthru
          _
        // Predicated region
        $region65: #{tpu_custom_call.1} parent=47 // pred_check
          %p645 = pneg %p334
        $region66: #{tpu_custom_call.1} parent=47 // pred_check_branch
          %647 = sbr.rel (%p645) target = $region68
        $region67: #{tpu_custom_call.1} parent=47 // pred_region
          %p648 = scmp.lt.s32.totalorder %s38, 1
          %s649 = scalar_select %p648, %s38, 1
          %s650 = scalar_lea.vmem %s12, %s649
        $region68: #{tpu_custom_call.1} parent=47 // pred_fallthru
          _
        // Predicated region
        $region69: #{tpu_custom_call.1} parent=47 // pred_check
          %p651 = pneg %p360
        $region70: #{tpu_custom_call.1} parent=47 // pred_check_branch
          %653 = sbr.rel (%p651) target = $region72
        $region71: #{tpu_custom_call.1} parent=47 // pred_region
          %p654 = scmp.lt.s32.totalorder %s38, 1
          %s655 = scalar_select %p654, %s38, 1
          %s656 = smul.addr %s655, 4
          %s657 = smul.addr %s656, 4
          %s658 = scalar_lea.vmem %s13, %s657
        $region72: #{tpu_custom_call.1} parent=47 // pred_fallthru
          _
        // Predicated region
        $region73: #{tpu_custom_call.1} parent=47 // pred_check
          %p659 = pneg %p386
        $region74: #{tpu_custom_call.1} parent=47 // pred_check_branch
          %661 = sbr.rel (%p659) target = $region76
        $region75: #{tpu_custom_call.1} parent=47 // pred_region
          %p662 = scmp.lt.s32.totalorder %s38, 1
          %s663 = scalar_select %p662, %s38, 1
          %s664 = scalar_lea.vmem %s14, %s663
        $region76: #{tpu_custom_call.1} parent=47 // pred_fallthru
          _
        // Predicated region
        $region77: #{tpu_custom_call.1} parent=47 // pred_check
          %p665 = pneg %p412
        $region78: #{tpu_custom_call.1} parent=47 // pred_check_branch
          %667 = sbr.rel (%p665) target = $region80
        $region79: #{tpu_custom_call.1} parent=47 // pred_region
          %p668 = scmp.lt.s32.totalorder %s38, 1
          %s669 = scalar_select %p668, %s38, 1
          %s670 = scalar_lea.vmem %s15, %s669
        $region80: #{tpu_custom_call.1} parent=47 // pred_fallthru
          _
        // Predicated region
        $region81: #{tpu_custom_call.1} parent=47 // pred_check
          %p671 = pneg %p438
        $region82: #{tpu_custom_call.1} parent=47 // pred_check_branch
          %673 = sbr.rel (%p671) target = $region84
        $region83: #{tpu_custom_call.1} parent=47 // pred_region
          %p674 = scmp.lt.s32.totalorder %s38, 1
          %s675 = scalar_select %p674, %s38, 1
          %s676 = scalar_lea.vmem %s16, %s675
        $region84: #{tpu_custom_call.1} parent=47 // pred_fallthru
          _
        // Predicated region
        $region85: #{tpu_custom_call.1} parent=47 // pred_check
          %p677 = pneg %p464
        $region86: #{tpu_custom_call.1} parent=47 // pred_check_branch
          %679 = sbr.rel (%p677) target = $region88
        $region87: #{tpu_custom_call.1} parent=47 // pred_region
          %p680 = scmp.lt.s32.totalorder %s38, 1
          %s681 = scalar_select %p680, %s38, 1
          %s682 = smul.addr %s681, 4
          %s683 = smul.addr %s682, 4
          %s684 = scalar_lea.vmem %s17, %s683
        $region88: #{tpu_custom_call.1} parent=47 // pred_fallthru
          _
        // Predicated region
        $region89: #{tpu_custom_call.1} parent=47 // pred_check
          %p685 = pneg %p490
        $region90: #{tpu_custom_call.1} parent=47 // pred_check_branch
          %687 = sbr.rel (%p685) target = $region92
        $region91: #{tpu_custom_call.1} parent=47 // pred_region
          %p688 = scmp.lt.s32.totalorder %s38, 1
          %s689 = scalar_select %p688, %s38, 1
          %s690 = scalar_lea.vmem %s18, %s689
        $region92: #{tpu_custom_call.1} parent=47 // pred_fallthru
          _
        // Predicated region
        $region93: #{tpu_custom_call.1} parent=47 // pred_check
          %p691 = pneg %p516
        $region94: #{tpu_custom_call.1} parent=47 // pred_check_branch
          %693 = sbr.rel (%p691) target = $region96
        $region95: #{tpu_custom_call.1} parent=47 // pred_region
          %p694 = scmp.lt.s32.totalorder %s38, 1
          %s695 = scalar_select %p694, %s38, 1
          %s696 = smul.addr %s695, 16
          %s697 = smul.addr %s696, 4
          %s698 = scalar_lea.vmem %s19, %s697
        $region96: #{tpu_custom_call.1} parent=47 // pred_fallthru
          _
        // Predicated region
        $region97: #{tpu_custom_call.1} parent=47 // pred_check
          %p699 = pneg %p542
        $region98: #{tpu_custom_call.1} parent=47 // pred_check_branch
          %701 = sbr.rel (%p699) target = $region100
        $region99: #{tpu_custom_call.1} parent=47 // pred_region
          %p702 = scmp.lt.s32.totalorder %s38, 1
          %s703 = scalar_select %p702, %s38, 1
          %s704 = scalar_lea.vmem %s20, %s703
        $region100: #{tpu_custom_call.1} parent=47 // pred_fallthru
          _
      $region48: #{tpu_custom_call.1} parent=5 // pred_fallthru
        _
      %p705 = scmp.le.s32.totalorder 1, %s30
      %p706 = scmp.lt.s32.totalorder %s30, 5
      %p707 = pnand %p705, %p706
      %p708 = pneg %p707
      // Predicated region
      $region101: #{tpu_custom_call.1} parent=5 // pred_check
        _
      $region102: #{tpu_custom_call.1} parent=5 // pred_check_branch
        %710 = sbr.rel (%p707) target = $region104
      $region103: #{tpu_custom_call.1} parent=5 // pred_region
        %s711 = ssub.s32 %s30, 1
        %p712 = scmp.lt.s32.totalorder %s39, 1
        %s713 = scalar_select %p712, %s39, 1
        %s714 = smul.addr %s713, 2
        %s715 = smul.addr %s714, 4
        %s716 = scalar_lea.vmem %s0, %s715
        %p717 = pneg %p68
        %p718 = pneg %p65
        %p719 = pneg %p89
        %p720 = pneg %p86
        %p721 = pneg %p110
        %p722 = pneg %p107
        %p723 = pneg %p131
        %p724 = pneg %p128
        %p725 = pneg %p152
        %p726 = pneg %p149
        %p727 = pneg %p173
        %p728 = pneg %p170
        %p729 = pneg %p194
        %p730 = pneg %p191
        %p731 = pneg %p215
        %p732 = pneg %p212
        %p733 = pneg %p236
        %p734 = pneg %p233
        %p735 = scmp.lt.s32.totalorder %s40, 1
        %s736 = scalar_select %p735, %s40, 1
        %s737 = scalar_lea.vmem %s9, %s736
        %p738 = pneg %p262
        %p739 = pneg %p259
        %p740 = scmp.lt.s32.totalorder %s40, 1
        %s741 = scalar_select %p740, %s40, 1
        %s742 = scalar_lea.vmem %s10, %s741
        %p743 = pneg %p288
        %p744 = pneg %p285
        %p745 = scmp.lt.s32.totalorder %s40, 1
        %s746 = scalar_select %p745, %s40, 1
        %s747 = smul.addr %s746, 4
        %s748 = smul.addr %s747, 4
        %s749 = scalar_lea.vmem %s11, %s748
        %p750 = pneg %p314
        %p751 = pneg %p311
        %p752 = scmp.lt.s32.totalorder %s40, 1
        %s753 = scalar_select %p752, %s40, 1
        %s754 = scalar_lea.vmem %s12, %s753
        %p755 = pneg %p340
        %p756 = pneg %p337
        %p757 = scmp.lt.s32.totalorder %s40, 1
        %s758 = scalar_select %p757, %s40, 1
        %s759 = smul.addr %s758, 4
        %s760 = smul.addr %s759, 4
        %s761 = scalar_lea.vmem %s13, %s760
        %p762 = pneg %p366
        %p763 = pneg %p363
        %p764 = scmp.lt.s32.totalorder %s40, 1
        %s765 = scalar_select %p764, %s40, 1
        %s766 = scalar_lea.vmem %s14, %s765
        %p767 = pneg %p392
        %p768 = pneg %p389
        %p769 = scmp.lt.s32.totalorder %s40, 1
        %s770 = scalar_select %p769, %s40, 1
        %s771 = scalar_lea.vmem %s15, %s770
        %p772 = pneg %p418
        %p773 = pneg %p415
        %p774 = scmp.lt.s32.totalorder %s40, 1
        %s775 = scalar_select %p774, %s40, 1
        %s776 = scalar_lea.vmem %s16, %s775
        %p777 = pneg %p444
        %p778 = pneg %p441
        %p779 = scmp.lt.s32.totalorder %s40, 1
        %s780 = scalar_select %p779, %s40, 1
        %s781 = smul.addr %s780, 4
        %s782 = smul.addr %s781, 4
        %s783 = scalar_lea.vmem %s17, %s782
        %p784 = pneg %p470
        %p785 = pneg %p467
        %p786 = scmp.lt.s32.totalorder %s40, 1
        %s787 = scalar_select %p786, %s40, 1
        %s788 = scalar_lea.vmem %s18, %s787
        %p789 = pneg %p496
        %p790 = pneg %p493
        %p791 = scmp.lt.s32.totalorder %s40, 1
        %s792 = scalar_select %p791, %s40, 1
        %s793 = smul.addr %s792, 16
        %s794 = smul.addr %s793, 4
        %s795 = scalar_lea.vmem %s19, %s794
        %p796 = pneg %p522
        %p797 = pneg %p519
        %p798 = scmp.lt.s32.totalorder %s40, 1
        %s799 = scalar_select %p798, %s40, 1
        %s800 = scalar_lea.vmem %s20, %s799
        %p801 = pneg %p548
        %p802 = pneg %p545
        %p803 = pneg %p574
        %p804 = pneg %p571
        %s805 = sand.u32 %s561, 1
        %s806 = scalar_lea.sflag [#allocation4], %s805
        %s807 = sand.u32 %s561, 1
        %s808 = smul.addr %s807, 2
        %s809 = scalar_lea.vmem [#allocation3], %s808
        %p810 = scmp.lt.s32.totalorder %s39, 1
        %s811 = scalar_select %p810, %s39, 1
        %s812 = smul.addr %s811, 2
        %s813 = smul.addr %s812, 4
        %s814 = scalar_lea.vmem %s0, %s813
        %p815 = scmp.lt.s32.totalorder %s40, 1
        %s816 = scalar_select %p815, %s40, 1
        %s817 = scalar_lea.vmem %s9, %s816
        %p818 = scmp.lt.s32.totalorder %s40, 1
        %s819 = scalar_select %p818, %s40, 1
        %s820 = scalar_lea.vmem %s10, %s819
        %p821 = scmp.lt.s32.totalorder %s40, 1
        %s822 = scalar_select %p821, %s40, 1
        %s823 = smul.addr %s822, 4
        %s824 = smul.addr %s823, 4
        %s825 = scalar_lea.vmem %s11, %s824
        %p826 = scmp.lt.s32.totalorder %s40, 1
        %s827 = scalar_select %p826, %s40, 1
        %s828 = scalar_lea.vmem %s12, %s827
        %p829 = scmp.lt.s32.totalorder %s40, 1
        %s830 = scalar_select %p829, %s40, 1
        %s831 = smul.addr %s830, 4
        %s832 = smul.addr %s831, 4
        %s833 = scalar_lea.vmem %s13, %s832
        %p834 = scmp.lt.s32.totalorder %s40, 1
        %s835 = scalar_select %p834, %s40, 1
        %s836 = scalar_lea.vmem %s14, %s835
        %p837 = scmp.lt.s32.totalorder %s40, 1
        %s838 = scalar_select %p837, %s40, 1
        %s839 = scalar_lea.vmem %s15, %s838
        %p840 = scmp.lt.s32.totalorder %s40, 1
        %s841 = scalar_select %p840, %s40, 1
        %s842 = scalar_lea.vmem %s16, %s841
        %p843 = scmp.lt.s32.totalorder %s40, 1
        %s844 = scalar_select %p843, %s40, 1
        %s845 = smul.addr %s844, 4
        %s846 = smul.addr %s845, 4
        %s847 = scalar_lea.vmem %s17, %s846
        %p848 = scmp.lt.s32.totalorder %s40, 1
        %s849 = scalar_select %p848, %s40, 1
        %s850 = scalar_lea.vmem %s18, %s849
        %p851 = scmp.lt.s32.totalorder %s40, 1
        %s852 = scalar_select %p851, %s40, 1
        %s853 = smul.addr %s852, 16
        %s854 = smul.addr %s853, 4
        %s855 = scalar_lea.vmem %s19, %s854
        %p856 = scmp.lt.s32.totalorder %s40, 1
        %s857 = scalar_select %p856, %s40, 1
        %s858 = scalar_lea.vmem %s20, %s857
        %p860 = scmp.eq.s32.totalorder %s40, 0
        // Predicated region
        $region105: #{tpu_custom_call.1} parent=103 // pred_check
          %p861 = pneg %p860
        $region106: #{tpu_custom_call.1} parent=103 // pred_check_branch
          %863 = sbr.rel (%p861) target = $region108
        $region107: #{tpu_custom_call.1} parent=103 // pred_region
          %v864 = vld [vmem:[%s814] sm:$0xff]
          %v865 = vld [vmem:[%s1] sm:$0xf]
          %v866 = vld [vmem:[%s1 + $0x4] sm:$0xf]
          %v867 = vld [vmem:[%s1 + $0x8] sm:$0xf]
          %v868 = vld [vmem:[%s1 + $0xc] sm:$0xf]
          %v869 = vld [vmem:[%s1 + $0x10] sm:$0xf]
          %v870 = vld [vmem:[%s1 + $0x14] sm:$0xf]
          %v871 = vld [vmem:[%s1 + $0x18] sm:$0xf]
          %v872 = vld [vmem:[%s1 + $0x1c] sm:$0xf]
          %v873 = vld [vmem:[%s1 + $0x20] sm:$0xf]
          %v874 = vld [vmem:[%s1 + $0x24] sm:$0xf]
          %v875 = vld [vmem:[%s1 + $0x28] sm:$0xf]
          %v876 = vld [vmem:[%s1 + $0x2c] sm:$0xf]
          %v877 = vld [vmem:[%s1 + $0x30] sm:$0xf]
          %v878 = vld [vmem:[%s1 + $0x34] sm:$0xf]
          %v879 = vld [vmem:[%s1 + $0x38] sm:$0xf]
          %v880 = vld [vmem:[%s1 + $0x3c] sm:$0xf]
          %v881 = vld [vmem:[%s1 + $0x40] sm:$0xf]
          %v882 = vld [vmem:[%s1 + $0x44] sm:$0xf]
          %v883 = vld [vmem:[%s1 + $0x48] sm:$0xf]
          %v884 = vld [vmem:[%s1 + $0x4c] sm:$0xf]
          %v885 = vld [vmem:[%s1 + $0x50] sm:$0xf]
          %v886 = vld [vmem:[%s1 + $0x54] sm:$0xf]
          %v887 = vld [vmem:[%s1 + $0x58] sm:$0xf]
          %v888 = vld [vmem:[%s1 + $0x5c] sm:$0xf]
          %v890 = vunpack.c.l.b16 %v864
          %v891 = vunpack.c.h.b16 %v864
          %v892 = vpack.c.b16 %v890, %v890
          %v893 = vpack.c.b16 %v891, %v891
          %v919 = vunpack.c.l.b16 %v865
          %v920 = vunpack.c.l.b16 %v866
          %v921 = vunpack.c.l.b16 %v867
          %v922 = vunpack.c.l.b16 %v868
          %v923 = vunpack.c.l.b16 %v869
          %v924 = vunpack.c.l.b16 %v870
          %v925 = vunpack.c.l.b16 %v871
          %v926 = vunpack.c.l.b16 %v872
          %v927 = vunpack.c.l.b16 %v873
          %v928 = vunpack.c.l.b16 %v874
          %v929 = vunpack.c.l.b16 %v875
          %v930 = vunpack.c.l.b16 %v876
          %v931 = vunpack.c.l.b16 %v877
          %v932 = vunpack.c.l.b16 %v878
          %v933 = vunpack.c.l.b16 %v879
          %v934 = vunpack.c.l.b16 %v880
          %v935 = vunpack.c.l.b16 %v881
          %v936 = vunpack.c.l.b16 %v882
          %v937 = vunpack.c.l.b16 %v883
          %v938 = vunpack.c.l.b16 %v884
          %v939 = vunpack.c.l.b16 %v885
          %v940 = vunpack.c.l.b16 %v886
          %v941 = vunpack.c.l.b16 %v887
          %v942 = vunpack.c.l.b16 %v888
          %v943 = vpack.c.b16 %v920, %v919
          %v944 = vpack.c.b16 %v922, %v921
          %v945 = vpack.c.b16 %v924, %v923
          %v946 = vpack.c.b16 %v926, %v925
          %v947 = vpack.c.b16 %v928, %v927
          %v948 = vpack.c.b16 %v930, %v929
          %v949 = vpack.c.b16 %v932, %v931
          %v950 = vpack.c.b16 %v934, %v933
          %v951 = vpack.c.b16 %v936, %v935
          %v952 = vpack.c.b16 %v938, %v937
          %v953 = vpack.c.b16 %v940, %v939
          %v954 = vpack.c.b16 %v942, %v941
          %vm967 = vcmask 523264
          %v969 = vsel %vm967, %v893, 0
          %971 = vmatprep.subr.bf16.mxu0 0
          %972 = vmatpush1.bf16.msra.mxu0 %v950
          %973 = vmatprep.subr.bf16.mxu0 0
          %974 = vmatpush1.bf16.msra.mxu0 %v949
          %975 = vmatprep.subr.bf16.mxu0 0
          %976 = vmatpush1.bf16.msra.mxu0 %v948
          %977 = vmatprep.subr.bf16.mxu0 0
          %978 = vmatpush1.bf16.msra.mxu0 %v947
          %979 = vmatprep.subr.bf16.mxu0 0
          %980 = vmatpush1.bf16.msra.mxu0 %v946
          %981 = vmatprep.subr.bf16.mxu0 0
          %982 = vmatpush1.bf16.msra.mxu0 %v945
          %983 = vmatprep.subr.bf16.mxu0 0
          %984 = vmatpush1.bf16.msra.mxu0 %v944
          %985 = vmatprep.subr.bf16.mxu0 0
          %986 = vmatpush1.bf16.msra.mxu0 %v943
          %987 = vmatprep.subr.bf16.mxu0 0
          %988 = vmatpush2.bf16.msra.mxu0 0
          %989 = vmatprep.subr.bf16.mxu0 0
          %990 = vmatpush2.bf16.msra.mxu0 0
          %991 = vmatprep.subr.bf16.mxu0 0
          %992 = vmatpush2.bf16.msra.mxu0 0
          %993 = vmatprep.subr.bf16.mxu0 0
          %994 = vmatpush2.bf16.msra.mxu0 0
          %995 = vmatprep.subr.bf16.mxu0 0
          %996 = vmatpush2.bf16.msra.mxu0 %v954
          %997 = vmatprep.subr.bf16.mxu0 0
          %998 = vmatpush2.bf16.msra.mxu0 %v953
          %999 = vmatprep.subr.bf16.mxu0 0
          %1000 = vmatpush2.bf16.msra.mxu0 %v952
          %1001 = vmatprep.subr.bf16.mxu0 0
          %1002 = vmatpush2.bf16.msra.mxu0 %v951
          %1003 = vmatprep.mubr.bf16.mxu0 %v969
          %1004 = vmatmul.mubr.bf16.gmra.mxu0 %v892
          %v1005 = vpop.f32.mrf.mxu0
          %v1006 = vadd.f32 0.0, %v1005
          %v1007 = vpop.f32.mrf.mxu0
          %v1008 = vpop.f32.mrf.mxu0
          %v1009 = vpop.f32.mrf.mxu0
          %1010 = vdwg.mxu0
          %vm1011 = vcmask 261120
          %1012 = vst.msk [vmem:[#allocation2] sm:$0xff] %vm1011, 0.0
          %1013 = vst.msk [vmem:[#allocation2 + $0x8] sm:$0xff] %vm1011, 0.0
          %v1014 = vld [vmem:[%s2] sm:$0x1]
          %v1015 = vld [vmem:[%s3] sm:$0x1]
          %v1016 = vadd.f32 %v1014, %v1015
          %vm1017 = vcmask 253952
          %1018 = vst.msk [vmem:[#allocation2] sm:$0x1] %vm1017, %v1016
          %v1019 = vld [vmem:[%s3 + $0x1] sm:$0xf]
          %v1020 = vadd.f32 %v1006, %v1019
          %vm1021 = vcmask 257024
          %1022 = vst.msk [vmem:[#allocation2 + $0x1] sm:$0xf] %vm1021, %v1020
          %v1023 = vld [vmem:[%s2] sm:$0x1]
          %v1024 = vld [vmem:[%s3] sm:$0x1]
          %v1025 = vadd.f32 %v1023, %v1024
          %s1026 = scalar_lea.vmem [#allocation2], 8
          %1027 = vst.msk [vmem:[%s1026] sm:$0x1] %vm1017, %v1025
          %v1028 = vld [vmem:[%s3 + $0x1] sm:$0xf]
          %v1030 = vrot.slane %v1028, 4
          %v1032 = vadd.f32 %v1006, %v1030
          %vm1033 = vcmask 261124
          %1034 = vst.msk [vmem:[%s1026 - $0x3] sm:$0xf0] %vm1033, %v1032
          %v1035 = vld [vmem:[#allocation2] sm:$0xff]
          %v1036 = vld [vmem:[#allocation2 + $0x8] sm:$0xff]
          %v1037 = vld [vmem:[%s4] sm:$0x1]
          %v1038 = vld [vmem:[%s5] sm:$0x1]
          %v1039 = vsel %vm1011, %v1035, 0.0
          %1040 = vadd.xlane.f32.xlu0 %v1039
          %v1041 = vpop.xlane.xlu0 %1040
          %v1042 = vsel %vm1011, %v1036, 0.0
          %1043 = vadd.xlane.f32.xlu0 %v1042
          %v1044 = vpop.xlane.xlu0 %1043
          %v1045 = vrcp.pop 32.0
          %v1046 = vmul.f32 %v1041, %v1045
          %v1047 = vmul.f32 %v1044, %v1045
          %v1048 = vsub.f32 %v1035, %v1046
          %v1049 = vsub.f32 %v1036, %v1047
          %v1050 = vmul.f32 %v1048, %v1048
          %v1051 = vmul.f32 %v1049, %v1049
          %v1052 = vsel %vm1011, %v1050, 0.0
          %1053 = vadd.xlane.f32.xlu0 %v1052
          %v1054 = vpop.xlane.xlu0 %1053
          %v1055 = vsel %vm1011, %v1051, 0.0
          %1056 = vadd.xlane.f32.xlu0 %v1055
          %v1057 = vpop.xlane.xlu0 %1056
          %v1058 = vmul.f32 %v1054, %v1045
          %v1059 = vmul.f32 %v1057, %v1045
          %v1060 = vadd.f32 %v1058, 1e-05
          %v1061 = vadd.f32 %v1059, 1e-05
          %v1062 = vrsqrt.pop %v1060
          %v1063 = vrsqrt.pop %v1061
          %v1064 = vmul.f32 %v1048, %v1062
          %v1065 = vmul.f32 %v1049, %v1063
          %v1067 = vlaneseq
          %v1068 = vshrl.u32 %v1067, 7
          %v1069 = vsub.s32 0, %v1068
          %v1070 = vrot.slane %v1037, %v1069
          %v1072 = vmul.f32 %v1064, %v1070
          %v1073 = vmul.f32 %v1065, %v1070
          %v1075 = vlaneseq
          %v1076 = vshrl.u32 %v1075, 7
          %v1077 = vsub.s32 0, %v1076
          %v1078 = vrot.slane %v1038, %v1077
          %v1080 = vadd.f32 %v1072, %v1078
          %v1081 = vadd.f32 %v1073, %v1078
          %1082 = vst.msk [vmem:[#allocation2] sm:$0xff] %vm1011, %v1080
          %1083 = vst.msk [vmem:[#allocation2 + $0x8] sm:$0xff] %vm1011, %v1081
        $region108: #{tpu_custom_call.1} parent=103 // pred_fallthru
          _
        %v1084 = vld [vmem:[#allocation2] sm:$0xff]
        %v1085 = vld [vmem:[#allocation2 + $0x8] sm:$0xff]
        %v1086 = vld [vmem:[%s817] sm:$0x1]
        %v1087 = vld [vmem:[%s820] sm:$0x1]
        %vm1088 = vcmask 261120
        %v1089 = vsel %vm1088, %v1084, 0.0
        %1090 = vadd.xlane.f32.xlu0 %v1089
        %v1091 = vpop.xlane.xlu0 %1090
        %v1092 = vsel %vm1088, %v1085, 0.0
        %1093 = vadd.xlane.f32.xlu0 %v1092
        %v1094 = vpop.xlane.xlu0 %1093
        %v1095 = vrcp.pop 32.0
        %v1096 = vmul.f32 %v1091, %v1095
        %v1097 = vmul.f32 %v1094, %v1095
        %v1098 = vsub.f32 %v1084, %v1096
        %v1099 = vsub.f32 %v1085, %v1097
        %v1100 = vmul.f32 %v1098, %v1098
        %v1101 = vmul.f32 %v1099, %v1099
        %v1102 = vsel %vm1088, %v1100, 0.0
        %1103 = vadd.xlane.f32.xlu0 %v1102
        %v1104 = vpop.xlane.xlu0 %1103
        %v1105 = vsel %vm1088, %v1101, 0.0
        %1106 = vadd.xlane.f32.xlu0 %v1105
        %v1107 = vpop.xlane.xlu0 %1106
        %v1108 = vmul.f32 %v1104, %v1095
        %v1109 = vmul.f32 %v1107, %v1095
        %v1110 = vadd.f32 %v1108, 1e-05
        %v1111 = vadd.f32 %v1109, 1e-05
        %v1112 = vrsqrt.pop %v1110
        %v1113 = vrsqrt.pop %v1111
        %v1114 = vmul.f32 %v1098, %v1112
        %v1115 = vmul.f32 %v1099, %v1113
        %v1117 = vlaneseq
        %v1118 = vshrl.u32 %v1117, 7
        %v1119 = vsub.s32 0, %v1118
        %v1120 = vrot.slane %v1086, %v1119
        %v1122 = vmul.f32 %v1114, %v1120
        %v1123 = vmul.f32 %v1115, %v1120
        %v1125 = vlaneseq
        %v1126 = vshrl.u32 %v1125, 7
        %v1127 = vsub.s32 0, %v1126
        %v1128 = vrot.slane %v1087, %v1127
        %v1130 = vadd.f32 %v1122, %v1128
        %v1131 = vadd.f32 %v1123, %v1128
        %v1132 = vpack.c.bf16 %v1131, %v1130
        %v1133 = vld [vmem:[%s825] sm:$0xf]
        %v1134 = vld [vmem:[%s825 + $0x4] sm:$0xf]
        %v1135 = vld [vmem:[%s825 + $0x8] sm:$0xf]
        %v1136 = vld [vmem:[%s825 + $0xc] sm:$0xf]
        %v1137 = vld [vmem:[%s828] sm:$0x1]
        %v1139 = vlaneseq
        %v1140 = vshrl.u32 %v1139, 7
        %v1141 = vsub.s32 0, %v1140
        %v1142 = vrot.slane %v1137, %v1141
        %v1148 = vunpack.c.l.b16 %v1133
        %v1149 = vunpack.c.l.b16 %v1134
        %v1150 = vunpack.c.l.b16 %v1135
        %v1151 = vunpack.c.l.b16 %v1136
        %v1152 = vpack.c.b16 %v1149, %v1148
        %v1153 = vpack.c.b16 %v1151, %v1150
        %v1157 = vsel %vm1088, %v1132, 0
        %1159 = vmatprep.subr.bf16.mxu0 0
        %1160 = vmatpush1.bf16.msra.mxu0 0
        %1161 = vmatprep.subr.bf16.mxu0 0
        %1162 = vmatpush1.bf16.msra.mxu0 0
        %1163 = vmatprep.subr.bf16.mxu0 0
        %1164 = vmatpush1.bf16.msra.mxu0 0
        %1165 = vmatprep.subr.bf16.mxu0 0
        %1166 = vmatpush1.bf16.msra.mxu0 0
        %1167 = vmatprep.subr.bf16.mxu0 0
        %1168 = vmatpush1.bf16.msra.mxu0 0
        %1169 = vmatprep.subr.bf16.mxu0 0
        %1170 = vmatpush1.bf16.msra.mxu0 0
        %1171 = vmatprep.subr.bf16.mxu0 0
        %1172 = vmatpush1.bf16.msra.mxu0 %v1153
        %1173 = vmatprep.subr.bf16.mxu0 0
        %1174 = vmatpush1.bf16.msra.mxu0 %v1152
        %1175 = vmatprep.subr.bf16.mxu0 0
        %1176 = vmatpush2.bf16.msra.mxu0 0
        %1177 = vmatprep.subr.bf16.mxu0 0
        %1178 = vmatpush2.bf16.msra.mxu0 0
        %1179 = vmatprep.subr.bf16.mxu0 0
        %1180 = vmatpush2.bf16.msra.mxu0 0
        %1181 = vmatprep.subr.bf16.mxu0 0
        %1182 = vmatpush2.bf16.msra.mxu0 0
        %1183 = vmatprep.subr.bf16.mxu0 0
        %1184 = vmatpush2.bf16.msra.mxu0 0
        %1185 = vmatprep.subr.bf16.mxu0 0
        %1186 = vmatpush2.bf16.msra.mxu0 0
        %1187 = vmatprep.subr.bf16.mxu0 0
        %1188 = vmatpush2.bf16.msra.mxu0 0
        %1189 = vmatprep.subr.bf16.mxu0 0
        %1190 = vmatpush2.bf16.msra.mxu0 0
        %1191 = vmatprep.mubr.bf16.mxu0 0
        %1192 = vmatmul.mubr.bf16.gmra.mxu0 %v1157
        %v1193 = vpop.f32.mrf.mxu0
        %v1194 = vadd.f32 %v1142, %v1193
        %v1195 = vpop.f32.mrf.mxu0
        %v1196 = vpop.f32.mrf.mxu0
        %v1197 = vadd.f32 %v1142, %v1196
        %v1198 = vpop.f32.mrf.mxu0
        %1199 = vdwg.mxu0
        %v1200 = vlaneseq
        %v1201 = vand.u32 %v1200, 127
        %vm1202 = vcmp.lt.s32.totalorder %v1201, 5
        %1204 = vrot.lane.b32.xlu0 %v1194, 112
        %v1205 = vpop.permute.xlu0 %1204
        %v1207 = vcombine.high %v1194, 0.0
        %v1209 = vunpack.c.l.s4 1983009808
        %v1210 = vunpack.c.0.s8 %v1209
        %v1211 = vlaneseq
        %v1212 = vshrl.u32 %v1211, 7
        %v1213 = vsub.s32 %v1210, %v1212
        %v1214 = vrot.slane %v1194, %v1213
        %v1216 = vunpack.c.l.s4 1983009808
        %v1217 = vunpack.c.0.s8 %v1216
        %v1218 = vlaneseq
        %v1219 = vshrl.u32 %v1218, 7
        %v1220 = vsub.s32 %v1217, %v1219
        %v1221 = vrot.slane %v1207, %v1220
        %v1222 = vcombine.high %v1205, 0.0
        %v1224 = vunpack.c.l.s4 1983009808
        %v1225 = vunpack.c.0.s8 %v1224
        %v1226 = vlaneseq
        %v1227 = vshrl.u32 %v1226, 7
        %v1228 = vsub.s32 %v1225, %v1227
        %v1229 = vrot.slane %v1205, %v1228
        %v1231 = vunpack.c.l.s4 1983009808
        %v1232 = vunpack.c.0.s8 %v1231
        %v1233 = vlaneseq
        %v1234 = vshrl.u32 %v1233, 7
        %v1235 = vsub.s32 %v1232, %v1234
        %v1236 = vrot.slane %v1222, %v1235
        %v1237 = vcombine.low %v1214, %v1229
        %v1238 = vcombine.high %v1214, %v1229
        %v1240 = vunpack.c.l.s4 1934713408
        %v1241 = vunpack.c.0.s8 %v1240
        %v1242 = vlaneseq
        %v1243 = vshrl.u32 %v1242, 7
        %v1244 = vsub.s32 %v1241, %v1243
        %v1245 = vrot.slane %v1237, %v1244
        %v1247 = vunpack.c.l.s4 1934713408
        %v1248 = vunpack.c.0.s8 %v1247
        %v1249 = vlaneseq
        %v1250 = vshrl.u32 %v1249, 7
        %v1251 = vsub.s32 %v1248, %v1250
        %v1252 = vrot.slane %v1238, %v1251
        %v1253 = vcombine.low %v1221, %v1236
        %v1254 = vcombine.high %v1221, %v1236
        %v1256 = vunpack.c.l.s4 1934713408
        %v1257 = vunpack.c.0.s8 %v1256
        %v1258 = vlaneseq
        %v1259 = vshrl.u32 %v1258, 7
        %v1260 = vsub.s32 %v1257, %v1259
        %v1261 = vrot.slane %v1253, %v1260
        %v1263 = vunpack.c.l.s4 1934713408
        %v1264 = vunpack.c.0.s8 %v1263
        %v1265 = vlaneseq
        %v1266 = vshrl.u32 %v1265, 7
        %v1267 = vsub.s32 %v1264, %v1266
        %v1268 = vrot.slane %v1254, %v1267
        %v1269 = vcombine.high %v1245, 0.0
        %v1270 = vcombine.high %v1252, 0.0
        %v1271 = vcombine.high %v1261, 0.0
        %v1272 = vcombine.high %v1268, 0.0
        %v1273 = vcombine.low %v1245, %v1252
        %v1275 = vunpack.c.l.s4 1983009808
        %v1276 = vunpack.c.0.s8 %v1275
        %v1277 = vlaneseq
        %v1278 = vshrl.u32 %v1277, 7
        %v1279 = vsub.s32 %v1276, %v1278
        %v1280 = vrot.slane %v1273, %v1279
        %v1281 = vcombine.low %v1269, %v1270
        %v1283 = vunpack.c.l.s4 1983009808
        %v1284 = vunpack.c.0.s8 %v1283
        %v1285 = vlaneseq
        %v1286 = vshrl.u32 %v1285, 7
        %v1287 = vsub.s32 %v1284, %v1286
        %v1288 = vrot.slane %v1281, %v1287
        %v1289 = vcombine.low %v1261, %v1268
        %v1291 = vunpack.c.l.s4 1983009808
        %v1292 = vunpack.c.0.s8 %v1291
        %v1293 = vlaneseq
        %v1294 = vshrl.u32 %v1293, 7
        %v1295 = vsub.s32 %v1292, %v1294
        %v1296 = vrot.slane %v1289, %v1295
        %v1297 = vcombine.low %v1271, %v1272
        %v1299 = vunpack.c.l.s4 1983009808
        %v1300 = vunpack.c.0.s8 %v1299
        %v1301 = vlaneseq
        %v1302 = vshrl.u32 %v1301, 7
        %v1303 = vsub.s32 %v1300, %v1302
        %v1304 = vrot.slane %v1297, %v1303
        %v1305 = vcombine.low %v1280, %v1288
        %v1307 = vunpack.c.l.s4 1934713408
        %v1308 = vunpack.c.0.s8 %v1307
        %v1309 = vlaneseq
        %v1310 = vshrl.u32 %v1309, 7
        %v1311 = vsub.s32 %v1308, %v1310
        %v1312 = vrot.slane %v1305, %v1311
        %v1313 = vcombine.low %v1296, %v1304
        %v1315 = vunpack.c.l.s4 1934713408
        %v1316 = vunpack.c.0.s8 %v1315
        %v1317 = vlaneseq
        %v1318 = vshrl.u32 %v1317, 7
        %v1319 = vsub.s32 %v1316, %v1318
        %v1320 = vrot.slane %v1313, %v1319
        %v1321 = vcombine.low %v1312, %v1320
        %v1322 = vcombine.high %v1312, %v1320
        %1323 = vrot.lane.b32.xlu0 %v1194, 96
        %v1324 = vpop.permute.xlu0 %1323
        %1325 = vrot.lane.b32.xlu0 %v1205, 96
        %v1326 = vpop.permute.xlu0 %1325
        %v1329 = vcombine.high %v1324, 0.0
        %v1331 = vunpack.c.l.s4 1983009808
        %v1332 = vunpack.c.0.s8 %v1331
        %v1333 = vlaneseq
        %v1334 = vshrl.u32 %v1333, 7
        %v1335 = vsub.s32 %v1332, %v1334
        %v1336 = vrot.slane %v1324, %v1335
        %v1338 = vunpack.c.l.s4 1983009808
        %v1339 = vunpack.c.0.s8 %v1338
        %v1340 = vlaneseq
        %v1341 = vshrl.u32 %v1340, 7
        %v1342 = vsub.s32 %v1339, %v1341
        %v1343 = vrot.slane %v1329, %v1342
        %v1344 = vcombine.high %v1326, 0.0
        %v1346 = vunpack.c.l.s4 1983009808
        %v1347 = vunpack.c.0.s8 %v1346
        %v1348 = vlaneseq
        %v1349 = vshrl.u32 %v1348, 7
        %v1350 = vsub.s32 %v1347, %v1349
        %v1351 = vrot.slane %v1326, %v1350
        %v1353 = vunpack.c.l.s4 1983009808
        %v1354 = vunpack.c.0.s8 %v1353
        %v1355 = vlaneseq
        %v1356 = vshrl.u32 %v1355, 7
        %v1357 = vsub.s32 %v1354, %v1356
        %v1358 = vrot.slane %v1344, %v1357
        %v1359 = vcombine.low %v1336, %v1351
        %v1360 = vcombine.high %v1336, %v1351
        %v1362 = vunpack.c.l.s4 1934713408
        %v1363 = vunpack.c.0.s8 %v1362
        %v1364 = vlaneseq
        %v1365 = vshrl.u32 %v1364, 7
        %v1366 = vsub.s32 %v1363, %v1365
        %v1367 = vrot.slane %v1359, %v1366
        %v1369 = vunpack.c.l.s4 1934713408
        %v1370 = vunpack.c.0.s8 %v1369
        %v1371 = vlaneseq
        %v1372 = vshrl.u32 %v1371, 7
        %v1373 = vsub.s32 %v1370, %v1372
        %v1374 = vrot.slane %v1360, %v1373
        %v1375 = vcombine.low %v1343, %v1358
        %v1376 = vcombine.high %v1343, %v1358
        %v1378 = vunpack.c.l.s4 1934713408
        %v1379 = vunpack.c.0.s8 %v1378
        %v1380 = vlaneseq
        %v1381 = vshrl.u32 %v1380, 7
        %v1382 = vsub.s32 %v1379, %v1381
        %v1383 = vrot.slane %v1375, %v1382
        %v1385 = vunpack.c.l.s4 1934713408
        %v1386 = vunpack.c.0.s8 %v1385
        %v1387 = vlaneseq
        %v1388 = vshrl.u32 %v1387, 7
        %v1389 = vsub.s32 %v1386, %v1388
        %v1390 = vrot.slane %v1376, %v1389
        %v1391 = vcombine.high %v1367, 0.0
        %v1392 = vcombine.high %v1374, 0.0
        %v1393 = vcombine.high %v1383, 0.0
        %v1394 = vcombine.high %v1390, 0.0
        %v1395 = vcombine.low %v1367, %v1374
        %v1397 = vunpack.c.l.s4 1983009808
        %v1398 = vunpack.c.0.s8 %v1397
        %v1399 = vlaneseq
        %v1400 = vshrl.u32 %v1399, 7
        %v1401 = vsub.s32 %v1398, %v1400
        %v1402 = vrot.slane %v1395, %v1401
        %v1403 = vcombine.low %v1391, %v1392
        %v1405 = vunpack.c.l.s4 1983009808
        %v1406 = vunpack.c.0.s8 %v1405
        %v1407 = vlaneseq
        %v1408 = vshrl.u32 %v1407, 7
        %v1409 = vsub.s32 %v1406, %v1408
        %v1410 = vrot.slane %v1403, %v1409
        %v1411 = vcombine.low %v1383, %v1390
        %v1413 = vunpack.c.l.s4 1983009808
        %v1414 = vunpack.c.0.s8 %v1413
        %v1415 = vlaneseq
        %v1416 = vshrl.u32 %v1415, 7
        %v1417 = vsub.s32 %v1414, %v1416
        %v1418 = vrot.slane %v1411, %v1417
        %v1419 = vcombine.low %v1393, %v1394
        %v1421 = vunpack.c.l.s4 1983009808
        %v1422 = vunpack.c.0.s8 %v1421
        %v1423 = vlaneseq
        %v1424 = vshrl.u32 %v1423, 7
        %v1425 = vsub.s32 %v1422, %v1424
        %v1426 = vrot.slane %v1419, %v1425
        %v1427 = vcombine.low %v1402, %v1410
        %v1429 = vunpack.c.l.s4 1934713408
        %v1430 = vunpack.c.0.s8 %v1429
        %v1431 = vlaneseq
        %v1432 = vshrl.u32 %v1431, 7
        %v1433 = vsub.s32 %v1430, %v1432
        %v1434 = vrot.slane %v1427, %v1433
        %v1435 = vcombine.low %v1418, %v1426
        %v1437 = vunpack.c.l.s4 1934713408
        %v1438 = vunpack.c.0.s8 %v1437
        %v1439 = vlaneseq
        %v1440 = vshrl.u32 %v1439, 7
        %v1441 = vsub.s32 %v1438, %v1440
        %v1442 = vrot.slane %v1435, %v1441
        %v1443 = vcombine.low %v1434, %v1442
        %v1444 = vcombine.high %v1434, %v1442
        %1445 = vrot.lane.b32.xlu0 %v1194, 64
        %v1446 = vpop.permute.xlu0 %1445
        %1447 = vrot.lane.b32.xlu0 %v1205, 64
        %v1448 = vpop.permute.xlu0 %1447
        %v1451 = vcombine.high %v1446, 0.0
        %v1453 = vunpack.c.l.s4 1983009808
        %v1454 = vunpack.c.0.s8 %v1453
        %v1455 = vlaneseq
        %v1456 = vshrl.u32 %v1455, 7
        %v1457 = vsub.s32 %v1454, %v1456
        %v1458 = vrot.slane %v1446, %v1457
        %v1460 = vunpack.c.l.s4 1983009808
        %v1461 = vunpack.c.0.s8 %v1460
        %v1462 = vlaneseq
        %v1463 = vshrl.u32 %v1462, 7
        %v1464 = vsub.s32 %v1461, %v1463
        %v1465 = vrot.slane %v1451, %v1464
        %v1466 = vcombine.high %v1448, 0.0
        %v1468 = vunpack.c.l.s4 1983009808
        %v1469 = vunpack.c.0.s8 %v1468
        %v1470 = vlaneseq
        %v1471 = vshrl.u32 %v1470, 7
        %v1472 = vsub.s32 %v1469, %v1471
        %v1473 = vrot.slane %v1448, %v1472
        %v1475 = vunpack.c.l.s4 1983009808
        %v1476 = vunpack.c.0.s8 %v1475
        %v1477 = vlaneseq
        %v1478 = vshrl.u32 %v1477, 7
        %v1479 = vsub.s32 %v1476, %v1478
        %v1480 = vrot.slane %v1466, %v1479
        %v1481 = vcombine.low %v1458, %v1473
        %v1482 = vcombine.high %v1458, %v1473
        %v1484 = vunpack.c.l.s4 1934713408
        %v1485 = vunpack.c.0.s8 %v1484
        %v1486 = vlaneseq
        %v1487 = vshrl.u32 %v1486, 7
        %v1488 = vsub.s32 %v1485, %v1487
        %v1489 = vrot.slane %v1481, %v1488
        %v1491 = vunpack.c.l.s4 1934713408
        %v1492 = vunpack.c.0.s8 %v1491
        %v1493 = vlaneseq
        %v1494 = vshrl.u32 %v1493, 7
        %v1495 = vsub.s32 %v1492, %v1494
        %v1496 = vrot.slane %v1482, %v1495
        %v1497 = vcombine.low %v1465, %v1480
        %v1498 = vcombine.high %v1465, %v1480
        %v1500 = vunpack.c.l.s4 1934713408
        %v1501 = vunpack.c.0.s8 %v1500
        %v1502 = vlaneseq
        %v1503 = vshrl.u32 %v1502, 7
        %v1504 = vsub.s32 %v1501, %v1503
        %v1505 = vrot.slane %v1497, %v1504
        %v1507 = vunpack.c.l.s4 1934713408
        %v1508 = vunpack.c.0.s8 %v1507
        %v1509 = vlaneseq
        %v1510 = vshrl.u32 %v1509, 7
        %v1511 = vsub.s32 %v1508, %v1510
        %v1512 = vrot.slane %v1498, %v1511
        %v1513 = vcombine.high %v1489, 0.0
        %v1514 = vcombine.high %v1496, 0.0
        %v1515 = vcombine.high %v1505, 0.0
        %v1516 = vcombine.high %v1512, 0.0
        %v1517 = vcombine.low %v1489, %v1496
        %v1519 = vunpack.c.l.s4 1983009808
        %v1520 = vunpack.c.0.s8 %v1519
        %v1521 = vlaneseq
        %v1522 = vshrl.u32 %v1521, 7
        %v1523 = vsub.s32 %v1520, %v1522
        %v1524 = vrot.slane %v1517, %v1523
        %v1525 = vcombine.low %v1513, %v1514
        %v1527 = vunpack.c.l.s4 1983009808
        %v1528 = vunpack.c.0.s8 %v1527
        %v1529 = vlaneseq
        %v1530 = vshrl.u32 %v1529, 7
        %v1531 = vsub.s32 %v1528, %v1530
        %v1532 = vrot.slane %v1525, %v1531
        %v1533 = vcombine.low %v1505, %v1512
        %v1535 = vunpack.c.l.s4 1983009808
        %v1536 = vunpack.c.0.s8 %v1535
        %v1537 = vlaneseq
        %v1538 = vshrl.u32 %v1537, 7
        %v1539 = vsub.s32 %v1536, %v1538
        %v1540 = vrot.slane %v1533, %v1539
        %v1541 = vcombine.low %v1515, %v1516
        %v1543 = vunpack.c.l.s4 1983009808
        %v1544 = vunpack.c.0.s8 %v1543
        %v1545 = vlaneseq
        %v1546 = vshrl.u32 %v1545, 7
        %v1547 = vsub.s32 %v1544, %v1546
        %v1548 = vrot.slane %v1541, %v1547
        %v1549 = vcombine.low %v1524, %v1532
        %v1551 = vunpack.c.l.s4 1934713408
        %v1552 = vunpack.c.0.s8 %v1551
        %v1553 = vlaneseq
        %v1554 = vshrl.u32 %v1553, 7
        %v1555 = vsub.s32 %v1552, %v1554
        %v1556 = vrot.slane %v1549, %v1555
        %v1557 = vcombine.low %v1540, %v1548
        %v1559 = vunpack.c.l.s4 1934713408
        %v1560 = vunpack.c.0.s8 %v1559
        %v1561 = vlaneseq
        %v1562 = vshrl.u32 %v1561, 7
        %v1563 = vsub.s32 %v1560, %v1562
        %v1564 = vrot.slane %v1557, %v1563
        %v1565 = vcombine.low %v1556, %v1564
        %v1566 = vcombine.high %v1556, %v1564
        %v1567 = vpack.c.bf16 %v1321, %v1321
        %v1568 = vpack.c.bf16 %v1322, %v1322
        %v1569 = vpack.c.bf16 %v1443, %v1443
        %v1570 = vpack.c.bf16 %v1444, %v1444
        %vm1571 = vcmask 130048
        %v1573 = vsel %vm1571, %v1567, 0
        %v1576 = vsel %vm1571, %v1569, 0
        %1578 = vmatprep.subr.bf16.mxu0 0
        %1579 = vmatpush1.bf16.xpose.msra.mxu0 0
        %1580 = vmatprep.subr.bf16.mxu0 0
        %1581 = vmatpush1.bf16.xpose.msra.mxu0 0
        %1582 = vmatprep.subr.bf16.mxu0 0
        %1583 = vmatpush1.bf16.xpose.msra.mxu0 0
        %1584 = vmatprep.subr.bf16.mxu0 0
        %1585 = vmatpush1.bf16.xpose.msra.mxu0 0
        %1586 = vmatprep.subr.bf16.mxu0 0
        %1587 = vmatpush1.bf16.xpose.msra.mxu0 0
        %1588 = vmatprep.subr.bf16.mxu0 0
        %1589 = vmatpush1.bf16.xpose.msra.mxu0 0
        %1590 = vmatprep.subr.bf16.mxu0 0
        %1591 = vmatpush1.bf16.xpose.msra.mxu0 0
        %1592 = vmatprep.subr.bf16.mxu0 0
        %1593 = vmatpush1.bf16.xpose.msra.mxu0 %v1576
        %1594 = vmatprep.subr.bf16.mxu0 0
        %1595 = vmatpush2.bf16.xpose.msra.mxu0 0
        %1596 = vmatprep.subr.bf16.mxu0 0
        %1597 = vmatpush2.bf16.xpose.msra.mxu0 0
        %1598 = vmatprep.subr.bf16.mxu0 0
        %1599 = vmatpush2.bf16.xpose.msra.mxu0 0
        %1600 = vmatprep.subr.bf16.mxu0 0
        %1601 = vmatpush2.bf16.xpose.msra.mxu0 0
        %1602 = vmatprep.subr.bf16.mxu0 0
        %1603 = vmatpush2.bf16.xpose.msra.mxu0 0
        %1604 = vmatprep.subr.bf16.mxu0 0
        %1605 = vmatpush2.bf16.xpose.msra.mxu0 0
        %1606 = vmatprep.subr.bf16.mxu0 0
        %1607 = vmatpush2.bf16.xpose.msra.mxu0 0
        %1608 = vmatprep.subr.bf16.mxu0 0
        %1609 = vmatpush2.bf16.xpose.msra.mxu0 0
        %1610 = vmatprep.mubr.bf16.mxu0 0
        %1611 = vmatmul.mubr.bf16.gmra.mxu0 %v1573
        %v1612 = vpop.f32.mrf.mxu0
        %v1613 = vadd.f32 0.0, %v1612
        %v1614 = vpop.f32.mrf.mxu0
        %v1615 = vpop.f32.mrf.mxu0
        %v1616 = vpop.f32.mrf.mxu0
        %1617 = vdwg.mxu0
        %v1619 = vsel %vm1571, %v1568, 0
        %v1622 = vsel %vm1571, %v1570, 0
        %1624 = vmatprep.subr.bf16.mxu0 0
        %1625 = vmatpush1.bf16.xpose.msra.mxu0 0
        %1626 = vmatprep.subr.bf16.mxu0 0
        %1627 = vmatpush1.bf16.xpose.msra.mxu0 0
        %1628 = vmatprep.subr.bf16.mxu0 0
        %1629 = vmatpush1.bf16.xpose.msra.mxu0 0
        %1630 = vmatprep.subr.bf16.mxu0 0
        %1631 = vmatpush1.bf16.xpose.msra.mxu0 0
        %1632 = vmatprep.subr.bf16.mxu0 0
        %1633 = vmatpush1.bf16.xpose.msra.mxu0 0
        %1634 = vmatprep.subr.bf16.mxu0 0
        %1635 = vmatpush1.bf16.xpose.msra.mxu0 0
        %1636 = vmatprep.subr.bf16.mxu0 0
        %1637 = vmatpush1.bf16.xpose.msra.mxu0 0
        %1638 = vmatprep.subr.bf16.mxu0 0
        %1639 = vmatpush1.bf16.xpose.msra.mxu0 %v1622
        %1640 = vmatprep.subr.bf16.mxu0 0
        %1641 = vmatpush2.bf16.xpose.msra.mxu0 0
        %1642 = vmatprep.subr.bf16.mxu0 0
        %1643 = vmatpush2.bf16.xpose.msra.mxu0 0
        %1644 = vmatprep.subr.bf16.mxu0 0
        %1645 = vmatpush2.bf16.xpose.msra.mxu0 0
        %1646 = vmatprep.subr.bf16.mxu0 0
        %1647 = vmatpush2.bf16.xpose.msra.mxu0 0
        %1648 = vmatprep.subr.bf16.mxu0 0
        %1649 = vmatpush2.bf16.xpose.msra.mxu0 0
        %1650 = vmatprep.subr.bf16.mxu0 0
        %1651 = vmatpush2.bf16.xpose.msra.mxu0 0
        %1652 = vmatprep.subr.bf16.mxu0 0
        %1653 = vmatpush2.bf16.xpose.msra.mxu0 0
        %1654 = vmatprep.subr.bf16.mxu0 0
        %1655 = vmatpush2.bf16.xpose.msra.mxu0 0
        %1656 = vmatprep.mubr.bf16.mxu0 0
        %1657 = vmatmul.mubr.bf16.gmra.mxu0 %v1619
        %v1658 = vpop.f32.mrf.mxu0
        %v1659 = vadd.f32 0.0, %v1658
        %v1660 = vpop.f32.mrf.mxu0
        %v1661 = vpop.f32.mrf.mxu0
        %v1662 = vpop.f32.mrf.mxu0
        %1663 = vdwg.mxu0
        %v1664 = vsel %vm1202, 1, 0
        %vm1665 = vcmp.eq.s32.totalorder %v1664, 1
        %v1666 = vsel %vm1665, %v1613, -1e+30
        %v1667 = vsel %vm1665, %v1659, -1e+30
        %vm1668 = vcmask 64512
        %v1669 = vsel %vm1668, %v1666, -inf
        %1670 = vmax.xlane.f32.xlu0 %v1669
        %v1671 = vpop.xlane.xlu0 %1670
        %v1672 = vsel %vm1668, %v1667, -inf
        %1673 = vmax.xlane.f32.xlu0 %v1672
        %v1674 = vpop.xlane.xlu0 %1673
        %v1675 = vsub.f32 %v1666, %v1671
        %v1676 = vsub.f32 %v1667, %v1674
        %v1677 = vmul.f32 %v1675, 1.442695
        %v1678 = vpow.pop %v1677
        %v1679 = vmul.f32 %v1676, 1.442695
        %v1680 = vpow.pop %v1679
        %v1681 = vsel %vm1668, %v1678, 0.0
        %1682 = vadd.xlane.f32.xlu0 %v1681
        %v1683 = vpop.xlane.xlu0 %1682
        %v1684 = vsel %vm1668, %v1680, 0.0
        %1685 = vadd.xlane.f32.xlu0 %v1684
        %v1686 = vpop.xlane.xlu0 %1685
        %v1687 = vrcp.pop %v1683
        %v1688 = vrcp.pop %v1686
        %v1689 = vmul.f32 %v1678, %v1687
        %v1690 = vmul.f32 %v1680, %v1688
        %v1691 = vpack.c.bf16 %v1689, %v1689
        %v1692 = vpack.c.bf16 %v1690, %v1690
        %v1693 = vpack.c.bf16 %v1565, %v1565
        %v1694 = vpack.c.bf16 %v1566, %v1566
        %v1696 = vsel %vm1668, %v1691, 0
        %vm1698 = vcmask 1043456
        %v1700 = vsel %vm1698, %v1693, 0
        %1702 = vmatprep.subr.bf16.mxu0 0
        %1703 = vmatpush1.bf16.msra.mxu0 0
        %1704 = vmatprep.subr.bf16.mxu0 0
        %1705 = vmatpush1.bf16.msra.mxu0 0
        %1706 = vmatprep.subr.bf16.mxu0 0
        %1707 = vmatpush1.bf16.msra.mxu0 0
        %1708 = vmatprep.subr.bf16.mxu0 0
        %1709 = vmatpush1.bf16.msra.mxu0 0
        %1710 = vmatprep.subr.bf16.mxu0 0
        %1711 = vmatpush1.bf16.msra.mxu0 0
        %1712 = vmatprep.subr.bf16.mxu0 0
        %1713 = vmatpush1.bf16.msra.mxu0 0
        %1714 = vmatprep.subr.bf16.mxu0 0
        %1715 = vmatpush1.bf16.msra.mxu0 0
        %1716 = vmatprep.subr.bf16.mxu0 0
        %1717 = vmatpush1.bf16.msra.mxu0 %v1700
        %1718 = vmatprep.subr.bf16.mxu0 0
        %1719 = vmatpush2.bf16.msra.mxu0 0
        %1720 = vmatprep.subr.bf16.mxu0 0
        %1721 = vmatpush2.bf16.msra.mxu0 0
        %1722 = vmatprep.subr.bf16.mxu0 0
        %1723 = vmatpush2.bf16.msra.mxu0 0
        %1724 = vmatprep.subr.bf16.mxu0 0
        %1725 = vmatpush2.bf16.msra.mxu0 0
        %1726 = vmatprep.subr.bf16.mxu0 0
        %1727 = vmatpush2.bf16.msra.mxu0 0
        %1728 = vmatprep.subr.bf16.mxu0 0
        %1729 = vmatpush2.bf16.msra.mxu0 0
        %1730 = vmatprep.subr.bf16.mxu0 0
        %1731 = vmatpush2.bf16.msra.mxu0 0
        %1732 = vmatprep.subr.bf16.mxu0 0
        %1733 = vmatpush2.bf16.msra.mxu0 0
        %1734 = vmatprep.mubr.bf16.mxu0 0
        %1735 = vmatmul.mubr.bf16.gmra.mxu0 %v1696
        %v1736 = vpop.f32.mrf.mxu0
        %v1737 = vadd.f32 0.0, %v1736
        %v1738 = vpop.f32.mrf.mxu0
        %v1739 = vpop.f32.mrf.mxu0
        %v1740 = vpop.f32.mrf.mxu0
        %1741 = vdwg.mxu0
        %v1743 = vsel %vm1668, %v1692, 0
        %v1746 = vsel %vm1698, %v1694, 0
        %1748 = vmatprep.subr.bf16.mxu0 0
        %1749 = vmatpush1.bf16.msra.mxu0 0
        %1750 = vmatprep.subr.bf16.mxu0 0
        %1751 = vmatpush1.bf16.msra.mxu0 0
        %1752 = vmatprep.subr.bf16.mxu0 0
        %1753 = vmatpush1.bf16.msra.mxu0 0
        %1754 = vmatprep.subr.bf16.mxu0 0
        %1755 = vmatpush1.bf16.msra.mxu0 0
        %1756 = vmatprep.subr.bf16.mxu0 0
        %1757 = vmatpush1.bf16.msra.mxu0 0
        %1758 = vmatprep.subr.bf16.mxu0 0
        %1759 = vmatpush1.bf16.msra.mxu0 0
        %1760 = vmatprep.subr.bf16.mxu0 0
        %1761 = vmatpush1.bf16.msra.mxu0 0
        %1762 = vmatprep.subr.bf16.mxu0 0
        %1763 = vmatpush1.bf16.msra.mxu0 %v1746
        %1764 = vmatprep.subr.bf16.mxu0 0
        %1765 = vmatpush2.bf16.msra.mxu0 0
        %1766 = vmatprep.subr.bf16.mxu0 0
        %1767 = vmatpush2.bf16.msra.mxu0 0
        %1768 = vmatprep.subr.bf16.mxu0 0
        %1769 = vmatpush2.bf16.msra.mxu0 0
        %1770 = vmatprep.subr.bf16.mxu0 0
        %1771 = vmatpush2.bf16.msra.mxu0 0
        %1772 = vmatprep.subr.bf16.mxu0 0
        %1773 = vmatpush2.bf16.msra.mxu0 0
        %1774 = vmatprep.subr.bf16.mxu0 0
        %1775 = vmatpush2.bf16.msra.mxu0 0
        %1776 = vmatprep.subr.bf16.mxu0 0
        %1777 = vmatpush2.bf16.msra.mxu0 0
        %1778 = vmatprep.subr.bf16.mxu0 0
        %1779 = vmatpush2.bf16.msra.mxu0 0
        %1780 = vmatprep.mubr.bf16.mxu0 0
        %1781 = vmatmul.mubr.bf16.gmra.mxu0 %v1743
        %v1782 = vpop.f32.mrf.mxu0
        %v1783 = vadd.f32 0.0, %v1782
        %v1784 = vpop.f32.mrf.mxu0
        %v1785 = vpop.f32.mrf.mxu0
        %v1786 = vpop.f32.mrf.mxu0
        %1787 = vdwg.mxu0
        %v1788 = vcombine.high %v1737, 0.0
        %v1790 = vunpack.c.l.s4 1983009808
        %v1791 = vunpack.c.0.s8 %v1790
        %v1792 = vlaneseq
        %v1793 = vshrl.u32 %v1792, 7
        %v1794 = vsub.s32 %v1791, %v1793
        %v1795 = vrot.slane %v1737, %v1794
        %v1797 = vunpack.c.l.s4 1983009808
        %v1798 = vunpack.c.0.s8 %v1797
        %v1799 = vlaneseq
        %v1800 = vshrl.u32 %v1799, 7
        %v1801 = vsub.s32 %v1798, %v1800
        %v1802 = vrot.slane %v1788, %v1801
        %v1803 = vcombine.high %v1783, 0.0
        %v1805 = vunpack.c.l.s4 1983009808
        %v1806 = vunpack.c.0.s8 %v1805
        %v1807 = vlaneseq
        %v1808 = vshrl.u32 %v1807, 7
        %v1809 = vsub.s32 %v1806, %v1808
        %v1810 = vrot.slane %v1783, %v1809
        %v1812 = vunpack.c.l.s4 1983009808
        %v1813 = vunpack.c.0.s8 %v1812
        %v1814 = vlaneseq
        %v1815 = vshrl.u32 %v1814, 7
        %v1816 = vsub.s32 %v1813, %v1815
        %v1817 = vrot.slane %v1803, %v1816
        %v1818 = vcombine.low %v1795, %v1810
        %v1819 = vcombine.high %v1795, %v1810
        %v1821 = vunpack.c.l.s4 1934713408
        %v1822 = vunpack.c.0.s8 %v1821
        %v1823 = vlaneseq
        %v1824 = vshrl.u32 %v1823, 7
        %v1825 = vsub.s32 %v1822, %v1824
        %v1826 = vrot.slane %v1818, %v1825
        %v1828 = vunpack.c.l.s4 1934713408
        %v1829 = vunpack.c.0.s8 %v1828
        %v1830 = vlaneseq
        %v1831 = vshrl.u32 %v1830, 7
        %v1832 = vsub.s32 %v1829, %v1831
        %v1833 = vrot.slane %v1819, %v1832
        %v1834 = vcombine.low %v1802, %v1817
        %v1835 = vcombine.high %v1802, %v1817
        %v1837 = vunpack.c.l.s4 1934713408
        %v1838 = vunpack.c.0.s8 %v1837
        %v1839 = vlaneseq
        %v1840 = vshrl.u32 %v1839, 7
        %v1841 = vsub.s32 %v1838, %v1840
        %v1842 = vrot.slane %v1834, %v1841
        %v1844 = vunpack.c.l.s4 1934713408
        %v1845 = vunpack.c.0.s8 %v1844
        %v1846 = vlaneseq
        %v1847 = vshrl.u32 %v1846, 7
        %v1848 = vsub.s32 %v1845, %v1847
        %v1849 = vrot.slane %v1835, %v1848
        %v1850 = vcombine.high %v1826, 0.0
        %v1851 = vcombine.high %v1833, 0.0
        %v1852 = vcombine.high %v1842, 0.0
        %v1853 = vcombine.high %v1849, 0.0
        %v1854 = vcombine.low %v1826, %v1833
        %v1856 = vunpack.c.l.s4 1983009808
        %v1857 = vunpack.c.0.s8 %v1856
        %v1858 = vlaneseq
        %v1859 = vshrl.u32 %v1858, 7
        %v1860 = vsub.s32 %v1857, %v1859
        %v1861 = vrot.slane %v1854, %v1860
        %v1862 = vcombine.low %v1850, %v1851
        %v1864 = vunpack.c.l.s4 1983009808
        %v1865 = vunpack.c.0.s8 %v1864
        %v1866 = vlaneseq
        %v1867 = vshrl.u32 %v1866, 7
        %v1868 = vsub.s32 %v1865, %v1867
        %v1869 = vrot.slane %v1862, %v1868
        %v1870 = vcombine.low %v1842, %v1849
        %v1872 = vunpack.c.l.s4 1983009808
        %v1873 = vunpack.c.0.s8 %v1872
        %v1874 = vlaneseq
        %v1875 = vshrl.u32 %v1874, 7
        %v1876 = vsub.s32 %v1873, %v1875
        %v1877 = vrot.slane %v1870, %v1876
        %v1878 = vcombine.low %v1852, %v1853
        %v1880 = vunpack.c.l.s4 1983009808
        %v1881 = vunpack.c.0.s8 %v1880
        %v1882 = vlaneseq
        %v1883 = vshrl.u32 %v1882, 7
        %v1884 = vsub.s32 %v1881, %v1883
        %v1885 = vrot.slane %v1878, %v1884
        %v1886 = vcombine.low %v1861, %v1869
        %v1888 = vunpack.c.l.s4 1934713408
        %v1889 = vunpack.c.0.s8 %v1888
        %v1890 = vlaneseq
        %v1891 = vshrl.u32 %v1890, 7
        %v1892 = vsub.s32 %v1889, %v1891
        %v1893 = vrot.slane %v1886, %v1892
        %v1894 = vcombine.low %v1877, %v1885
        %v1896 = vunpack.c.l.s4 1934713408
        %v1897 = vunpack.c.0.s8 %v1896
        %v1898 = vlaneseq
        %v1899 = vshrl.u32 %v1898, 7
        %v1900 = vsub.s32 %v1897, %v1899
        %v1901 = vrot.slane %v1894, %v1900
        %v1902 = vcombine.low %v1893, %v1901
        %v1903 = vcombine.high %v1893, %v1901
        %1905 = vrot.lane.b32.xlu0 %v1903, 16
        %v1906 = vpop.permute.xlu0 %1905
        %v1908 = vsel %vm1571, %v1902, %v1906
        %1910 = vrot.lane.b32.xlu0 %v1197, 112
        %v1911 = vpop.permute.xlu0 %1910
        %v1913 = vcombine.high %v1197, 0.0
        %v1915 = vunpack.c.l.s4 1983009808
        %v1916 = vunpack.c.0.s8 %v1915
        %v1917 = vlaneseq
        %v1918 = vshrl.u32 %v1917, 7
        %v1919 = vsub.s32 %v1916, %v1918
        %v1920 = vrot.slane %v1197, %v1919
        %v1922 = vunpack.c.l.s4 1983009808
        %v1923 = vunpack.c.0.s8 %v1922
        %v1924 = vlaneseq
        %v1925 = vshrl.u32 %v1924, 7
        %v1926 = vsub.s32 %v1923, %v1925
        %v1927 = vrot.slane %v1913, %v1926
        %v1928 = vcombine.high %v1911, 0.0
        %v1930 = vunpack.c.l.s4 1983009808
        %v1931 = vunpack.c.0.s8 %v1930
        %v1932 = vlaneseq
        %v1933 = vshrl.u32 %v1932, 7
        %v1934 = vsub.s32 %v1931, %v1933
        %v1935 = vrot.slane %v1911, %v1934
        %v1937 = vunpack.c.l.s4 1983009808
        %v1938 = vunpack.c.0.s8 %v1937
        %v1939 = vlaneseq
        %v1940 = vshrl.u32 %v1939, 7
        %v1941 = vsub.s32 %v1938, %v1940
        %v1942 = vrot.slane %v1928, %v1941
        %v1943 = vcombine.low %v1920, %v1935
        %v1944 = vcombine.high %v1920, %v1935
        %v1946 = vunpack.c.l.s4 1934713408
        %v1947 = vunpack.c.0.s8 %v1946
        %v1948 = vlaneseq
        %v1949 = vshrl.u32 %v1948, 7
        %v1950 = vsub.s32 %v1947, %v1949
        %v1951 = vrot.slane %v1943, %v1950
        %v1953 = vunpack.c.l.s4 1934713408
        %v1954 = vunpack.c.0.s8 %v1953
        %v1955 = vlaneseq
        %v1956 = vshrl.u32 %v1955, 7
        %v1957 = vsub.s32 %v1954, %v1956
        %v1958 = vrot.slane %v1944, %v1957
        %v1959 = vcombine.low %v1927, %v1942
        %v1960 = vcombine.high %v1927, %v1942
        %v1962 = vunpack.c.l.s4 1934713408
        %v1963 = vunpack.c.0.s8 %v1962
        %v1964 = vlaneseq
        %v1965 = vshrl.u32 %v1964, 7
        %v1966 = vsub.s32 %v1963, %v1965
        %v1967 = vrot.slane %v1959, %v1966
        %v1969 = vunpack.c.l.s4 1934713408
        %v1970 = vunpack.c.0.s8 %v1969
        %v1971 = vlaneseq
        %v1972 = vshrl.u32 %v1971, 7
        %v1973 = vsub.s32 %v1970, %v1972
        %v1974 = vrot.slane %v1960, %v1973
        %v1975 = vcombine.high %v1951, 0.0
        %v1976 = vcombine.high %v1958, 0.0
        %v1977 = vcombine.high %v1967, 0.0
        %v1978 = vcombine.high %v1974, 0.0
        %v1979 = vcombine.low %v1951, %v1958
        %v1981 = vunpack.c.l.s4 1983009808
        %v1982 = vunpack.c.0.s8 %v1981
        %v1983 = vlaneseq
        %v1984 = vshrl.u32 %v1983, 7
        %v1985 = vsub.s32 %v1982, %v1984
        %v1986 = vrot.slane %v1979, %v1985
        %v1987 = vcombine.low %v1975, %v1976
        %v1989 = vunpack.c.l.s4 1983009808
        %v1990 = vunpack.c.0.s8 %v1989
        %v1991 = vlaneseq
        %v1992 = vshrl.u32 %v1991, 7
        %v1993 = vsub.s32 %v1990, %v1992
        %v1994 = vrot.slane %v1987, %v1993
        %v1995 = vcombine.low %v1967, %v1974
        %v1997 = vunpack.c.l.s4 1983009808
        %v1998 = vunpack.c.0.s8 %v1997
        %v1999 = vlaneseq
        %v2000 = vshrl.u32 %v1999, 7
        %v2001 = vsub.s32 %v1998, %v2000
        %v2002 = vrot.slane %v1995, %v2001
        %v2003 = vcombine.low %v1977, %v1978
        %v2005 = vunpack.c.l.s4 1983009808
        %v2006 = vunpack.c.0.s8 %v2005
        %v2007 = vlaneseq
        %v2008 = vshrl.u32 %v2007, 7
        %v2009 = vsub.s32 %v2006, %v2008
        %v2010 = vrot.slane %v2003, %v2009
        %v2011 = vcombine.low %v1986, %v1994
        %v2013 = vunpack.c.l.s4 1934713408
        %v2014 = vunpack.c.0.s8 %v2013
        %v2015 = vlaneseq
        %v2016 = vshrl.u32 %v2015, 7
        %v2017 = vsub.s32 %v2014, %v2016
        %v2018 = vrot.slane %v2011, %v2017
        %v2019 = vcombine.low %v2002, %v2010
        %v2021 = vunpack.c.l.s4 1934713408
        %v2022 = vunpack.c.0.s8 %v2021
        %v2023 = vlaneseq
        %v2024 = vshrl.u32 %v2023, 7
        %v2025 = vsub.s32 %v2022, %v2024
        %v2026 = vrot.slane %v2019, %v2025
        %v2027 = vcombine.low %v2018, %v2026
        %v2028 = vcombine.high %v2018, %v2026
        %2029 = vrot.lane.b32.xlu0 %v1197, 96
        %v2030 = vpop.permute.xlu0 %2029
        %2031 = vrot.lane.b32.xlu0 %v1911, 96
        %v2032 = vpop.permute.xlu0 %2031
        %v2035 = vcombine.high %v2030, 0.0
        %v2037 = vunpack.c.l.s4 1983009808
        %v2038 = vunpack.c.0.s8 %v2037
        %v2039 = vlaneseq
        %v2040 = vshrl.u32 %v2039, 7
        %v2041 = vsub.s32 %v2038, %v2040
        %v2042 = vrot.slane %v2030, %v2041
        %v2044 = vunpack.c.l.s4 1983009808
        %v2045 = vunpack.c.0.s8 %v2044
        %v2046 = vlaneseq
        %v2047 = vshrl.u32 %v2046, 7
        %v2048 = vsub.s32 %v2045, %v2047
        %v2049 = vrot.slane %v2035, %v2048
        %v2050 = vcombine.high %v2032, 0.0
        %v2052 = vunpack.c.l.s4 1983009808
        %v2053 = vunpack.c.0.s8 %v2052
        %v2054 = vlaneseq
        %v2055 = vshrl.u32 %v2054, 7
        %v2056 = vsub.s32 %v2053, %v2055
        %v2057 = vrot.slane %v2032, %v2056
        %v2059 = vunpack.c.l.s4 1983009808
        %v2060 = vunpack.c.0.s8 %v2059
        %v2061 = vlaneseq
        %v2062 = vshrl.u32 %v2061, 7
        %v2063 = vsub.s32 %v2060, %v2062
        %v2064 = vrot.slane %v2050, %v2063
        %v2065 = vcombine.low %v2042, %v2057
        %v2066 = vcombine.high %v2042, %v2057
        %v2068 = vunpack.c.l.s4 1934713408
        %v2069 = vunpack.c.0.s8 %v2068
        %v2070 = vlaneseq
        %v2071 = vshrl.u32 %v2070, 7
        %v2072 = vsub.s32 %v2069, %v2071
        %v2073 = vrot.slane %v2065, %v2072
        %v2075 = vunpack.c.l.s4 1934713408
        %v2076 = vunpack.c.0.s8 %v2075
        %v2077 = vlaneseq
        %v2078 = vshrl.u32 %v2077, 7
        %v2079 = vsub.s32 %v2076, %v2078
        %v2080 = vrot.slane %v2066, %v2079
        %v2081 = vcombine.low %v2049, %v2064
        %v2082 = vcombine.high %v2049, %v2064
        %v2084 = vunpack.c.l.s4 1934713408
        %v2085 = vunpack.c.0.s8 %v2084
        %v2086 = vlaneseq
        %v2087 = vshrl.u32 %v2086, 7
        %v2088 = vsub.s32 %v2085, %v2087
        %v2089 = vrot.slane %v2081, %v2088
        %v2091 = vunpack.c.l.s4 1934713408
        %v2092 = vunpack.c.0.s8 %v2091
        %v2093 = vlaneseq
        %v2094 = vshrl.u32 %v2093, 7
        %v2095 = vsub.s32 %v2092, %v2094
        %v2096 = vrot.slane %v2082, %v2095
        %v2097 = vcombine.high %v2073, 0.0
        %v2098 = vcombine.high %v2080, 0.0
        %v2099 = vcombine.high %v2089, 0.0
        %v2100 = vcombine.high %v2096, 0.0
        %v2101 = vcombine.low %v2073, %v2080
        %v2103 = vunpack.c.l.s4 1983009808
        %v2104 = vunpack.c.0.s8 %v2103
        %v2105 = vlaneseq
        %v2106 = vshrl.u32 %v2105, 7
        %v2107 = vsub.s32 %v2104, %v2106
        %v2108 = vrot.slane %v2101, %v2107
        %v2109 = vcombine.low %v2097, %v2098
        %v2111 = vunpack.c.l.s4 1983009808
        %v2112 = vunpack.c.0.s8 %v2111
        %v2113 = vlaneseq
        %v2114 = vshrl.u32 %v2113, 7
        %v2115 = vsub.s32 %v2112, %v2114
        %v2116 = vrot.slane %v2109, %v2115
        %v2117 = vcombine.low %v2089, %v2096
        %v2119 = vunpack.c.l.s4 1983009808
        %v2120 = vunpack.c.0.s8 %v2119
        %v2121 = vlaneseq
        %v2122 = vshrl.u32 %v2121, 7
        %v2123 = vsub.s32 %v2120, %v2122
        %v2124 = vrot.slane %v2117, %v2123
        %v2125 = vcombine.low %v2099, %v2100
        %v2127 = vunpack.c.l.s4 1983009808
        %v2128 = vunpack.c.0.s8 %v2127
        %v2129 = vlaneseq
        %v2130 = vshrl.u32 %v2129, 7
        %v2131 = vsub.s32 %v2128, %v2130
        %v2132 = vrot.slane %v2125, %v2131
        %v2133 = vcombine.low %v2108, %v2116
        %v2135 = vunpack.c.l.s4 1934713408
        %v2136 = vunpack.c.0.s8 %v2135
        %v2137 = vlaneseq
        %v2138 = vshrl.u32 %v2137, 7
        %v2139 = vsub.s32 %v2136, %v2138
        %v2140 = vrot.slane %v2133, %v2139
        %v2141 = vcombine.low %v2124, %v2132
        %v2143 = vunpack.c.l.s4 1934713408
        %v2144 = vunpack.c.0.s8 %v2143
        %v2145 = vlaneseq
        %v2146 = vshrl.u32 %v2145, 7
        %v2147 = vsub.s32 %v2144, %v2146
        %v2148 = vrot.slane %v2141, %v2147
        %v2149 = vcombine.low %v2140, %v2148
        %v2150 = vcombine.high %v2140, %v2148
        %2151 = vrot.lane.b32.xlu0 %v1197, 64
        %v2152 = vpop.permute.xlu0 %2151
        %2153 = vrot.lane.b32.xlu0 %v1911, 64
        %v2154 = vpop.permute.xlu0 %2153
        %v2157 = vcombine.high %v2152, 0.0
        %v2159 = vunpack.c.l.s4 1983009808
        %v2160 = vunpack.c.0.s8 %v2159
        %v2161 = vlaneseq
        %v2162 = vshrl.u32 %v2161, 7
        %v2163 = vsub.s32 %v2160, %v2162
        %v2164 = vrot.slane %v2152, %v2163
        %v2166 = vunpack.c.l.s4 1983009808
        %v2167 = vunpack.c.0.s8 %v2166
        %v2168 = vlaneseq
        %v2169 = vshrl.u32 %v2168, 7
        %v2170 = vsub.s32 %v2167, %v2169
        %v2171 = vrot.slane %v2157, %v2170
        %v2172 = vcombine.high %v2154, 0.0
        %v2174 = vunpack.c.l.s4 1983009808
        %v2175 = vunpack.c.0.s8 %v2174
        %v2176 = vlaneseq
        %v2177 = vshrl.u32 %v2176, 7
        %v2178 = vsub.s32 %v2175, %v2177
        %v2179 = vrot.slane %v2154, %v2178
        %v2181 = vunpack.c.l.s4 1983009808
        %v2182 = vunpack.c.0.s8 %v2181
        %v2183 = vlaneseq
        %v2184 = vshrl.u32 %v2183, 7
        %v2185 = vsub.s32 %v2182, %v2184
        %v2186 = vrot.slane %v2172, %v2185
        %v2187 = vcombine.low %v2164, %v2179
        %v2188 = vcombine.high %v2164, %v2179
        %v2190 = vunpack.c.l.s4 1934713408
        %v2191 = vunpack.c.0.s8 %v2190
        %v2192 = vlaneseq
        %v2193 = vshrl.u32 %v2192, 7
        %v2194 = vsub.s32 %v2191, %v2193
        %v2195 = vrot.slane %v2187, %v2194
        %v2197 = vunpack.c.l.s4 1934713408
        %v2198 = vunpack.c.0.s8 %v2197
        %v2199 = vlaneseq
        %v2200 = vshrl.u32 %v2199, 7
        %v2201 = vsub.s32 %v2198, %v2200
        %v2202 = vrot.slane %v2188, %v2201
        %v2203 = vcombine.low %v2171, %v2186
        %v2204 = vcombine.high %v2171, %v2186
        %v2206 = vunpack.c.l.s4 1934713408
        %v2207 = vunpack.c.0.s8 %v2206
        %v2208 = vlaneseq
        %v2209 = vshrl.u32 %v2208, 7
        %v2210 = vsub.s32 %v2207, %v2209
        %v2211 = vrot.slane %v2203, %v2210
        %v2213 = vunpack.c.l.s4 1934713408
        %v2214 = vunpack.c.0.s8 %v2213
        %v2215 = vlaneseq
        %v2216 = vshrl.u32 %v2215, 7
        %v2217 = vsub.s32 %v2214, %v2216
        %v2218 = vrot.slane %v2204, %v2217
        %v2219 = vcombine.high %v2195, 0.0
        %v2220 = vcombine.high %v2202, 0.0
        %v2221 = vcombine.high %v2211, 0.0
        %v2222 = vcombine.high %v2218, 0.0
        %v2223 = vcombine.low %v2195, %v2202
        %v2225 = vunpack.c.l.s4 1983009808
        %v2226 = vunpack.c.0.s8 %v2225
        %v2227 = vlaneseq
        %v2228 = vshrl.u32 %v2227, 7
        %v2229 = vsub.s32 %v2226, %v2228
        %v2230 = vrot.slane %v2223, %v2229
        %v2231 = vcombine.low %v2219, %v2220
        %v2233 = vunpack.c.l.s4 1983009808
        %v2234 = vunpack.c.0.s8 %v2233
        %v2235 = vlaneseq
        %v2236 = vshrl.u32 %v2235, 7
        %v2237 = vsub.s32 %v2234, %v2236
        %v2238 = vrot.slane %v2231, %v2237
        %v2239 = vcombine.low %v2211, %v2218
        %v2241 = vunpack.c.l.s4 1983009808
        %v2242 = vunpack.c.0.s8 %v2241
        %v2243 = vlaneseq
        %v2244 = vshrl.u32 %v2243, 7
        %v2245 = vsub.s32 %v2242, %v2244
        %v2246 = vrot.slane %v2239, %v2245
        %v2247 = vcombine.low %v2221, %v2222
        %v2249 = vunpack.c.l.s4 1983009808
        %v2250 = vunpack.c.0.s8 %v2249
        %v2251 = vlaneseq
        %v2252 = vshrl.u32 %v2251, 7
        %v2253 = vsub.s32 %v2250, %v2252
        %v2254 = vrot.slane %v2247, %v2253
        %v2255 = vcombine.low %v2230, %v2238
        %v2257 = vunpack.c.l.s4 1934713408
        %v2258 = vunpack.c.0.s8 %v2257
        %v2259 = vlaneseq
        %v2260 = vshrl.u32 %v2259, 7
        %v2261 = vsub.s32 %v2258, %v2260
        %v2262 = vrot.slane %v2255, %v2261
        %v2263 = vcombine.low %v2246, %v2254
        %v2265 = vunpack.c.l.s4 1934713408
        %v2266 = vunpack.c.0.s8 %v2265
        %v2267 = vlaneseq
        %v2268 = vshrl.u32 %v2267, 7
        %v2269 = vsub.s32 %v2266, %v2268
        %v2270 = vrot.slane %v2263, %v2269
        %v2271 = vcombine.low %v2262, %v2270
        %v2272 = vcombine.high %v2262, %v2270
        %v2273 = vpack.c.bf16 %v2027, %v2027
        %v2274 = vpack.c.bf16 %v2028, %v2028
        %v2275 = vpack.c.bf16 %v2149, %v2149
        %v2276 = vpack.c.bf16 %v2150, %v2150
        %v2278 = vsel %vm1571, %v2273, 0
        %v2281 = vsel %vm1571, %v2275, 0
        %2283 = vmatprep.subr.bf16.mxu0 0
        %2284 = vmatpush1.bf16.xpose.msra.mxu0 0
        %2285 = vmatprep.subr.bf16.mxu0 0
        %2286 = vmatpush1.bf16.xpose.msra.mxu0 0
        %2287 = vmatprep.subr.bf16.mxu0 0
        %2288 = vmatpush1.bf16.xpose.msra.mxu0 0
        %2289 = vmatprep.subr.bf16.mxu0 0
        %2290 = vmatpush1.bf16.xpose.msra.mxu0 0
        %2291 = vmatprep.subr.bf16.mxu0 0
        %2292 = vmatpush1.bf16.xpose.msra.mxu0 0
        %2293 = vmatprep.subr.bf16.mxu0 0
        %2294 = vmatpush1.bf16.xpose.msra.mxu0 0
        %2295 = vmatprep.subr.bf16.mxu0 0
        %2296 = vmatpush1.bf16.xpose.msra.mxu0 0
        %2297 = vmatprep.subr.bf16.mxu0 0
        %2298 = vmatpush1.bf16.xpose.msra.mxu0 %v2281
        %2299 = vmatprep.subr.bf16.mxu0 0
        %2300 = vmatpush2.bf16.xpose.msra.mxu0 0
        %2301 = vmatprep.subr.bf16.mxu0 0
        %2302 = vmatpush2.bf16.xpose.msra.mxu0 0
        %2303 = vmatprep.subr.bf16.mxu0 0
        %2304 = vmatpush2.bf16.xpose.msra.mxu0 0
        %2305 = vmatprep.subr.bf16.mxu0 0
        %2306 = vmatpush2.bf16.xpose.msra.mxu0 0
        %2307 = vmatprep.subr.bf16.mxu0 0
        %2308 = vmatpush2.bf16.xpose.msra.mxu0 0
        %2309 = vmatprep.subr.bf16.mxu0 0
        %2310 = vmatpush2.bf16.xpose.msra.mxu0 0
        %2311 = vmatprep.subr.bf16.mxu0 0
        %2312 = vmatpush2.bf16.xpose.msra.mxu0 0
        %2313 = vmatprep.subr.bf16.mxu0 0
        %2314 = vmatpush2.bf16.xpose.msra.mxu0 0
        %2315 = vmatprep.mubr.bf16.mxu0 0
        %2316 = vmatmul.mubr.bf16.gmra.mxu0 %v2278
        %v2317 = vpop.f32.mrf.mxu0
        %v2318 = vadd.f32 0.0, %v2317
        %v2319 = vpop.f32.mrf.mxu0
        %v2320 = vpop.f32.mrf.mxu0
        %v2321 = vpop.f32.mrf.mxu0
        %2322 = vdwg.mxu0
        %v2324 = vsel %vm1571, %v2274, 0
        %v2327 = vsel %vm1571, %v2276, 0
        %2329 = vmatprep.subr.bf16.mxu0 0
        %2330 = vmatpush1.bf16.xpose.msra.mxu0 0
        %2331 = vmatprep.subr.bf16.mxu0 0
        %2332 = vmatpush1.bf16.xpose.msra.mxu0 0
        %2333 = vmatprep.subr.bf16.mxu0 0
        %2334 = vmatpush1.bf16.xpose.msra.mxu0 0
        %2335 = vmatprep.subr.bf16.mxu0 0
        %2336 = vmatpush1.bf16.xpose.msra.mxu0 0
        %2337 = vmatprep.subr.bf16.mxu0 0
        %2338 = vmatpush1.bf16.xpose.msra.mxu0 0
        %2339 = vmatprep.subr.bf16.mxu0 0
        %2340 = vmatpush1.bf16.xpose.msra.mxu0 0
        %2341 = vmatprep.subr.bf16.mxu0 0
        %2342 = vmatpush1.bf16.xpose.msra.mxu0 0
        %2343 = vmatprep.subr.bf16.mxu0 0
        %2344 = vmatpush1.bf16.xpose.msra.mxu0 %v2327
        %2345 = vmatprep.subr.bf16.mxu0 0
        %2346 = vmatpush2.bf16.xpose.msra.mxu0 0
        %2347 = vmatprep.subr.bf16.mxu0 0
        %2348 = vmatpush2.bf16.xpose.msra.mxu0 0
        %2349 = vmatprep.subr.bf16.mxu0 0
        %2350 = vmatpush2.bf16.xpose.msra.mxu0 0
        %2351 = vmatprep.subr.bf16.mxu0 0
        %2352 = vmatpush2.bf16.xpose.msra.mxu0 0
        %2353 = vmatprep.subr.bf16.mxu0 0
        %2354 = vmatpush2.bf16.xpose.msra.mxu0 0
        %2355 = vmatprep.subr.bf16.mxu0 0
        %2356 = vmatpush2.bf16.xpose.msra.mxu0 0
        %2357 = vmatprep.subr.bf16.mxu0 0
        %2358 = vmatpush2.bf16.xpose.msra.mxu0 0
        %2359 = vmatprep.subr.bf16.mxu0 0
        %2360 = vmatpush2.bf16.xpose.msra.mxu0 0
        %2361 = vmatprep.mubr.bf16.mxu0 0
        %2362 = vmatmul.mubr.bf16.gmra.mxu0 %v2324
        %v2363 = vpop.f32.mrf.mxu0
        %v2364 = vadd.f32 0.0, %v2363
        %v2365 = vpop.f32.mrf.mxu0
        %v2366 = vpop.f32.mrf.mxu0
        %v2367 = vpop.f32.mrf.mxu0
        %2368 = vdwg.mxu0
        %v2369 = vsel %vm1665, %v2318, -1e+30
        %v2370 = vsel %vm1665, %v2364, -1e+30
        %v2371 = vsel %vm1668, %v2369, -inf
        %2372 = vmax.xlane.f32.xlu0 %v2371
        %v2373 = vpop.xlane.xlu0 %2372
        %v2374 = vsel %vm1668, %v2370, -inf
        %2375 = vmax.xlane.f32.xlu0 %v2374
        %v2376 = vpop.xlane.xlu0 %2375
        %v2377 = vsub.f32 %v2369, %v2373
        %v2378 = vsub.f32 %v2370, %v2376
        %v2379 = vmul.f32 %v2377, 1.442695
        %v2380 = vpow.pop %v2379
        %v2381 = vmul.f32 %v2378, 1.442695
        %v2382 = vpow.pop %v2381
        %v2383 = vsel %vm1668, %v2380, 0.0
        %2384 = vadd.xlane.f32.xlu0 %v2383
        %v2385 = vpop.xlane.xlu0 %2384
        %v2386 = vsel %vm1668, %v2382, 0.0
        %2387 = vadd.xlane.f32.xlu0 %v2386
        %v2388 = vpop.xlane.xlu0 %2387
        %v2389 = vrcp.pop %v2385
        %v2390 = vrcp.pop %v2388
        %v2391 = vmul.f32 %v2380, %v2389
        %v2392 = vmul.f32 %v2382, %v2390
        %v2393 = vpack.c.bf16 %v2391, %v2391
        %v2394 = vpack.c.bf16 %v2392, %v2392
        %v2395 = vpack.c.bf16 %v2271, %v2271
        %v2396 = vpack.c.bf16 %v2272, %v2272
        %v2398 = vsel %vm1668, %v2393, 0
        %v2401 = vsel %vm1698, %v2395, 0
        %2403 = vmatprep.subr.bf16.mxu0 0
        %2404 = vmatpush1.bf16.msra.mxu0 0
        %2405 = vmatprep.subr.bf16.mxu0 0
        %2406 = vmatpush1.bf16.msra.mxu0 0
        %2407 = vmatprep.subr.bf16.mxu0 0
        %2408 = vmatpush1.bf16.msra.mxu0 0
        %2409 = vmatprep.subr.bf16.mxu0 0
        %2410 = vmatpush1.bf16.msra.mxu0 0
        %2411 = vmatprep.subr.bf16.mxu0 0
        %2412 = vmatpush1.bf16.msra.mxu0 0
        %2413 = vmatprep.subr.bf16.mxu0 0
        %2414 = vmatpush1.bf16.msra.mxu0 0
        %2415 = vmatprep.subr.bf16.mxu0 0
        %2416 = vmatpush1.bf16.msra.mxu0 0
        %2417 = vmatprep.subr.bf16.mxu0 0
        %2418 = vmatpush1.bf16.msra.mxu0 %v2401
        %2419 = vmatprep.subr.bf16.mxu0 0
        %2420 = vmatpush2.bf16.msra.mxu0 0
        %2421 = vmatprep.subr.bf16.mxu0 0
        %2422 = vmatpush2.bf16.msra.mxu0 0
        %2423 = vmatprep.subr.bf16.mxu0 0
        %2424 = vmatpush2.bf16.msra.mxu0 0
        %2425 = vmatprep.subr.bf16.mxu0 0
        %2426 = vmatpush2.bf16.msra.mxu0 0
        %2427 = vmatprep.subr.bf16.mxu0 0
        %2428 = vmatpush2.bf16.msra.mxu0 0
        %2429 = vmatprep.subr.bf16.mxu0 0
        %2430 = vmatpush2.bf16.msra.mxu0 0
        %2431 = vmatprep.subr.bf16.mxu0 0
        %2432 = vmatpush2.bf16.msra.mxu0 0
        %2433 = vmatprep.subr.bf16.mxu0 0
        %2434 = vmatpush2.bf16.msra.mxu0 0
        %2435 = vmatprep.mubr.bf16.mxu0 0
        %2436 = vmatmul.mubr.bf16.gmra.mxu0 %v2398
        %v2437 = vpop.f32.mrf.mxu0
        %v2438 = vadd.f32 0.0, %v2437
        %v2439 = vpop.f32.mrf.mxu0
        %v2440 = vpop.f32.mrf.mxu0
        %v2441 = vpop.f32.mrf.mxu0
        %2442 = vdwg.mxu0
        %v2444 = vsel %vm1668, %v2394, 0
        %v2447 = vsel %vm1698, %v2396, 0
        %2449 = vmatprep.subr.bf16.mxu0 0
        %2450 = vmatpush1.bf16.msra.mxu0 0
        %2451 = vmatprep.subr.bf16.mxu0 0
        %2452 = vmatpush1.bf16.msra.mxu0 0
        %2453 = vmatprep.subr.bf16.mxu0 0
        %2454 = vmatpush1.bf16.msra.mxu0 0
        %2455 = vmatprep.subr.bf16.mxu0 0
        %2456 = vmatpush1.bf16.msra.mxu0 0
        %2457 = vmatprep.subr.bf16.mxu0 0
        %2458 = vmatpush1.bf16.msra.mxu0 0
        %2459 = vmatprep.subr.bf16.mxu0 0
        %2460 = vmatpush1.bf16.msra.mxu0 0
        %2461 = vmatprep.subr.bf16.mxu0 0
        %2462 = vmatpush1.bf16.msra.mxu0 0
        %2463 = vmatprep.subr.bf16.mxu0 0
        %2464 = vmatpush1.bf16.msra.mxu0 %v2447
        %2465 = vmatprep.subr.bf16.mxu0 0
        %2466 = vmatpush2.bf16.msra.mxu0 0
        %2467 = vmatprep.subr.bf16.mxu0 0
        %2468 = vmatpush2.bf16.msra.mxu0 0
        %2469 = vmatprep.subr.bf16.mxu0 0
        %2470 = vmatpush2.bf16.msra.mxu0 0
        %2471 = vmatprep.subr.bf16.mxu0 0
        %2472 = vmatpush2.bf16.msra.mxu0 0
        %2473 = vmatprep.subr.bf16.mxu0 0
        %2474 = vmatpush2.bf16.msra.mxu0 0
        %2475 = vmatprep.subr.bf16.mxu0 0
        %2476 = vmatpush2.bf16.msra.mxu0 0
        %2477 = vmatprep.subr.bf16.mxu0 0
        %2478 = vmatpush2.bf16.msra.mxu0 0
        %2479 = vmatprep.subr.bf16.mxu0 0
        %2480 = vmatpush2.bf16.msra.mxu0 0
        %2481 = vmatprep.mubr.bf16.mxu0 0
        %2482 = vmatmul.mubr.bf16.gmra.mxu0 %v2444
        %v2483 = vpop.f32.mrf.mxu0
        %v2484 = vadd.f32 0.0, %v2483
        %v2485 = vpop.f32.mrf.mxu0
        %v2486 = vpop.f32.mrf.mxu0
        %v2487 = vpop.f32.mrf.mxu0
        %2488 = vdwg.mxu0
        %v2489 = vcombine.high %v2438, 0.0
        %v2491 = vunpack.c.l.s4 1983009808
        %v2492 = vunpack.c.0.s8 %v2491
        %v2493 = vlaneseq
        %v2494 = vshrl.u32 %v2493, 7
        %v2495 = vsub.s32 %v2492, %v2494
        %v2496 = vrot.slane %v2438, %v2495
        %v2498 = vunpack.c.l.s4 1983009808
        %v2499 = vunpack.c.0.s8 %v2498
        %v2500 = vlaneseq
        %v2501 = vshrl.u32 %v2500, 7
        %v2502 = vsub.s32 %v2499, %v2501
        %v2503 = vrot.slane %v2489, %v2502
        %v2504 = vcombine.high %v2484, 0.0
        %v2506 = vunpack.c.l.s4 1983009808
        %v2507 = vunpack.c.0.s8 %v2506
        %v2508 = vlaneseq
        %v2509 = vshrl.u32 %v2508, 7
        %v2510 = vsub.s32 %v2507, %v2509
        %v2511 = vrot.slane %v2484, %v2510
        %v2513 = vunpack.c.l.s4 1983009808
        %v2514 = vunpack.c.0.s8 %v2513
        %v2515 = vlaneseq
        %v2516 = vshrl.u32 %v2515, 7
        %v2517 = vsub.s32 %v2514, %v2516
        %v2518 = vrot.slane %v2504, %v2517
        %v2519 = vcombine.low %v2496, %v2511
        %v2520 = vcombine.high %v2496, %v2511
        %v2522 = vunpack.c.l.s4 1934713408
        %v2523 = vunpack.c.0.s8 %v2522
        %v2524 = vlaneseq
        %v2525 = vshrl.u32 %v2524, 7
        %v2526 = vsub.s32 %v2523, %v2525
        %v2527 = vrot.slane %v2519, %v2526
        %v2529 = vunpack.c.l.s4 1934713408
        %v2530 = vunpack.c.0.s8 %v2529
        %v2531 = vlaneseq
        %v2532 = vshrl.u32 %v2531, 7
        %v2533 = vsub.s32 %v2530, %v2532
        %v2534 = vrot.slane %v2520, %v2533
        %v2535 = vcombine.low %v2503, %v2518
        %v2536 = vcombine.high %v2503, %v2518
        %v2538 = vunpack.c.l.s4 1934713408
        %v2539 = vunpack.c.0.s8 %v2538
        %v2540 = vlaneseq
        %v2541 = vshrl.u32 %v2540, 7
        %v2542 = vsub.s32 %v2539, %v2541
        %v2543 = vrot.slane %v2535, %v2542
        %v2545 = vunpack.c.l.s4 1934713408
        %v2546 = vunpack.c.0.s8 %v2545
        %v2547 = vlaneseq
        %v2548 = vshrl.u32 %v2547, 7
        %v2549 = vsub.s32 %v2546, %v2548
        %v2550 = vrot.slane %v2536, %v2549
        %v2551 = vcombine.high %v2527, 0.0
        %v2552 = vcombine.high %v2534, 0.0
        %v2553 = vcombine.high %v2543, 0.0
        %v2554 = vcombine.high %v2550, 0.0
        %v2555 = vcombine.low %v2527, %v2534
        %v2557 = vunpack.c.l.s4 1983009808
        %v2558 = vunpack.c.0.s8 %v2557
        %v2559 = vlaneseq
        %v2560 = vshrl.u32 %v2559, 7
        %v2561 = vsub.s32 %v2558, %v2560
        %v2562 = vrot.slane %v2555, %v2561
        %v2563 = vcombine.low %v2551, %v2552
        %v2565 = vunpack.c.l.s4 1983009808
        %v2566 = vunpack.c.0.s8 %v2565
        %v2567 = vlaneseq
        %v2568 = vshrl.u32 %v2567, 7
        %v2569 = vsub.s32 %v2566, %v2568
        %v2570 = vrot.slane %v2563, %v2569
        %v2571 = vcombine.low %v2543, %v2550
        %v2573 = vunpack.c.l.s4 1983009808
        %v2574 = vunpack.c.0.s8 %v2573
        %v2575 = vlaneseq
        %v2576 = vshrl.u32 %v2575, 7
        %v2577 = vsub.s32 %v2574, %v2576
        %v2578 = vrot.slane %v2571, %v2577
        %v2579 = vcombine.low %v2553, %v2554
        %v2581 = vunpack.c.l.s4 1983009808
        %v2582 = vunpack.c.0.s8 %v2581
        %v2583 = vlaneseq
        %v2584 = vshrl.u32 %v2583, 7
        %v2585 = vsub.s32 %v2582, %v2584
        %v2586 = vrot.slane %v2579, %v2585
        %v2587 = vcombine.low %v2562, %v2570
        %v2589 = vunpack.c.l.s4 1934713408
        %v2590 = vunpack.c.0.s8 %v2589
        %v2591 = vlaneseq
        %v2592 = vshrl.u32 %v2591, 7
        %v2593 = vsub.s32 %v2590, %v2592
        %v2594 = vrot.slane %v2587, %v2593
        %v2595 = vcombine.low %v2578, %v2586
        %v2597 = vunpack.c.l.s4 1934713408
        %v2598 = vunpack.c.0.s8 %v2597
        %v2599 = vlaneseq
        %v2600 = vshrl.u32 %v2599, 7
        %v2601 = vsub.s32 %v2598, %v2600
        %v2602 = vrot.slane %v2595, %v2601
        %v2603 = vcombine.low %v2594, %v2602
        %v2604 = vcombine.high %v2594, %v2602
        %2606 = vrot.lane.b32.xlu0 %v2604, 16
        %v2607 = vpop.permute.xlu0 %2606
        %v2609 = vsel %vm1571, %v2603, %v2607
        %v2610 = vpack.c.bf16 %v2609, %v1908
        %v2611 = vld [vmem:[%s833] sm:$0xf]
        %v2612 = vld [vmem:[%s833 + $0x4] sm:$0xf]
        %v2613 = vld [vmem:[%s833 + $0x8] sm:$0xf]
        %v2614 = vld [vmem:[%s833 + $0xc] sm:$0xf]
        %v2615 = vld [vmem:[%s836] sm:$0x1]
        %v2617 = vlaneseq
        %v2618 = vshrl.u32 %v2617, 7
        %v2619 = vsub.s32 0, %v2618
        %v2620 = vrot.slane %v2615, %v2619
        %v2626 = vunpack.c.l.b16 %v2611
        %v2627 = vunpack.c.l.b16 %v2612
        %v2628 = vunpack.c.l.b16 %v2613
        %v2629 = vunpack.c.l.b16 %v2614
        %v2630 = vpack.c.b16 %v2627, %v2626
        %v2631 = vpack.c.b16 %v2629, %v2628
        %v2635 = vsel %vm1088, %v2610, 0
        %2637 = vmatprep.subr.bf16.mxu0 0
        %2638 = vmatpush1.bf16.msra.mxu0 0
        %2639 = vmatprep.subr.bf16.mxu0 0
        %2640 = vmatpush1.bf16.msra.mxu0 0
        %2641 = vmatprep.subr.bf16.mxu0 0
        %2642 = vmatpush1.bf16.msra.mxu0 0
        %2643 = vmatprep.subr.bf16.mxu0 0
        %2644 = vmatpush1.bf16.msra.mxu0 0
        %2645 = vmatprep.subr.bf16.mxu0 0
        %2646 = vmatpush1.bf16.msra.mxu0 0
        %2647 = vmatprep.subr.bf16.mxu0 0
        %2648 = vmatpush1.bf16.msra.mxu0 0
        %2649 = vmatprep.subr.bf16.mxu0 0
        %2650 = vmatpush1.bf16.msra.mxu0 %v2631
        %2651 = vmatprep.subr.bf16.mxu0 0
        %2652 = vmatpush1.bf16.msra.mxu0 %v2630
        %2653 = vmatprep.subr.bf16.mxu0 0
        %2654 = vmatpush2.bf16.msra.mxu0 0
        %2655 = vmatprep.subr.bf16.mxu0 0
        %2656 = vmatpush2.bf16.msra.mxu0 0
        %2657 = vmatprep.subr.bf16.mxu0 0
        %2658 = vmatpush2.bf16.msra.mxu0 0
        %2659 = vmatprep.subr.bf16.mxu0 0
        %2660 = vmatpush2.bf16.msra.mxu0 0
        %2661 = vmatprep.subr.bf16.mxu0 0
        %2662 = vmatpush2.bf16.msra.mxu0 0
        %2663 = vmatprep.subr.bf16.mxu0 0
        %2664 = vmatpush2.bf16.msra.mxu0 0
        %2665 = vmatprep.subr.bf16.mxu0 0
        %2666 = vmatpush2.bf16.msra.mxu0 0
        %2667 = vmatprep.subr.bf16.mxu0 0
        %2668 = vmatpush2.bf16.msra.mxu0 0
        %2669 = vmatprep.mubr.bf16.mxu0 0
        %2670 = vmatmul.mubr.bf16.gmra.mxu0 %v2635
        %v2671 = vpop.f32.mrf.mxu0
        %v2672 = vadd.f32 %v2620, %v2671
        %v2673 = vpop.f32.mrf.mxu0
        %v2674 = vpop.f32.mrf.mxu0
        %v2675 = vadd.f32 %v2620, %v2674
        %v2676 = vpop.f32.mrf.mxu0
        %2677 = vdwg.mxu0
        %v2678 = vadd.f32 %v1084, %v2672
        %v2679 = vadd.f32 %v1085, %v2675
        %v2680 = vld [vmem:[%s839] sm:$0x1]
        %v2681 = vld [vmem:[%s842] sm:$0x1]
        %v2682 = vsel %vm1088, %v2678, 0.0
        %2683 = vadd.xlane.f32.xlu0 %v2682
        %v2684 = vpop.xlane.xlu0 %2683
        %v2685 = vsel %vm1088, %v2679, 0.0
        %2686 = vadd.xlane.f32.xlu0 %v2685
        %v2687 = vpop.xlane.xlu0 %2686
        %v2688 = vmul.f32 %v2684, %v1095
        %v2689 = vmul.f32 %v2687, %v1095
        %v2690 = vsub.f32 %v2678, %v2688
        %v2691 = vsub.f32 %v2679, %v2689
        %v2692 = vmul.f32 %v2690, %v2690
        %v2693 = vmul.f32 %v2691, %v2691
        %v2694 = vsel %vm1088, %v2692, 0.0
        %2695 = vadd.xlane.f32.xlu0 %v2694
        %v2696 = vpop.xlane.xlu0 %2695
        %v2697 = vsel %vm1088, %v2693, 0.0
        %2698 = vadd.xlane.f32.xlu0 %v2697
        %v2699 = vpop.xlane.xlu0 %2698
        %v2700 = vmul.f32 %v2696, %v1095
        %v2701 = vmul.f32 %v2699, %v1095
        %v2702 = vadd.f32 %v2700, 1e-05
        %v2703 = vadd.f32 %v2701, 1e-05
        %v2704 = vrsqrt.pop %v2702
        %v2705 = vrsqrt.pop %v2703
        %v2706 = vmul.f32 %v2690, %v2704
        %v2707 = vmul.f32 %v2691, %v2705
        %v2709 = vlaneseq
        %v2710 = vshrl.u32 %v2709, 7
        %v2711 = vsub.s32 0, %v2710
        %v2712 = vrot.slane %v2680, %v2711
        %v2714 = vmul.f32 %v2706, %v2712
        %v2715 = vmul.f32 %v2707, %v2712
        %v2717 = vlaneseq
        %v2718 = vshrl.u32 %v2717, 7
        %v2719 = vsub.s32 0, %v2718
        %v2720 = vrot.slane %v2681, %v2719
        %v2722 = vadd.f32 %v2714, %v2720
        %v2723 = vadd.f32 %v2715, %v2720
        %v2724 = vpack.c.bf16 %v2723, %v2722
        %v2725 = vld [vmem:[%s847] sm:$0xf]
        %v2726 = vld [vmem:[%s847 + $0x4] sm:$0xf]
        %v2727 = vld [vmem:[%s847 + $0x8] sm:$0xf]
        %v2728 = vld [vmem:[%s847 + $0xc] sm:$0xf]
        %v2729 = vld [vmem:[%s850] sm:$0x1]
        %v2731 = vlaneseq
        %v2732 = vshrl.u32 %v2731, 7
        %v2733 = vsub.s32 0, %v2732
        %v2734 = vrot.slane %v2729, %v2733
        %v2740 = vunpack.c.l.b16 %v2725
        %v2741 = vunpack.c.l.b16 %v2726
        %v2742 = vunpack.c.l.b16 %v2727
        %v2743 = vunpack.c.l.b16 %v2728
        %v2744 = vpack.c.b16 %v2741, %v2740
        %v2745 = vpack.c.b16 %v2743, %v2742
        %v2749 = vsel %vm1088, %v2724, 0
        %2751 = vmatprep.subr.bf16.mxu0 0
        %2752 = vmatpush1.bf16.msra.mxu0 0
        %2753 = vmatprep.subr.bf16.mxu0 0
        %2754 = vmatpush1.bf16.msra.mxu0 0
        %2755 = vmatprep.subr.bf16.mxu0 0
        %2756 = vmatpush1.bf16.msra.mxu0 0
        %2757 = vmatprep.subr.bf16.mxu0 0
        %2758 = vmatpush1.bf16.msra.mxu0 0
        %2759 = vmatprep.subr.bf16.mxu0 0
        %2760 = vmatpush1.bf16.msra.mxu0 0
        %2761 = vmatprep.subr.bf16.mxu0 0
        %2762 = vmatpush1.bf16.msra.mxu0 0
        %2763 = vmatprep.subr.bf16.mxu0 0
        %2764 = vmatpush1.bf16.msra.mxu0 %v2745
        %2765 = vmatprep.subr.bf16.mxu0 0
        %2766 = vmatpush1.bf16.msra.mxu0 %v2744
        %2767 = vmatprep.subr.bf16.mxu0 0
        %2768 = vmatpush2.bf16.msra.mxu0 0
        %2769 = vmatprep.subr.bf16.mxu0 0
        %2770 = vmatpush2.bf16.msra.mxu0 0
        %2771 = vmatprep.subr.bf16.mxu0 0
        %2772 = vmatpush2.bf16.msra.mxu0 0
        %2773 = vmatprep.subr.bf16.mxu0 0
        %2774 = vmatpush2.bf16.msra.mxu0 0
        %2775 = vmatprep.subr.bf16.mxu0 0
        %2776 = vmatpush2.bf16.msra.mxu0 0
        %2777 = vmatprep.subr.bf16.mxu0 0
        %2778 = vmatpush2.bf16.msra.mxu0 0
        %2779 = vmatprep.subr.bf16.mxu0 0
        %2780 = vmatpush2.bf16.msra.mxu0 0
        %2781 = vmatprep.subr.bf16.mxu0 0
        %2782 = vmatpush2.bf16.msra.mxu0 0
        %2783 = vmatprep.mubr.bf16.mxu0 0
        %2784 = vmatmul.mubr.bf16.gmra.mxu0 %v2749
        %v2785 = vpop.f32.mrf.mxu0
        %v2786 = vadd.f32 %v2734, %v2785
        %v2787 = vpop.f32.mrf.mxu0
        %v2788 = vpop.f32.mrf.mxu0
        %v2789 = vadd.f32 %v2734, %v2788
        %v2790 = vpop.f32.mrf.mxu0
        %2791 = vdwg.mxu0
        %v2792 = vmul.f32 %v2786, 1.702
        %v2793 = vmul.f32 %v2789, 1.702
        %v2794 = vxor.u32 %v2792, 2147483648
        %v2795 = vxor.u32 %v2793, 2147483648
        %v2796 = vmul.f32 %v2794, 1.442695
        %v2797 = vpow.pop %v2796
        %v2798 = vmul.f32 %v2795, 1.442695
        %v2799 = vpow.pop %v2798
        %v2800 = vadd.f32 %v2797, 1.0
        %v2801 = vadd.f32 %v2799, 1.0
        %v2802 = vrcp.pop %v2800
        %v2803 = vmul.f32 1.0, %v2802
        %v2804 = vrcp.pop %v2801
        %v2805 = vmul.f32 1.0, %v2804
        %v2806 = vmul.f32 %v2786, %v2803
        %v2807 = vmul.f32 %v2789, %v2805
        %v2808 = vpack.c.bf16 %v2807, %v2806
        %v2809 = vld [vmem:[%s855] sm:$0xf]
        %v2810 = vld [vmem:[%s855 + $0x4] sm:$0xf]
        %v2811 = vld [vmem:[%s855 + $0x8] sm:$0xf]
        %v2812 = vld [vmem:[%s855 + $0xc] sm:$0xf]
        %v2813 = vld [vmem:[%s855 + $0x10] sm:$0xf]
        %v2814 = vld [vmem:[%s855 + $0x14] sm:$0xf]
        %v2815 = vld [vmem:[%s855 + $0x18] sm:$0xf]
        %v2816 = vld [vmem:[%s855 + $0x1c] sm:$0xf]
        %v2817 = vld [vmem:[%s855 + $0x20] sm:$0xf]
        %v2818 = vld [vmem:[%s855 + $0x24] sm:$0xf]
        %v2819 = vld [vmem:[%s855 + $0x28] sm:$0xf]
        %v2820 = vld [vmem:[%s855 + $0x2c] sm:$0xf]
        %v2821 = vld [vmem:[%s855 + $0x30] sm:$0xf]
        %v2822 = vld [vmem:[%s855 + $0x34] sm:$0xf]
        %v2823 = vld [vmem:[%s855 + $0x38] sm:$0xf]
        %v2824 = vld [vmem:[%s855 + $0x3c] sm:$0xf]
        %v2825 = vld [vmem:[%s858] sm:$0x1]
        %v2827 = vlaneseq
        %v2828 = vshrl.u32 %v2827, 7
        %v2829 = vsub.s32 0, %v2828
        %v2830 = vrot.slane %v2825, %v2829
        %v2848 = vunpack.c.l.b16 %v2809
        %v2849 = vunpack.c.l.b16 %v2810
        %v2850 = vunpack.c.l.b16 %v2811
        %v2851 = vunpack.c.l.b16 %v2812
        %v2852 = vunpack.c.l.b16 %v2813
        %v2853 = vunpack.c.l.b16 %v2814
        %v2854 = vunpack.c.l.b16 %v2815
        %v2855 = vunpack.c.l.b16 %v2816
        %v2856 = vunpack.c.l.b16 %v2817
        %v2857 = vunpack.c.l.b16 %v2818
        %v2858 = vunpack.c.l.b16 %v2819
        %v2859 = vunpack.c.l.b16 %v2820
        %v2860 = vunpack.c.l.b16 %v2821
        %v2861 = vunpack.c.l.b16 %v2822
        %v2862 = vunpack.c.l.b16 %v2823
        %v2863 = vunpack.c.l.b16 %v2824
        %v2864 = vpack.c.b16 %v2849, %v2848
        %v2865 = vpack.c.b16 %v2851, %v2850
        %v2866 = vpack.c.b16 %v2853, %v2852
        %v2867 = vpack.c.b16 %v2855, %v2854
        %v2868 = vpack.c.b16 %v2857, %v2856
        %v2869 = vpack.c.b16 %v2859, %v2858
        %v2870 = vpack.c.b16 %v2861, %v2860
        %v2871 = vpack.c.b16 %v2863, %v2862
        %2880 = vmatprep.subr.bf16.mxu0 0
        %2881 = vmatpush1.bf16.msra.mxu0 %v2871
        %2882 = vmatprep.subr.bf16.mxu0 0
        %2883 = vmatpush1.bf16.msra.mxu0 %v2870
        %2884 = vmatprep.subr.bf16.mxu0 0
        %2885 = vmatpush1.bf16.msra.mxu0 %v2869
        %2886 = vmatprep.subr.bf16.mxu0 0
        %2887 = vmatpush1.bf16.msra.mxu0 %v2868
        %2888 = vmatprep.subr.bf16.mxu0 0
        %2889 = vmatpush1.bf16.msra.mxu0 %v2867
        %2890 = vmatprep.subr.bf16.mxu0 0
        %2891 = vmatpush1.bf16.msra.mxu0 %v2866
        %2892 = vmatprep.subr.bf16.mxu0 0
        %2893 = vmatpush1.bf16.msra.mxu0 %v2865
        %2894 = vmatprep.subr.bf16.mxu0 0
        %2895 = vmatpush1.bf16.msra.mxu0 %v2864
        %2896 = vmatprep.subr.bf16.mxu0 0
        %2897 = vmatpush2.bf16.msra.mxu0 0
        %2898 = vmatprep.subr.bf16.mxu0 0
        %2899 = vmatpush2.bf16.msra.mxu0 0
        %2900 = vmatprep.subr.bf16.mxu0 0
        %2901 = vmatpush2.bf16.msra.mxu0 0
        %2902 = vmatprep.subr.bf16.mxu0 0
        %2903 = vmatpush2.bf16.msra.mxu0 0
        %2904 = vmatprep.subr.bf16.mxu0 0
        %2905 = vmatpush2.bf16.msra.mxu0 0
        %2906 = vmatprep.subr.bf16.mxu0 0
        %2907 = vmatpush2.bf16.msra.mxu0 0
        %2908 = vmatprep.subr.bf16.mxu0 0
        %2909 = vmatpush2.bf16.msra.mxu0 0
        %2910 = vmatprep.subr.bf16.mxu0 0
        %2911 = vmatpush2.bf16.msra.mxu0 0
        %2912 = vmatprep.mubr.bf16.mxu0 0
        %2913 = vmatmul.mubr.bf16.gmra.mxu0 %v2808
        %v2914 = vpop.f32.mrf.mxu0
        %v2915 = vadd.f32 %v2830, %v2914
        %v2916 = vpop.f32.mrf.mxu0
        %v2917 = vpop.f32.mrf.mxu0
        %v2918 = vadd.f32 %v2830, %v2917
        %v2919 = vpop.f32.mrf.mxu0
        %2920 = vdwg.mxu0
        %v2921 = vadd.f32 %v2678, %v2915
        %v2922 = vadd.f32 %v2679, %v2918
        %2923 = vst.msk [vmem:[#allocation2] sm:$0xff] %vm1088, %v2921
        %2924 = vst.msk [vmem:[#allocation2 + $0x8] sm:$0xff] %vm1088, %v2922
        %p2925 = scmp.eq.s32.totalorder %s40, 1
        // Predicated region
        $region109: #{tpu_custom_call.1} parent=103 // pred_check
          %p2926 = pneg %p2925
        $region110: #{tpu_custom_call.1} parent=103 // pred_check_branch
          %2928 = sbr.rel (%p2926) target = $region112
        $region111: #{tpu_custom_call.1} parent=103 // pred_region
          %v2929 = vld [vmem:[%s6] sm:$0x1]
          %v2930 = vld [vmem:[%s7] sm:$0x1]
          %v2933 = vrot.slane %v2922, 7
          %vm2934 = vcmask 1041409
          %v2935 = vsel %vm2934, %v2933, %v2921
          %vm2937 = vcmask 254976
          %v2938 = vsel %vm2937, %v2935, 0.0
          %2939 = vadd.xlane.f32.xlu0 %v2938
          %v2940 = vpop.xlane.xlu0 %2939
          %v2941 = vmul.f32 %v2940, %v1095
          %v2943 = vrot.slane %v2941, 1
          %v2946 = vsub.f32 %v2921, %v2941
          %v2947 = vsub.f32 %v2922, %v2943
          %v2948 = vmul.f32 %v2946, %v2946
          %v2949 = vmul.f32 %v2947, %v2947
          %v2952 = vrot.slane %v2949, 7
          %v2953 = vsel %vm2934, %v2952, %v2948
          %v2955 = vsel %vm2937, %v2953, 0.0
          %2956 = vadd.xlane.f32.xlu0 %v2955
          %v2957 = vpop.xlane.xlu0 %2956
          %v2958 = vmul.f32 %v2957, %v1095
          %v2959 = vadd.f32 %v2958, 1e-05
          %v2960 = vrsqrt.pop %v2959
          %v2962 = vrot.slane %v2960, 1
          %v2965 = vmul.f32 %v2946, %v2960
          %v2966 = vmul.f32 %v2947, %v2962
          %v2968 = vlaneseq
          %v2969 = vshrl.u32 %v2968, 7
          %v2970 = vsub.s32 0, %v2969
          %v2971 = vrot.slane %v2929, %v2970
          %v2973 = vmul.f32 %v2965, %v2971
          %v2974 = vmul.f32 %v2966, %v2971
          %v2976 = vlaneseq
          %v2977 = vshrl.u32 %v2976, 7
          %v2978 = vsub.s32 0, %v2977
          %v2979 = vrot.slane %v2930, %v2978
          %v2981 = vadd.f32 %v2973, %v2979
          %v2982 = vadd.f32 %v2974, %v2979
          %v2983 = vpack.c.bf16 %v2981, %v2981
          %v2984 = vpack.c.bf16 %v2982, %v2982
          %v2985 = vld [vmem:[%s8] sm:$0xf]
          %v2986 = vld [vmem:[%s8 + $0x4] sm:$0xf]
          %v2987 = vld [vmem:[%s8 + $0x8] sm:$0xf]
          %v2988 = vld [vmem:[%s8 + $0xc] sm:$0xf]
          %v2991 = vunpack.c.l.b16 %v2983
          %v2992 = vunpack.c.l.b16 %v2984
          %v2993 = vrot.slane %v2992, 7
          %v2994 = vsel %vm2934, %v2993, %v2991
          %v2995 = vpack.c.b16 %v2994, %v2994
          %v3000 = vunpack.c.l.b16 %v2985
          %v3001 = vunpack.c.l.b16 %v2986
          %v3002 = vunpack.c.l.b16 %v2987
          %v3003 = vunpack.c.l.b16 %v2988
          %v3004 = vpack.c.b16 %v3001, %v3000
          %v3005 = vpack.c.b16 %v3003, %v3002
          %v3009 = vsel %vm1088, %v2995, 0
          %3011 = vmatprep.subr.bf16.mxu0 0
          %3012 = vmatpush1.bf16.msra.mxu0 0
          %3013 = vmatprep.subr.bf16.mxu0 0
          %3014 = vmatpush1.bf16.msra.mxu0 0
          %3015 = vmatprep.subr.bf16.mxu0 0
          %3016 = vmatpush1.bf16.msra.mxu0 0
          %3017 = vmatprep.subr.bf16.mxu0 0
          %3018 = vmatpush1.bf16.msra.mxu0 0
          %3019 = vmatprep.subr.bf16.mxu0 0
          %3020 = vmatpush1.bf16.msra.mxu0 0
          %3021 = vmatprep.subr.bf16.mxu0 0
          %3022 = vmatpush1.bf16.msra.mxu0 0
          %3023 = vmatprep.subr.bf16.mxu0 0
          %3024 = vmatpush1.bf16.msra.mxu0 %v3005
          %3025 = vmatprep.subr.bf16.mxu0 0
          %3026 = vmatpush1.bf16.msra.mxu0 %v3004
          %3027 = vmatprep.subr.bf16.mxu0 0
          %3028 = vmatpush2.bf16.msra.mxu0 0
          %3029 = vmatprep.subr.bf16.mxu0 0
          %3030 = vmatpush2.bf16.msra.mxu0 0
          %3031 = vmatprep.subr.bf16.mxu0 0
          %3032 = vmatpush2.bf16.msra.mxu0 0
          %3033 = vmatprep.subr.bf16.mxu0 0
          %3034 = vmatpush2.bf16.msra.mxu0 0
          %3035 = vmatprep.subr.bf16.mxu0 0
          %3036 = vmatpush2.bf16.msra.mxu0 0
          %3037 = vmatprep.subr.bf16.mxu0 0
          %3038 = vmatpush2.bf16.msra.mxu0 0
          %3039 = vmatprep.subr.bf16.mxu0 0
          %3040 = vmatpush2.bf16.msra.mxu0 0
          %3041 = vmatprep.subr.bf16.mxu0 0
          %3042 = vmatpush2.bf16.msra.mxu0 0
          %3043 = vmatprep.mubr.bf16.mxu0 0
          %3044 = vmatmul.mubr.bf16.gmra.mxu0 %v3009
          %v3045 = vpop.f32.mrf.mxu0
          %v3046 = vadd.f32 0.0, %v3045
          %v3047 = vpop.f32.mrf.mxu0
          %v3048 = vpop.f32.mrf.mxu0
          %v3049 = vpop.f32.mrf.mxu0
          %3050 = vdwg.mxu0
          %vm3051 = vcmask 123904
          %3052 = vst.msk [vmem:[%s809] sm:$0x3] %vm3051, %v3046
        $region112: #{tpu_custom_call.1} parent=103 // pred_fallthru
          _
        %s3053 = sand.u32 %s561, 1
        %s3054 = scalar_lea.sflag [#allocation4], %s3053
        %s3055 = sand.u32 %s561, 1
        %s3056 = smul.addr %s3055, 2
        %s3057 = scalar_lea.vmem [#allocation3], %s3056
        // Predicated region
        $region113: #{tpu_custom_call.1} parent=103 // pred_check
          %p3058 = pneg %p571
        $region114: #{tpu_custom_call.1} parent=103 // pred_check_branch
          %3060 = sbr.rel (%p3058) target = $region116
        $region115: #{tpu_custom_call.1} parent=103 // pred_region
          %s3062 = ssub.s32 32, 32
          %3063 = vsyncadd %s3054, %s3062
          %s3064 = smul.addr %s39, 32
          %s3065 = scalar_lea.hbm %s21, %s3064
          %s3067 = sshll.u32 %s3057, 4
          %s3068 = int_to_ptr.vmem [resolvable:$true] %s3067
          %3070 = dma.vmem_to_hbm [thread:$0]  %s3068, 32, %s3065, %s3054
        $region116: #{tpu_custom_call.1} parent=103 // pred_fallthru
          _
      $region104: #{tpu_custom_call.1} parent=5 // pred_fallthru
        _
      %p3071 = scmp.le.s32.totalorder 2, %s30
      // Predicated region
      $region117: #{tpu_custom_call.1} parent=5 // pred_check
        %p3072 = pneg %p3071
      $region118: #{tpu_custom_call.1} parent=5 // pred_check_branch
        %3074 = sbr.rel (%p3072) target = $region120
      $region119: #{tpu_custom_call.1} parent=5 // pred_region
        %s3075 = ssub.s32 %s30, 2
        // Predicated region
        $region121: #{tpu_custom_call.1} parent=119 // pred_check
          %p3076 = pneg %p577
        $region122: #{tpu_custom_call.1} parent=119 // pred_check_branch
          %3078 = sbr.rel (%p3076) target = $region124
        $region123: #{tpu_custom_call.1} parent=119 // pred_region
          %s3079 = sand.u32 %s562, 1
          %s3080 = scalar_lea.sflag [#allocation4], %s3079
          %s3081 = sand.u32 %s562, 1
          %s3082 = smul.addr %s3081, 2
          %s3083 = scalar_lea.vmem [#allocation3], %s3082
          %3084 = dma.done %s3080, 32
        $region124: #{tpu_custom_call.1} parent=119 // pred_fallthru
          _
      $region120: #{tpu_custom_call.1} parent=5 // pred_fallthru
        _
    $region6: #{tpu_custom_call.1} parent=1 // loop_footer
      %s34 = sadd.s32 1, %s30
    $region7: #{tpu_custom_call.1} parent=1 // loop_footer_branch
      %29 = sbr.rel target = $region3
    $region8: #{tpu_custom_call.1} parent=1 // loop_exit
      _
    %3085 = vsyncpa [#allocation4], 1
    %s3086 = scalar_lea.sflag [#allocation4], 1
    %3087 = vsyncpa %s3086, 1

</llo_original>
